<compile_context>
chip_gen: v6e
topology: v6e:2x2x1
jax: 0.10.0
libtpu: 0.0.40
codegen_flags: <defaults>
</compile_context>

<pallas_src>
import functools

import jax
import jax.numpy as jnp
from jax import lax
from jax.experimental import pallas as pl
from jax.experimental.pallas import tpu as pltpu


# ---------------------------------------------------------------------------
# Pallas kernel: fused conv (in-VMEM patch build) + BatchNorm affine + ReLU
# ---------------------------------------------------------------------------
def _conv_bn_relu_kernel(x_ref, w_ref, scale_ref, offset_ref, o_ref, *,
                         K, C, TH, W, group_pad):
    """One grid step: TH output rows of one batch element.

    x_ref:      (1, C, Hp, Wp)  zero-padded input image (f32), resident per-n
    w_ref:      (OC, K*GP)      conv weight, bf16, (kh, kw, c)-major; each
                                kh-group zero-padded from K*C to GP rows
    scale_ref:  (OC, 1)         gamma / sqrt(var + eps)                 (f32)
    offset_ref: (OC, 1)         beta - mean*scale + conv_bias*scale     (f32)
    o_ref:      (1, OC, TH, W)  output row-tile, already NCHW
    """
    t = pl.program_id(1)
    row0 = pl.multiple_of(t * TH, TH)

    # Haloed slab of the padded input covering output rows [t*TH, (t+1)*TH).
    xt = x_ref[0, :, pl.ds(row0, TH + K - 1), :]          # (C, TH+K-1, Wp)

    # slabs[r][kw][c, j] = x_pad[c, row0 + r, j + kw]; built once and reused
    # across the TH per-row patch matrices below.
    slabs = [[xt[:, r, kw:kw + W] for kw in range(K)]
             for r in range(TH + K - 1)]

    zero_rows = jnp.zeros((group_pad, W), dtype=xt.dtype) if group_pad else None

    # groups[r]: (GP, W) = concat_kw slabs[r][kw] (+ sublane padding to GP).
    groups = []
    for r in range(TH + K - 1):
        pieces = list(slabs[r])
        if group_pad:
            pieces.append(zero_rows)
        groups.append(jnp.concatenate(pieces, axis=0))

    for di in range(TH):
        # Patch matrix for output row row0+di: (K*GP, W), rows ordered
        # kh-major / kw / c -- matches the weight layout built in the wrapper.
        pmat = jnp.concatenate([groups[di + kh] for kh in range(K)], axis=0)
        acc = jnp.dot(w_ref[...], pmat.astype(jnp.bfloat16),
                      preferred_element_type=jnp.float32)     # (OC, W) on MXU
        y = acc * scale_ref[...] + offset_ref[...]            # BN affine, f32
        o_ref[0, :, di, :] = jnp.maximum(y, 0.0)              # ReLU


def conv_bn_relu_pallas(x, weight, bias, gamma, beta, running_mean,
                        running_var, *, eps=1e-5, tile_rows=None):
    """Conv2d(C->OC, K, stride=1, pad=K//2) + BatchNorm (inference) + ReLU.

    x: (N, C, H, W) NCHW float. weight: (OC, C, K, K). Returns (N, OC, H, W).
    """
    N, C, H, W = x.shape
    OC, _, K, _ = weight.shape
    pad = K // 2
    Hp, Wp = H + 2 * pad, W + 2 * pad

    if tile_rows is None:
        tile_rows = 8 if H % 8 == 0 else H
    TH = int(tile_rows)
    assert H % TH == 0 and (TH % 8 == 0 or TH == H), "bad tile_rows"
    T = H // TH

    # Pad each kh-group of the flattened weight from K*C to a sublane multiple
    # so in-kernel patch assembly uses aligned sublane concatenations.
    GP = ((K * C + 7) // 8) * 8
    group_pad = GP - K * C

    # Spatial zero padding of the (tiny, C=4) input; stays NCHW in HBM.
    xp = jnp.pad(x.astype(jnp.float32),
                 ((0, 0), (0, 0), (pad, pad), (pad, pad)))

    # Weight flattened (kh, kw, c)-major, each kh-group padded to GP columns.
    w_t = weight.transpose(0, 2, 3, 1).reshape(OC, K, K * C)
    w_t = jnp.pad(w_t, ((0, 0), (0, 0), (0, group_pad)))
    w2d = w_t.reshape(OC, K * GP).astype(jnp.bfloat16)

    # Fold BN (inference statistics) + conv bias into one affine per channel.
    scale = (gamma / jnp.sqrt(running_var + eps)).astype(jnp.float32)
    offset = (beta - running_mean * scale + bias * scale).astype(jnp.float32)
    scale = scale.reshape(OC, 1)
    offset = offset.reshape(OC, 1)

    kernel = functools.partial(_conv_bn_relu_kernel, K=K, C=C, TH=TH, W=W,
                               group_pad=group_pad)

    out = pl.pallas_call(
        kernel,
        out_shape=jax.ShapeDtypeStruct((N, OC, H, W), jnp.float32),
        grid=(N, T),
        in_specs=[
            # Full padded image per batch element; index constant across the
            # row-tile axis -> DMA'd once per n, resident in VMEM (~0.9 MB
            # even at 224x224 f32, safe on v7x's 64 MiB VMEM).
            pl.BlockSpec((1, C, Hp, Wp), lambda n, t: (n, 0, 0, 0)),
            # Weights and folded BN affine: constant blocks, fetched once.
            pl.BlockSpec((OC, K * GP), lambda n, t: (0, 0)),
            pl.BlockSpec((OC, 1), lambda n, t: (0, 0)),
            pl.BlockSpec((OC, 1), lambda n, t: (0, 0)),
        ],
        # Output written directly as NCHW row-tiles (no post-transpose).
        out_specs=pl.BlockSpec((1, OC, TH, W), lambda n, t: (n, 0, t, 0)),
        compiler_params=pltpu.CompilerParams(
            dimension_semantics=("parallel", "parallel")),
    )(xp, w2d, scale, offset)

    return out


# ---------------------------------------------------------------------------
# Pure-JAX reference (lax conv) for the correctness check
# ---------------------------------------------------------------------------
def _reference(x, weight, bias, gamma, beta, running_mean, running_var,
               eps=1e-5):
    y = lax.conv_general_dilated(
        x, weight, window_strides=(1, 1), padding="SAME",
        dimension_numbers=("NCHW", "OIHW", "NCHW"))
    y = y + bias.reshape(1, -1, 1, 1)
    scale = gamma / jnp.sqrt(running_var + eps)
    y = scale.reshape(1, -1, 1, 1) * (y - running_mean.reshape(1, -1, 1, 1)) \
        + beta.reshape(1, -1, 1, 1)
    return jnp.maximum(y, 0.0)


if __name__ == "__main__":
    # Small shapes consistent with GR-ConvNet's first block.
    N, C, H, W = 2, 4, 16, 16
    OC, K = 32, 9

    key = jax.random.PRNGKey(0)
    kx, kw, kb, kg, kbeta, km, kv = jax.random.split(key, 7)

    x = jax.random.normal(kx, (N, C, H, W), dtype=jnp.float32)
    weight = 0.05 * jax.random.normal(kw, (OC, C, K, K), dtype=jnp.float32)
    bias = 0.1 * jax.random.normal(kb, (OC,), dtype=jnp.float32)
    gamma = 1.0 + 0.1 * jax.random.normal(kg, (OC,), dtype=jnp.float32)
    beta = 0.1 * jax.random.normal(kbeta, (OC,), dtype=jnp.float32)
    running_mean = 0.1 * jax.random.normal(km, (OC,), dtype=jnp.float32)
    running_var = 1.0 + 0.1 * jax.random.uniform(kv, (OC,), dtype=jnp.float32)

    out = conv_bn_relu_pallas(x, weight, bias, gamma, beta,
                              running_mean, running_var, tile_rows=8)
    out = jax.block_until_ready(out)

    ref = _reference(x, weight, bias, gamma, beta, running_mean, running_var)
    assert out.shape == (N, OC, H, W)
    # bf16 matmul operands -> relaxed tolerance vs. the f32 reference.
    assert jnp.allclose(out, ref, atol=5e-2, rtol=5e-2), float(
        jnp.max(jnp.abs(out - ref)))

    print("KERNEL_OK")
</pallas_src>

<mosaic_0001>
module attributes {stable_mosaic.version = 11 : i64} {
  func.func @_conv_bn_relu_kernel(%arg0: i32, %arg1: i32, %arg2: memref<1x4x24x24xf32, #tpu.memory_space<vmem>>, %arg3: memref<32x360xbf16, #tpu.memory_space<vmem>>, %arg4: memref<32x1xf32, #tpu.memory_space<vmem>>, %arg5: memref<32x1xf32, #tpu.memory_space<vmem>>, %arg6: memref<1x32x8x16xf32, #tpu.memory_space<vmem>>) attributes {dimension_semantics = [#tpu.dimension_semantics<parallel>, #tpu.dimension_semantics<parallel>], iteration_bounds = array<i64: 2, 2>, scalar_prefetch = 0 : i64, scratch_operands = 0 : i64, tpu.core_type = #tpu.core_type<tc>, window_params = [{transform_indices = @transform_0, window_bounds = array<i64: 1, 4, 24, 24>}, {pipeline_mode = #tpu.pipeline_mode<synchronous>, transform_indices = @transform_1, window_bounds = array<i64: 32, 360>}, {pipeline_mode = #tpu.pipeline_mode<synchronous>, transform_indices = @transform_2, window_bounds = array<i64: 32, 1>}, {pipeline_mode = #tpu.pipeline_mode<synchronous>, transform_indices = @transform_3, window_bounds = array<i64: 32, 1>}, {transform_indices = @transform_4, window_bounds = array<i64: 1, 32, 8, 16>}]} {
    %c8_i32 = arith.constant 8 : i32
    %0 = arith.muli %arg1, %c8_i32 : i32
    %1 = tpu.assume_multiple %0, 8 : i32
    %c0 = arith.constant 0 : index
    %c0_0 = arith.constant 0 : index
    %2 = arith.index_cast %1 : i32 to index
    %c0_1 = arith.constant 0 : index
    %3 = vector.load %arg2[%c0, %c0_0, %2, %c0_1] : memref<1x4x24x24xf32, #tpu.memory_space<vmem>>, vector<1x4x16x24xf32>
    %4 = vector.shape_cast %3 : vector<1x4x16x24xf32> to vector<4x16x24xf32>
    %5 = vector.extract_strided_slice %4 {offsets = [0, 0, 0], sizes = [4, 1, 16], strides = [1, 1, 1]} : vector<4x16x24xf32> to vector<4x1x16xf32>
    %6 = vector.shape_cast %5 : vector<4x1x16xf32> to vector<4x16xf32>
    %7 = vector.extract_strided_slice %4 {offsets = [0, 0, 1], sizes = [4, 1, 16], strides = [1, 1, 1]} : vector<4x16x24xf32> to vector<4x1x16xf32>
    %8 = vector.shape_cast %7 : vector<4x1x16xf32> to vector<4x16xf32>
    %9 = vector.extract_strided_slice %4 {offsets = [0, 0, 2], sizes = [4, 1, 16], strides = [1, 1, 1]} : vector<4x16x24xf32> to vector<4x1x16xf32>
    %10 = vector.shape_cast %9 : vector<4x1x16xf32> to vector<4x16xf32>
    %11 = vector.extract_strided_slice %4 {offsets = [0, 0, 3], sizes = [4, 1, 16], strides = [1, 1, 1]} : vector<4x16x24xf32> to vector<4x1x16xf32>
    %12 = vector.shape_cast %11 : vector<4x1x16xf32> to vector<4x16xf32>
    %13 = vector.extract_strided_slice %4 {offsets = [0, 0, 4], sizes = [4, 1, 16], strides = [1, 1, 1]} : vector<4x16x24xf32> to vector<4x1x16xf32>
    %14 = vector.shape_cast %13 : vector<4x1x16xf32> to vector<4x16xf32>
    %15 = vector.extract_strided_slice %4 {offsets = [0, 0, 5], sizes = [4, 1, 16], strides = [1, 1, 1]} : vector<4x16x24xf32> to vector<4x1x16xf32>
    %16 = vector.shape_cast %15 : vector<4x1x16xf32> to vector<4x16xf32>
    %17 = vector.extract_strided_slice %4 {offsets = [0, 0, 6], sizes = [4, 1, 16], strides = [1, 1, 1]} : vector<4x16x24xf32> to vector<4x1x16xf32>
    %18 = vector.shape_cast %17 : vector<4x1x16xf32> to vector<4x16xf32>
    %19 = vector.extract_strided_slice %4 {offsets = [0, 0, 7], sizes = [4, 1, 16], strides = [1, 1, 1]} : vector<4x16x24xf32> to vector<4x1x16xf32>
    %20 = vector.shape_cast %19 : vector<4x1x16xf32> to vector<4x16xf32>
    %21 = vector.extract_strided_slice %4 {offsets = [0, 0, 8], sizes = [4, 1, 16], strides = [1, 1, 1]} : vector<4x16x24xf32> to vector<4x1x16xf32>
    %22 = vector.shape_cast %21 : vector<4x1x16xf32> to vector<4x16xf32>
    %23 = vector.extract_strided_slice %4 {offsets = [0, 1, 0], sizes = [4, 1, 16], strides = [1, 1, 1]} : vector<4x16x24xf32> to vector<4x1x16xf32>
    %24 = vector.shape_cast %23 : vector<4x1x16xf32> to vector<4x16xf32>
    %25 = vector.extract_strided_slice %4 {offsets = [0, 1, 1], sizes = [4, 1, 16], strides = [1, 1, 1]} : vector<4x16x24xf32> to vector<4x1x16xf32>
    %26 = vector.shape_cast %25 : vector<4x1x16xf32> to vector<4x16xf32>
    %27 = vector.extract_strided_slice %4 {offsets = [0, 1, 2], sizes = [4, 1, 16], strides = [1, 1, 1]} : vector<4x16x24xf32> to vector<4x1x16xf32>
    %28 = vector.shape_cast %27 : vector<4x1x16xf32> to vector<4x16xf32>
    %29 = vector.extract_strided_slice %4 {offsets = [0, 1, 3], sizes = [4, 1, 16], strides = [1, 1, 1]} : vector<4x16x24xf32> to vector<4x1x16xf32>
    %30 = vector.shape_cast %29 : vector<4x1x16xf32> to vector<4x16xf32>
    %31 = vector.extract_strided_slice %4 {offsets = [0, 1, 4], sizes = [4, 1, 16], strides = [1, 1, 1]} : vector<4x16x24xf32> to vector<4x1x16xf32>
    %32 = vector.shape_cast %31 : vector<4x1x16xf32> to vector<4x16xf32>
    %33 = vector.extract_strided_slice %4 {offsets = [0, 1, 5], sizes = [4, 1, 16], strides = [1, 1, 1]} : vector<4x16x24xf32> to vector<4x1x16xf32>
    %34 = vector.shape_cast %33 : vector<4x1x16xf32> to vector<4x16xf32>
    %35 = vector.extract_strided_slice %4 {offsets = [0, 1, 6], sizes = [4, 1, 16], strides = [1, 1, 1]} : vector<4x16x24xf32> to vector<4x1x16xf32>
    %36 = vector.shape_cast %35 : vector<4x1x16xf32> to vector<4x16xf32>
    %37 = vector.extract_strided_slice %4 {offsets = [0, 1, 7], sizes = [4, 1, 16], strides = [1, 1, 1]} : vector<4x16x24xf32> to vector<4x1x16xf32>
    %38 = vector.shape_cast %37 : vector<4x1x16xf32> to vector<4x16xf32>
    %39 = vector.extract_strided_slice %4 {offsets = [0, 1, 8], sizes = [4, 1, 16], strides = [1, 1, 1]} : vector<4x16x24xf32> to vector<4x1x16xf32>
    %40 = vector.shape_cast %39 : vector<4x1x16xf32> to vector<4x16xf32>
    %41 = vector.extract_strided_slice %4 {offsets = [0, 2, 0], sizes = [4, 1, 16], strides = [1, 1, 1]} : vector<4x16x24xf32> to vector<4x1x16xf32>
    %42 = vector.shape_cast %41 : vector<4x1x16xf32> to vector<4x16xf32>
    %43 = vector.extract_strided_slice %4 {offsets = [0, 2, 1], sizes = [4, 1, 16], strides = [1, 1, 1]} : vector<4x16x24xf32> to vector<4x1x16xf32>
    %44 = vector.shape_cast %43 : vector<4x1x16xf32> to vector<4x16xf32>
    %45 = vector.extract_strided_slice %4 {offsets = [0, 2, 2], sizes = [4, 1, 16], strides = [1, 1, 1]} : vector<4x16x24xf32> to vector<4x1x16xf32>
    %46 = vector.shape_cast %45 : vector<4x1x16xf32> to vector<4x16xf32>
    %47 = vector.extract_strided_slice %4 {offsets = [0, 2, 3], sizes = [4, 1, 16], strides = [1, 1, 1]} : vector<4x16x24xf32> to vector<4x1x16xf32>
    %48 = vector.shape_cast %47 : vector<4x1x16xf32> to vector<4x16xf32>
    %49 = vector.extract_strided_slice %4 {offsets = [0, 2, 4], sizes = [4, 1, 16], strides = [1, 1, 1]} : vector<4x16x24xf32> to vector<4x1x16xf32>
    %50 = vector.shape_cast %49 : vector<4x1x16xf32> to vector<4x16xf32>
    %51 = vector.extract_strided_slice %4 {offsets = [0, 2, 5], sizes = [4, 1, 16], strides = [1, 1, 1]} : vector<4x16x24xf32> to vector<4x1x16xf32>
    %52 = vector.shape_cast %51 : vector<4x1x16xf32> to vector<4x16xf32>
    %53 = vector.extract_strided_slice %4 {offsets = [0, 2, 6], sizes = [4, 1, 16], strides = [1, 1, 1]} : vector<4x16x24xf32> to vector<4x1x16xf32>
    %54 = vector.shape_cast %53 : vector<4x1x16xf32> to vector<4x16xf32>
    %55 = vector.extract_strided_slice %4 {offsets = [0, 2, 7], sizes = [4, 1, 16], strides = [1, 1, 1]} : vector<4x16x24xf32> to vector<4x1x16xf32>
    %56 = vector.shape_cast %55 : vector<4x1x16xf32> to vector<4x16xf32>
    %57 = vector.extract_strided_slice %4 {offsets = [0, 2, 8], sizes = [4, 1, 16], strides = [1, 1, 1]} : vector<4x16x24xf32> to vector<4x1x16xf32>
    %58 = vector.shape_cast %57 : vector<4x1x16xf32> to vector<4x16xf32>
    %59 = vector.extract_strided_slice %4 {offsets = [0, 3, 0], sizes = [4, 1, 16], strides = [1, 1, 1]} : vector<4x16x24xf32> to vector<4x1x16xf32>
    %60 = vector.shape_cast %59 : vector<4x1x16xf32> to vector<4x16xf32>
    %61 = vector.extract_strided_slice %4 {offsets = [0, 3, 1], sizes = [4, 1, 16], strides = [1, 1, 1]} : vector<4x16x24xf32> to vector<4x1x16xf32>
    %62 = vector.shape_cast %61 : vector<4x1x16xf32> to vector<4x16xf32>
    %63 = vector.extract_strided_slice %4 {offsets = [0, 3, 2], sizes = [4, 1, 16], strides = [1, 1, 1]} : vector<4x16x24xf32> to vector<4x1x16xf32>
    %64 = vector.shape_cast %63 : vector<4x1x16xf32> to vector<4x16xf32>
    %65 = vector.extract_strided_slice %4 {offsets = [0, 3, 3], sizes = [4, 1, 16], strides = [1, 1, 1]} : vector<4x16x24xf32> to vector<4x1x16xf32>
    %66 = vector.shape_cast %65 : vector<4x1x16xf32> to vector<4x16xf32>
    %67 = vector.extract_strided_slice %4 {offsets = [0, 3, 4], sizes = [4, 1, 16], strides = [1, 1, 1]} : vector<4x16x24xf32> to vector<4x1x16xf32>
    %68 = vector.shape_cast %67 : vector<4x1x16xf32> to vector<4x16xf32>
    %69 = vector.extract_strided_slice %4 {offsets = [0, 3, 5], sizes = [4, 1, 16], strides = [1, 1, 1]} : vector<4x16x24xf32> to vector<4x1x16xf32>
    %70 = vector.shape_cast %69 : vector<4x1x16xf32> to vector<4x16xf32>
    %71 = vector.extract_strided_slice %4 {offsets = [0, 3, 6], sizes = [4, 1, 16], strides = [1, 1, 1]} : vector<4x16x24xf32> to vector<4x1x16xf32>
    %72 = vector.shape_cast %71 : vector<4x1x16xf32> to vector<4x16xf32>
    %73 = vector.extract_strided_slice %4 {offsets = [0, 3, 7], sizes = [4, 1, 16], strides = [1, 1, 1]} : vector<4x16x24xf32> to vector<4x1x16xf32>
    %74 = vector.shape_cast %73 : vector<4x1x16xf32> to vector<4x16xf32>
    %75 = vector.extract_strided_slice %4 {offsets = [0, 3, 8], sizes = [4, 1, 16], strides = [1, 1, 1]} : vector<4x16x24xf32> to vector<4x1x16xf32>
    %76 = vector.shape_cast %75 : vector<4x1x16xf32> to vector<4x16xf32>
    %77 = vector.extract_strided_slice %4 {offsets = [0, 4, 0], sizes = [4, 1, 16], strides = [1, 1, 1]} : vector<4x16x24xf32> to vector<4x1x16xf32>
    %78 = vector.shape_cast %77 : vector<4x1x16xf32> to vector<4x16xf32>
    %79 = vector.extract_strided_slice %4 {offsets = [0, 4, 1], sizes = [4, 1, 16], strides = [1, 1, 1]} : vector<4x16x24xf32> to vector<4x1x16xf32>
    %80 = vector.shape_cast %79 : vector<4x1x16xf32> to vector<4x16xf32>
    %81 = vector.extract_strided_slice %4 {offsets = [0, 4, 2], sizes = [4, 1, 16], strides = [1, 1, 1]} : vector<4x16x24xf32> to vector<4x1x16xf32>
    %82 = vector.shape_cast %81 : vector<4x1x16xf32> to vector<4x16xf32>
    %83 = vector.extract_strided_slice %4 {offsets = [0, 4, 3], sizes = [4, 1, 16], strides = [1, 1, 1]} : vector<4x16x24xf32> to vector<4x1x16xf32>
    %84 = vector.shape_cast %83 : vector<4x1x16xf32> to vector<4x16xf32>
    %85 = vector.extract_strided_slice %4 {offsets = [0, 4, 4], sizes = [4, 1, 16], strides = [1, 1, 1]} : vector<4x16x24xf32> to vector<4x1x16xf32>
    %86 = vector.shape_cast %85 : vector<4x1x16xf32> to vector<4x16xf32>
    %87 = vector.extract_strided_slice %4 {offsets = [0, 4, 5], sizes = [4, 1, 16], strides = [1, 1, 1]} : vector<4x16x24xf32> to vector<4x1x16xf32>
    %88 = vector.shape_cast %87 : vector<4x1x16xf32> to vector<4x16xf32>
    %89 = vector.extract_strided_slice %4 {offsets = [0, 4, 6], sizes = [4, 1, 16], strides = [1, 1, 1]} : vector<4x16x24xf32> to vector<4x1x16xf32>
    %90 = vector.shape_cast %89 : vector<4x1x16xf32> to vector<4x16xf32>
    %91 = vector.extract_strided_slice %4 {offsets = [0, 4, 7], sizes = [4, 1, 16], strides = [1, 1, 1]} : vector<4x16x24xf32> to vector<4x1x16xf32>
    %92 = vector.shape_cast %91 : vector<4x1x16xf32> to vector<4x16xf32>
    %93 = vector.extract_strided_slice %4 {offsets = [0, 4, 8], sizes = [4, 1, 16], strides = [1, 1, 1]} : vector<4x16x24xf32> to vector<4x1x16xf32>
    %94 = vector.shape_cast %93 : vector<4x1x16xf32> to vector<4x16xf32>
    %95 = vector.extract_strided_slice %4 {offsets = [0, 5, 0], sizes = [4, 1, 16], strides = [1, 1, 1]} : vector<4x16x24xf32> to vector<4x1x16xf32>
    %96 = vector.shape_cast %95 : vector<4x1x16xf32> to vector<4x16xf32>
    %97 = vector.extract_strided_slice %4 {offsets = [0, 5, 1], sizes = [4, 1, 16], strides = [1, 1, 1]} : vector<4x16x24xf32> to vector<4x1x16xf32>
    %98 = vector.shape_cast %97 : vector<4x1x16xf32> to vector<4x16xf32>
    %99 = vector.extract_strided_slice %4 {offsets = [0, 5, 2], sizes = [4, 1, 16], strides = [1, 1, 1]} : vector<4x16x24xf32> to vector<4x1x16xf32>
    %100 = vector.shape_cast %99 : vector<4x1x16xf32> to vector<4x16xf32>
    %101 = vector.extract_strided_slice %4 {offsets = [0, 5, 3], sizes = [4, 1, 16], strides = [1, 1, 1]} : vector<4x16x24xf32> to vector<4x1x16xf32>
    %102 = vector.shape_cast %101 : vector<4x1x16xf32> to vector<4x16xf32>
    %103 = vector.extract_strided_slice %4 {offsets = [0, 5, 4], sizes = [4, 1, 16], strides = [1, 1, 1]} : vector<4x16x24xf32> to vector<4x1x16xf32>
    %104 = vector.shape_cast %103 : vector<4x1x16xf32> to vector<4x16xf32>
    %105 = vector.extract_strided_slice %4 {offsets = [0, 5, 5], sizes = [4, 1, 16], strides = [1, 1, 1]} : vector<4x16x24xf32> to vector<4x1x16xf32>
    %106 = vector.shape_cast %105 : vector<4x1x16xf32> to vector<4x16xf32>
    %107 = vector.extract_strided_slice %4 {offsets = [0, 5, 6], sizes = [4, 1, 16], strides = [1, 1, 1]} : vector<4x16x24xf32> to vector<4x1x16xf32>
    %108 = vector.shape_cast %107 : vector<4x1x16xf32> to vector<4x16xf32>
    %109 = vector.extract_strided_slice %4 {offsets = [0, 5, 7], sizes = [4, 1, 16], strides = [1, 1, 1]} : vector<4x16x24xf32> to vector<4x1x16xf32>
    %110 = vector.shape_cast %109 : vector<4x1x16xf32> to vector<4x16xf32>
    %111 = vector.extract_strided_slice %4 {offsets = [0, 5, 8], sizes = [4, 1, 16], strides = [1, 1, 1]} : vector<4x16x24xf32> to vector<4x1x16xf32>
    %112 = vector.shape_cast %111 : vector<4x1x16xf32> to vector<4x16xf32>
    %113 = vector.extract_strided_slice %4 {offsets = [0, 6, 0], sizes = [4, 1, 16], strides = [1, 1, 1]} : vector<4x16x24xf32> to vector<4x1x16xf32>
    %114 = vector.shape_cast %113 : vector<4x1x16xf32> to vector<4x16xf32>
    %115 = vector.extract_strided_slice %4 {offsets = [0, 6, 1], sizes = [4, 1, 16], strides = [1, 1, 1]} : vector<4x16x24xf32> to vector<4x1x16xf32>
    %116 = vector.shape_cast %115 : vector<4x1x16xf32> to vector<4x16xf32>
    %117 = vector.extract_strided_slice %4 {offsets = [0, 6, 2], sizes = [4, 1, 16], strides = [1, 1, 1]} : vector<4x16x24xf32> to vector<4x1x16xf32>
    %118 = vector.shape_cast %117 : vector<4x1x16xf32> to vector<4x16xf32>
    %119 = vector.extract_strided_slice %4 {offsets = [0, 6, 3], sizes = [4, 1, 16], strides = [1, 1, 1]} : vector<4x16x24xf32> to vector<4x1x16xf32>
    %120 = vector.shape_cast %119 : vector<4x1x16xf32> to vector<4x16xf32>
    %121 = vector.extract_strided_slice %4 {offsets = [0, 6, 4], sizes = [4, 1, 16], strides = [1, 1, 1]} : vector<4x16x24xf32> to vector<4x1x16xf32>
    %122 = vector.shape_cast %121 : vector<4x1x16xf32> to vector<4x16xf32>
    %123 = vector.extract_strided_slice %4 {offsets = [0, 6, 5], sizes = [4, 1, 16], strides = [1, 1, 1]} : vector<4x16x24xf32> to vector<4x1x16xf32>
    %124 = vector.shape_cast %123 : vector<4x1x16xf32> to vector<4x16xf32>
    %125 = vector.extract_strided_slice %4 {offsets = [0, 6, 6], sizes = [4, 1, 16], strides = [1, 1, 1]} : vector<4x16x24xf32> to vector<4x1x16xf32>
    %126 = vector.shape_cast %125 : vector<4x1x16xf32> to vector<4x16xf32>
    %127 = vector.extract_strided_slice %4 {offsets = [0, 6, 7], sizes = [4, 1, 16], strides = [1, 1, 1]} : vector<4x16x24xf32> to vector<4x1x16xf32>
    %128 = vector.shape_cast %127 : vector<4x1x16xf32> to vector<4x16xf32>
    %129 = vector.extract_strided_slice %4 {offsets = [0, 6, 8], sizes = [4, 1, 16], strides = [1, 1, 1]} : vector<4x16x24xf32> to vector<4x1x16xf32>
    %130 = vector.shape_cast %129 : vector<4x1x16xf32> to vector<4x16xf32>
    %131 = vector.extract_strided_slice %4 {offsets = [0, 7, 0], sizes = [4, 1, 16], strides = [1, 1, 1]} : vector<4x16x24xf32> to vector<4x1x16xf32>
    %132 = vector.shape_cast %131 : vector<4x1x16xf32> to vector<4x16xf32>
    %133 = vector.extract_strided_slice %4 {offsets = [0, 7, 1], sizes = [4, 1, 16], strides = [1, 1, 1]} : vector<4x16x24xf32> to vector<4x1x16xf32>
    %134 = vector.shape_cast %133 : vector<4x1x16xf32> to vector<4x16xf32>
    %135 = vector.extract_strided_slice %4 {offsets = [0, 7, 2], sizes = [4, 1, 16], strides = [1, 1, 1]} : vector<4x16x24xf32> to vector<4x1x16xf32>
    %136 = vector.shape_cast %135 : vector<4x1x16xf32> to vector<4x16xf32>
    %137 = vector.extract_strided_slice %4 {offsets = [0, 7, 3], sizes = [4, 1, 16], strides = [1, 1, 1]} : vector<4x16x24xf32> to vector<4x1x16xf32>
    %138 = vector.shape_cast %137 : vector<4x1x16xf32> to vector<4x16xf32>
    %139 = vector.extract_strided_slice %4 {offsets = [0, 7, 4], sizes = [4, 1, 16], strides = [1, 1, 1]} : vector<4x16x24xf32> to vector<4x1x16xf32>
    %140 = vector.shape_cast %139 : vector<4x1x16xf32> to vector<4x16xf32>
    %141 = vector.extract_strided_slice %4 {offsets = [0, 7, 5], sizes = [4, 1, 16], strides = [1, 1, 1]} : vector<4x16x24xf32> to vector<4x1x16xf32>
    %142 = vector.shape_cast %141 : vector<4x1x16xf32> to vector<4x16xf32>
    %143 = vector.extract_strided_slice %4 {offsets = [0, 7, 6], sizes = [4, 1, 16], strides = [1, 1, 1]} : vector<4x16x24xf32> to vector<4x1x16xf32>
    %144 = vector.shape_cast %143 : vector<4x1x16xf32> to vector<4x16xf32>
    %145 = vector.extract_strided_slice %4 {offsets = [0, 7, 7], sizes = [4, 1, 16], strides = [1, 1, 1]} : vector<4x16x24xf32> to vector<4x1x16xf32>
    %146 = vector.shape_cast %145 : vector<4x1x16xf32> to vector<4x16xf32>
    %147 = vector.extract_strided_slice %4 {offsets = [0, 7, 8], sizes = [4, 1, 16], strides = [1, 1, 1]} : vector<4x16x24xf32> to vector<4x1x16xf32>
    %148 = vector.shape_cast %147 : vector<4x1x16xf32> to vector<4x16xf32>
    %149 = vector.extract_strided_slice %4 {offsets = [0, 8, 0], sizes = [4, 1, 16], strides = [1, 1, 1]} : vector<4x16x24xf32> to vector<4x1x16xf32>
    %150 = vector.shape_cast %149 : vector<4x1x16xf32> to vector<4x16xf32>
    %151 = vector.extract_strided_slice %4 {offsets = [0, 8, 1], sizes = [4, 1, 16], strides = [1, 1, 1]} : vector<4x16x24xf32> to vector<4x1x16xf32>
    %152 = vector.shape_cast %151 : vector<4x1x16xf32> to vector<4x16xf32>
    %153 = vector.extract_strided_slice %4 {offsets = [0, 8, 2], sizes = [4, 1, 16], strides = [1, 1, 1]} : vector<4x16x24xf32> to vector<4x1x16xf32>
    %154 = vector.shape_cast %153 : vector<4x1x16xf32> to vector<4x16xf32>
    %155 = vector.extract_strided_slice %4 {offsets = [0, 8, 3], sizes = [4, 1, 16], strides = [1, 1, 1]} : vector<4x16x24xf32> to vector<4x1x16xf32>
    %156 = vector.shape_cast %155 : vector<4x1x16xf32> to vector<4x16xf32>
    %157 = vector.extract_strided_slice %4 {offsets = [0, 8, 4], sizes = [4, 1, 16], strides = [1, 1, 1]} : vector<4x16x24xf32> to vector<4x1x16xf32>
    %158 = vector.shape_cast %157 : vector<4x1x16xf32> to vector<4x16xf32>
    %159 = vector.extract_strided_slice %4 {offsets = [0, 8, 5], sizes = [4, 1, 16], strides = [1, 1, 1]} : vector<4x16x24xf32> to vector<4x1x16xf32>
    %160 = vector.shape_cast %159 : vector<4x1x16xf32> to vector<4x16xf32>
    %161 = vector.extract_strided_slice %4 {offsets = [0, 8, 6], sizes = [4, 1, 16], strides = [1, 1, 1]} : vector<4x16x24xf32> to vector<4x1x16xf32>
    %162 = vector.shape_cast %161 : vector<4x1x16xf32> to vector<4x16xf32>
    %163 = vector.extract_strided_slice %4 {offsets = [0, 8, 7], sizes = [4, 1, 16], strides = [1, 1, 1]} : vector<4x16x24xf32> to vector<4x1x16xf32>
    %164 = vector.shape_cast %163 : vector<4x1x16xf32> to vector<4x16xf32>
    %165 = vector.extract_strided_slice %4 {offsets = [0, 8, 8], sizes = [4, 1, 16], strides = [1, 1, 1]} : vector<4x16x24xf32> to vector<4x1x16xf32>
    %166 = vector.shape_cast %165 : vector<4x1x16xf32> to vector<4x16xf32>
    %167 = vector.extract_strided_slice %4 {offsets = [0, 9, 0], sizes = [4, 1, 16], strides = [1, 1, 1]} : vector<4x16x24xf32> to vector<4x1x16xf32>
    %168 = vector.shape_cast %167 : vector<4x1x16xf32> to vector<4x16xf32>
    %169 = vector.extract_strided_slice %4 {offsets = [0, 9, 1], sizes = [4, 1, 16], strides = [1, 1, 1]} : vector<4x16x24xf32> to vector<4x1x16xf32>
    %170 = vector.shape_cast %169 : vector<4x1x16xf32> to vector<4x16xf32>
    %171 = vector.extract_strided_slice %4 {offsets = [0, 9, 2], sizes = [4, 1, 16], strides = [1, 1, 1]} : vector<4x16x24xf32> to vector<4x1x16xf32>
    %172 = vector.shape_cast %171 : vector<4x1x16xf32> to vector<4x16xf32>
    %173 = vector.extract_strided_slice %4 {offsets = [0, 9, 3], sizes = [4, 1, 16], strides = [1, 1, 1]} : vector<4x16x24xf32> to vector<4x1x16xf32>
    %174 = vector.shape_cast %173 : vector<4x1x16xf32> to vector<4x16xf32>
    %175 = vector.extract_strided_slice %4 {offsets = [0, 9, 4], sizes = [4, 1, 16], strides = [1, 1, 1]} : vector<4x16x24xf32> to vector<4x1x16xf32>
    %176 = vector.shape_cast %175 : vector<4x1x16xf32> to vector<4x16xf32>
    %177 = vector.extract_strided_slice %4 {offsets = [0, 9, 5], sizes = [4, 1, 16], strides = [1, 1, 1]} : vector<4x16x24xf32> to vector<4x1x16xf32>
    %178 = vector.shape_cast %177 : vector<4x1x16xf32> to vector<4x16xf32>
    %179 = vector.extract_strided_slice %4 {offsets = [0, 9, 6], sizes = [4, 1, 16], strides = [1, 1, 1]} : vector<4x16x24xf32> to vector<4x1x16xf32>
    %180 = vector.shape_cast %179 : vector<4x1x16xf32> to vector<4x16xf32>
    %181 = vector.extract_strided_slice %4 {offsets = [0, 9, 7], sizes = [4, 1, 16], strides = [1, 1, 1]} : vector<4x16x24xf32> to vector<4x1x16xf32>
    %182 = vector.shape_cast %181 : vector<4x1x16xf32> to vector<4x16xf32>
    %183 = vector.extract_strided_slice %4 {offsets = [0, 9, 8], sizes = [4, 1, 16], strides = [1, 1, 1]} : vector<4x16x24xf32> to vector<4x1x16xf32>
    %184 = vector.shape_cast %183 : vector<4x1x16xf32> to vector<4x16xf32>
    %185 = vector.extract_strided_slice %4 {offsets = [0, 10, 0], sizes = [4, 1, 16], strides = [1, 1, 1]} : vector<4x16x24xf32> to vector<4x1x16xf32>
    %186 = vector.shape_cast %185 : vector<4x1x16xf32> to vector<4x16xf32>
    %187 = vector.extract_strided_slice %4 {offsets = [0, 10, 1], sizes = [4, 1, 16], strides = [1, 1, 1]} : vector<4x16x24xf32> to vector<4x1x16xf32>
    %188 = vector.shape_cast %187 : vector<4x1x16xf32> to vector<4x16xf32>
    %189 = vector.extract_strided_slice %4 {offsets = [0, 10, 2], sizes = [4, 1, 16], strides = [1, 1, 1]} : vector<4x16x24xf32> to vector<4x1x16xf32>
    %190 = vector.shape_cast %189 : vector<4x1x16xf32> to vector<4x16xf32>
    %191 = vector.extract_strided_slice %4 {offsets = [0, 10, 3], sizes = [4, 1, 16], strides = [1, 1, 1]} : vector<4x16x24xf32> to vector<4x1x16xf32>
    %192 = vector.shape_cast %191 : vector<4x1x16xf32> to vector<4x16xf32>
    %193 = vector.extract_strided_slice %4 {offsets = [0, 10, 4], sizes = [4, 1, 16], strides = [1, 1, 1]} : vector<4x16x24xf32> to vector<4x1x16xf32>
    %194 = vector.shape_cast %193 : vector<4x1x16xf32> to vector<4x16xf32>
    %195 = vector.extract_strided_slice %4 {offsets = [0, 10, 5], sizes = [4, 1, 16], strides = [1, 1, 1]} : vector<4x16x24xf32> to vector<4x1x16xf32>
    %196 = vector.shape_cast %195 : vector<4x1x16xf32> to vector<4x16xf32>
    %197 = vector.extract_strided_slice %4 {offsets = [0, 10, 6], sizes = [4, 1, 16], strides = [1, 1, 1]} : vector<4x16x24xf32> to vector<4x1x16xf32>
    %198 = vector.shape_cast %197 : vector<4x1x16xf32> to vector<4x16xf32>
    %199 = vector.extract_strided_slice %4 {offsets = [0, 10, 7], sizes = [4, 1, 16], strides = [1, 1, 1]} : vector<4x16x24xf32> to vector<4x1x16xf32>
    %200 = vector.shape_cast %199 : vector<4x1x16xf32> to vector<4x16xf32>
    %201 = vector.extract_strided_slice %4 {offsets = [0, 10, 8], sizes = [4, 1, 16], strides = [1, 1, 1]} : vector<4x16x24xf32> to vector<4x1x16xf32>
    %202 = vector.shape_cast %201 : vector<4x1x16xf32> to vector<4x16xf32>
    %203 = vector.extract_strided_slice %4 {offsets = [0, 11, 0], sizes = [4, 1, 16], strides = [1, 1, 1]} : vector<4x16x24xf32> to vector<4x1x16xf32>
    %204 = vector.shape_cast %203 : vector<4x1x16xf32> to vector<4x16xf32>
    %205 = vector.extract_strided_slice %4 {offsets = [0, 11, 1], sizes = [4, 1, 16], strides = [1, 1, 1]} : vector<4x16x24xf32> to vector<4x1x16xf32>
    %206 = vector.shape_cast %205 : vector<4x1x16xf32> to vector<4x16xf32>
    %207 = vector.extract_strided_slice %4 {offsets = [0, 11, 2], sizes = [4, 1, 16], strides = [1, 1, 1]} : vector<4x16x24xf32> to vector<4x1x16xf32>
    %208 = vector.shape_cast %207 : vector<4x1x16xf32> to vector<4x16xf32>
    %209 = vector.extract_strided_slice %4 {offsets = [0, 11, 3], sizes = [4, 1, 16], strides = [1, 1, 1]} : vector<4x16x24xf32> to vector<4x1x16xf32>
    %210 = vector.shape_cast %209 : vector<4x1x16xf32> to vector<4x16xf32>
    %211 = vector.extract_strided_slice %4 {offsets = [0, 11, 4], sizes = [4, 1, 16], strides = [1, 1, 1]} : vector<4x16x24xf32> to vector<4x1x16xf32>
    %212 = vector.shape_cast %211 : vector<4x1x16xf32> to vector<4x16xf32>
    %213 = vector.extract_strided_slice %4 {offsets = [0, 11, 5], sizes = [4, 1, 16], strides = [1, 1, 1]} : vector<4x16x24xf32> to vector<4x1x16xf32>
    %214 = vector.shape_cast %213 : vector<4x1x16xf32> to vector<4x16xf32>
    %215 = vector.extract_strided_slice %4 {offsets = [0, 11, 6], sizes = [4, 1, 16], strides = [1, 1, 1]} : vector<4x16x24xf32> to vector<4x1x16xf32>
    %216 = vector.shape_cast %215 : vector<4x1x16xf32> to vector<4x16xf32>
    %217 = vector.extract_strided_slice %4 {offsets = [0, 11, 7], sizes = [4, 1, 16], strides = [1, 1, 1]} : vector<4x16x24xf32> to vector<4x1x16xf32>
    %218 = vector.shape_cast %217 : vector<4x1x16xf32> to vector<4x16xf32>
    %219 = vector.extract_strided_slice %4 {offsets = [0, 11, 8], sizes = [4, 1, 16], strides = [1, 1, 1]} : vector<4x16x24xf32> to vector<4x1x16xf32>
    %220 = vector.shape_cast %219 : vector<4x1x16xf32> to vector<4x16xf32>
    %221 = vector.extract_strided_slice %4 {offsets = [0, 12, 0], sizes = [4, 1, 16], strides = [1, 1, 1]} : vector<4x16x24xf32> to vector<4x1x16xf32>
    %222 = vector.shape_cast %221 : vector<4x1x16xf32> to vector<4x16xf32>
    %223 = vector.extract_strided_slice %4 {offsets = [0, 12, 1], sizes = [4, 1, 16], strides = [1, 1, 1]} : vector<4x16x24xf32> to vector<4x1x16xf32>
    %224 = vector.shape_cast %223 : vector<4x1x16xf32> to vector<4x16xf32>
    %225 = vector.extract_strided_slice %4 {offsets = [0, 12, 2], sizes = [4, 1, 16], strides = [1, 1, 1]} : vector<4x16x24xf32> to vector<4x1x16xf32>
    %226 = vector.shape_cast %225 : vector<4x1x16xf32> to vector<4x16xf32>
    %227 = vector.extract_strided_slice %4 {offsets = [0, 12, 3], sizes = [4, 1, 16], strides = [1, 1, 1]} : vector<4x16x24xf32> to vector<4x1x16xf32>
    %228 = vector.shape_cast %227 : vector<4x1x16xf32> to vector<4x16xf32>
    %229 = vector.extract_strided_slice %4 {offsets = [0, 12, 4], sizes = [4, 1, 16], strides = [1, 1, 1]} : vector<4x16x24xf32> to vector<4x1x16xf32>
    %230 = vector.shape_cast %229 : vector<4x1x16xf32> to vector<4x16xf32>
    %231 = vector.extract_strided_slice %4 {offsets = [0, 12, 5], sizes = [4, 1, 16], strides = [1, 1, 1]} : vector<4x16x24xf32> to vector<4x1x16xf32>
    %232 = vector.shape_cast %231 : vector<4x1x16xf32> to vector<4x16xf32>
    %233 = vector.extract_strided_slice %4 {offsets = [0, 12, 6], sizes = [4, 1, 16], strides = [1, 1, 1]} : vector<4x16x24xf32> to vector<4x1x16xf32>
    %234 = vector.shape_cast %233 : vector<4x1x16xf32> to vector<4x16xf32>
    %235 = vector.extract_strided_slice %4 {offsets = [0, 12, 7], sizes = [4, 1, 16], strides = [1, 1, 1]} : vector<4x16x24xf32> to vector<4x1x16xf32>
    %236 = vector.shape_cast %235 : vector<4x1x16xf32> to vector<4x16xf32>
    %237 = vector.extract_strided_slice %4 {offsets = [0, 12, 8], sizes = [4, 1, 16], strides = [1, 1, 1]} : vector<4x16x24xf32> to vector<4x1x16xf32>
    %238 = vector.shape_cast %237 : vector<4x1x16xf32> to vector<4x16xf32>
    %239 = vector.extract_strided_slice %4 {offsets = [0, 13, 0], sizes = [4, 1, 16], strides = [1, 1, 1]} : vector<4x16x24xf32> to vector<4x1x16xf32>
    %240 = vector.shape_cast %239 : vector<4x1x16xf32> to vector<4x16xf32>
    %241 = vector.extract_strided_slice %4 {offsets = [0, 13, 1], sizes = [4, 1, 16], strides = [1, 1, 1]} : vector<4x16x24xf32> to vector<4x1x16xf32>
    %242 = vector.shape_cast %241 : vector<4x1x16xf32> to vector<4x16xf32>
    %243 = vector.extract_strided_slice %4 {offsets = [0, 13, 2], sizes = [4, 1, 16], strides = [1, 1, 1]} : vector<4x16x24xf32> to vector<4x1x16xf32>
    %244 = vector.shape_cast %243 : vector<4x1x16xf32> to vector<4x16xf32>
    %245 = vector.extract_strided_slice %4 {offsets = [0, 13, 3], sizes = [4, 1, 16], strides = [1, 1, 1]} : vector<4x16x24xf32> to vector<4x1x16xf32>
    %246 = vector.shape_cast %245 : vector<4x1x16xf32> to vector<4x16xf32>
    %247 = vector.extract_strided_slice %4 {offsets = [0, 13, 4], sizes = [4, 1, 16], strides = [1, 1, 1]} : vector<4x16x24xf32> to vector<4x1x16xf32>
    %248 = vector.shape_cast %247 : vector<4x1x16xf32> to vector<4x16xf32>
    %249 = vector.extract_strided_slice %4 {offsets = [0, 13, 5], sizes = [4, 1, 16], strides = [1, 1, 1]} : vector<4x16x24xf32> to vector<4x1x16xf32>
    %250 = vector.shape_cast %249 : vector<4x1x16xf32> to vector<4x16xf32>
    %251 = vector.extract_strided_slice %4 {offsets = [0, 13, 6], sizes = [4, 1, 16], strides = [1, 1, 1]} : vector<4x16x24xf32> to vector<4x1x16xf32>
    %252 = vector.shape_cast %251 : vector<4x1x16xf32> to vector<4x16xf32>
    %253 = vector.extract_strided_slice %4 {offsets = [0, 13, 7], sizes = [4, 1, 16], strides = [1, 1, 1]} : vector<4x16x24xf32> to vector<4x1x16xf32>
    %254 = vector.shape_cast %253 : vector<4x1x16xf32> to vector<4x16xf32>
    %255 = vector.extract_strided_slice %4 {offsets = [0, 13, 8], sizes = [4, 1, 16], strides = [1, 1, 1]} : vector<4x16x24xf32> to vector<4x1x16xf32>
    %256 = vector.shape_cast %255 : vector<4x1x16xf32> to vector<4x16xf32>
    %257 = vector.extract_strided_slice %4 {offsets = [0, 14, 0], sizes = [4, 1, 16], strides = [1, 1, 1]} : vector<4x16x24xf32> to vector<4x1x16xf32>
    %258 = vector.shape_cast %257 : vector<4x1x16xf32> to vector<4x16xf32>
    %259 = vector.extract_strided_slice %4 {offsets = [0, 14, 1], sizes = [4, 1, 16], strides = [1, 1, 1]} : vector<4x16x24xf32> to vector<4x1x16xf32>
    %260 = vector.shape_cast %259 : vector<4x1x16xf32> to vector<4x16xf32>
    %261 = vector.extract_strided_slice %4 {offsets = [0, 14, 2], sizes = [4, 1, 16], strides = [1, 1, 1]} : vector<4x16x24xf32> to vector<4x1x16xf32>
    %262 = vector.shape_cast %261 : vector<4x1x16xf32> to vector<4x16xf32>
    %263 = vector.extract_strided_slice %4 {offsets = [0, 14, 3], sizes = [4, 1, 16], strides = [1, 1, 1]} : vector<4x16x24xf32> to vector<4x1x16xf32>
    %264 = vector.shape_cast %263 : vector<4x1x16xf32> to vector<4x16xf32>
    %265 = vector.extract_strided_slice %4 {offsets = [0, 14, 4], sizes = [4, 1, 16], strides = [1, 1, 1]} : vector<4x16x24xf32> to vector<4x1x16xf32>
    %266 = vector.shape_cast %265 : vector<4x1x16xf32> to vector<4x16xf32>
    %267 = vector.extract_strided_slice %4 {offsets = [0, 14, 5], sizes = [4, 1, 16], strides = [1, 1, 1]} : vector<4x16x24xf32> to vector<4x1x16xf32>
    %268 = vector.shape_cast %267 : vector<4x1x16xf32> to vector<4x16xf32>
    %269 = vector.extract_strided_slice %4 {offsets = [0, 14, 6], sizes = [4, 1, 16], strides = [1, 1, 1]} : vector<4x16x24xf32> to vector<4x1x16xf32>
    %270 = vector.shape_cast %269 : vector<4x1x16xf32> to vector<4x16xf32>
    %271 = vector.extract_strided_slice %4 {offsets = [0, 14, 7], sizes = [4, 1, 16], strides = [1, 1, 1]} : vector<4x16x24xf32> to vector<4x1x16xf32>
    %272 = vector.shape_cast %271 : vector<4x1x16xf32> to vector<4x16xf32>
    %273 = vector.extract_strided_slice %4 {offsets = [0, 14, 8], sizes = [4, 1, 16], strides = [1, 1, 1]} : vector<4x16x24xf32> to vector<4x1x16xf32>
    %274 = vector.shape_cast %273 : vector<4x1x16xf32> to vector<4x16xf32>
    %275 = vector.extract_strided_slice %4 {offsets = [0, 15, 0], sizes = [4, 1, 16], strides = [1, 1, 1]} : vector<4x16x24xf32> to vector<4x1x16xf32>
    %276 = vector.shape_cast %275 : vector<4x1x16xf32> to vector<4x16xf32>
    %277 = vector.extract_strided_slice %4 {offsets = [0, 15, 1], sizes = [4, 1, 16], strides = [1, 1, 1]} : vector<4x16x24xf32> to vector<4x1x16xf32>
    %278 = vector.shape_cast %277 : vector<4x1x16xf32> to vector<4x16xf32>
    %279 = vector.extract_strided_slice %4 {offsets = [0, 15, 2], sizes = [4, 1, 16], strides = [1, 1, 1]} : vector<4x16x24xf32> to vector<4x1x16xf32>
    %280 = vector.shape_cast %279 : vector<4x1x16xf32> to vector<4x16xf32>
    %281 = vector.extract_strided_slice %4 {offsets = [0, 15, 3], sizes = [4, 1, 16], strides = [1, 1, 1]} : vector<4x16x24xf32> to vector<4x1x16xf32>
    %282 = vector.shape_cast %281 : vector<4x1x16xf32> to vector<4x16xf32>
    %283 = vector.extract_strided_slice %4 {offsets = [0, 15, 4], sizes = [4, 1, 16], strides = [1, 1, 1]} : vector<4x16x24xf32> to vector<4x1x16xf32>
    %284 = vector.shape_cast %283 : vector<4x1x16xf32> to vector<4x16xf32>
    %285 = vector.extract_strided_slice %4 {offsets = [0, 15, 5], sizes = [4, 1, 16], strides = [1, 1, 1]} : vector<4x16x24xf32> to vector<4x1x16xf32>
    %286 = vector.shape_cast %285 : vector<4x1x16xf32> to vector<4x16xf32>
    %287 = vector.extract_strided_slice %4 {offsets = [0, 15, 6], sizes = [4, 1, 16], strides = [1, 1, 1]} : vector<4x16x24xf32> to vector<4x1x16xf32>
    %288 = vector.shape_cast %287 : vector<4x1x16xf32> to vector<4x16xf32>
    %289 = vector.extract_strided_slice %4 {offsets = [0, 15, 7], sizes = [4, 1, 16], strides = [1, 1, 1]} : vector<4x16x24xf32> to vector<4x1x16xf32>
    %290 = vector.shape_cast %289 : vector<4x1x16xf32> to vector<4x16xf32>
    %291 = vector.extract_strided_slice %4 {offsets = [0, 15, 8], sizes = [4, 1, 16], strides = [1, 1, 1]} : vector<4x16x24xf32> to vector<4x1x16xf32>
    %292 = vector.shape_cast %291 : vector<4x1x16xf32> to vector<4x16xf32>
    %cst = arith.constant 0.000000e+00 : f32
    %293 = vector.broadcast %cst : f32 to vector<4x16xf32>
    %294 = tpu.concatenate %6, %8, %10, %12, %14, %16, %18, %20, %22, %293 in 0 : vector<4x16xf32>, vector<4x16xf32>, vector<4x16xf32>, vector<4x16xf32>, vector<4x16xf32>, vector<4x16xf32>, vector<4x16xf32>, vector<4x16xf32>, vector<4x16xf32>, vector<4x16xf32> -> vector<40x16xf32>
    %295 = tpu.concatenate %24, %26, %28, %30, %32, %34, %36, %38, %40, %293 in 0 : vector<4x16xf32>, vector<4x16xf32>, vector<4x16xf32>, vector<4x16xf32>, vector<4x16xf32>, vector<4x16xf32>, vector<4x16xf32>, vector<4x16xf32>, vector<4x16xf32>, vector<4x16xf32> -> vector<40x16xf32>
    %296 = tpu.concatenate %42, %44, %46, %48, %50, %52, %54, %56, %58, %293 in 0 : vector<4x16xf32>, vector<4x16xf32>, vector<4x16xf32>, vector<4x16xf32>, vector<4x16xf32>, vector<4x16xf32>, vector<4x16xf32>, vector<4x16xf32>, vector<4x16xf32>, vector<4x16xf32> -> vector<40x16xf32>
    %297 = tpu.concatenate %60, %62, %64, %66, %68, %70, %72, %74, %76, %293 in 0 : vector<4x16xf32>, vector<4x16xf32>, vector<4x16xf32>, vector<4x16xf32>, vector<4x16xf32>, vector<4x16xf32>, vector<4x16xf32>, vector<4x16xf32>, vector<4x16xf32>, vector<4x16xf32> -> vector<40x16xf32>
    %298 = tpu.concatenate %78, %80, %82, %84, %86, %88, %90, %92, %94, %293 in 0 : vector<4x16xf32>, vector<4x16xf32>, vector<4x16xf32>, vector<4x16xf32>, vector<4x16xf32>, vector<4x16xf32>, vector<4x16xf32>, vector<4x16xf32>, vector<4x16xf32>, vector<4x16xf32> -> vector<40x16xf32>
    %299 = tpu.concatenate %96, %98, %100, %102, %104, %106, %108, %110, %112, %293 in 0 : vector<4x16xf32>, vector<4x16xf32>, vector<4x16xf32>, vector<4x16xf32>, vector<4x16xf32>, vector<4x16xf32>, vector<4x16xf32>, vector<4x16xf32>, vector<4x16xf32>, vector<4x16xf32> -> vector<40x16xf32>
    %300 = tpu.concatenate %114, %116, %118, %120, %122, %124, %126, %128, %130, %293 in 0 : vector<4x16xf32>, vector<4x16xf32>, vector<4x16xf32>, vector<4x16xf32>, vector<4x16xf32>, vector<4x16xf32>, vector<4x16xf32>, vector<4x16xf32>, vector<4x16xf32>, vector<4x16xf32> -> vector<40x16xf32>
    %301 = tpu.concatenate %132, %134, %136, %138, %140, %142, %144, %146, %148, %293 in 0 : vector<4x16xf32>, vector<4x16xf32>, vector<4x16xf32>, vector<4x16xf32>, vector<4x16xf32>, vector<4x16xf32>, vector<4x16xf32>, vector<4x16xf32>, vector<4x16xf32>, vector<4x16xf32> -> vector<40x16xf32>
    %302 = tpu.concatenate %150, %152, %154, %156, %158, %160, %162, %164, %166, %293 in 0 : vector<4x16xf32>, vector<4x16xf32>, vector<4x16xf32>, vector<4x16xf32>, vector<4x16xf32>, vector<4x16xf32>, vector<4x16xf32>, vector<4x16xf32>, vector<4x16xf32>, vector<4x16xf32> -> vector<40x16xf32>
    %303 = tpu.concatenate %168, %170, %172, %174, %176, %178, %180, %182, %184, %293 in 0 : vector<4x16xf32>, vector<4x16xf32>, vector<4x16xf32>, vector<4x16xf32>, vector<4x16xf32>, vector<4x16xf32>, vector<4x16xf32>, vector<4x16xf32>, vector<4x16xf32>, vector<4x16xf32> -> vector<40x16xf32>
    %304 = tpu.concatenate %186, %188, %190, %192, %194, %196, %198, %200, %202, %293 in 0 : vector<4x16xf32>, vector<4x16xf32>, vector<4x16xf32>, vector<4x16xf32>, vector<4x16xf32>, vector<4x16xf32>, vector<4x16xf32>, vector<4x16xf32>, vector<4x16xf32>, vector<4x16xf32> -> vector<40x16xf32>
    %305 = tpu.concatenate %204, %206, %208, %210, %212, %214, %216, %218, %220, %293 in 0 : vector<4x16xf32>, vector<4x16xf32>, vector<4x16xf32>, vector<4x16xf32>, vector<4x16xf32>, vector<4x16xf32>, vector<4x16xf32>, vector<4x16xf32>, vector<4x16xf32>, vector<4x16xf32> -> vector<40x16xf32>
    %306 = tpu.concatenate %222, %224, %226, %228, %230, %232, %234, %236, %238, %293 in 0 : vector<4x16xf32>, vector<4x16xf32>, vector<4x16xf32>, vector<4x16xf32>, vector<4x16xf32>, vector<4x16xf32>, vector<4x16xf32>, vector<4x16xf32>, vector<4x16xf32>, vector<4x16xf32> -> vector<40x16xf32>
    %307 = tpu.concatenate %240, %242, %244, %246, %248, %250, %252, %254, %256, %293 in 0 : vector<4x16xf32>, vector<4x16xf32>, vector<4x16xf32>, vector<4x16xf32>, vector<4x16xf32>, vector<4x16xf32>, vector<4x16xf32>, vector<4x16xf32>, vector<4x16xf32>, vector<4x16xf32> -> vector<40x16xf32>
    %308 = tpu.concatenate %258, %260, %262, %264, %266, %268, %270, %272, %274, %293 in 0 : vector<4x16xf32>, vector<4x16xf32>, vector<4x16xf32>, vector<4x16xf32>, vector<4x16xf32>, vector<4x16xf32>, vector<4x16xf32>, vector<4x16xf32>, vector<4x16xf32>, vector<4x16xf32> -> vector<40x16xf32>
    %309 = tpu.concatenate %276, %278, %280, %282, %284, %286, %288, %290, %292, %293 in 0 : vector<4x16xf32>, vector<4x16xf32>, vector<4x16xf32>, vector<4x16xf32>, vector<4x16xf32>, vector<4x16xf32>, vector<4x16xf32>, vector<4x16xf32>, vector<4x16xf32>, vector<4x16xf32> -> vector<40x16xf32>
    %310 = tpu.concatenate %294, %295, %296, %297, %298, %299, %300, %301, %302 in 0 : vector<40x16xf32>, vector<40x16xf32>, vector<40x16xf32>, vector<40x16xf32>, vector<40x16xf32>, vector<40x16xf32>, vector<40x16xf32>, vector<40x16xf32>, vector<40x16xf32> -> vector<360x16xf32>
    %c0_2 = arith.constant 0 : index
    %c0_3 = arith.constant 0 : index
    %311 = vector.load %arg3[%c0_2, %c0_3] : memref<32x360xbf16, #tpu.memory_space<vmem>>, vector<32x360xbf16>
    %312 = arith.truncf %310 : vector<360x16xf32> to vector<360x16xbf16>
    %cst_4 = arith.constant dense<0.000000e+00> : vector<32x16xf32>
    %313 = tpu.matmul %311, %312, %cst_4 {dimension_numbers = #tpu.dot_dimension_numbers<[1], [0], [0], [1], [0, 0, 1, 1], [], []>} : vector<32x360xbf16>, vector<360x16xbf16>, vector<32x16xf32> -> vector<32x16xf32>
    %c0_5 = arith.constant 0 : index
    %c0_6 = arith.constant 0 : index
    %314 = vector.load %arg4[%c0_5, %c0_6] : memref<32x1xf32, #tpu.memory_space<vmem>>, vector<32x1xf32>
    %315 = vector.broadcast %314 : vector<32x1xf32> to vector<32x16xf32>
    %316 = arith.mulf %313, %315 : vector<32x16xf32>
    %c0_7 = arith.constant 0 : index
    %c0_8 = arith.constant 0 : index
    %317 = vector.load %arg5[%c0_7, %c0_8] : memref<32x1xf32, #tpu.memory_space<vmem>>, vector<32x1xf32>
    %318 = vector.broadcast %317 : vector<32x1xf32> to vector<32x16xf32>
    %319 = arith.addf %316, %318 : vector<32x16xf32>
    %cst_9 = arith.constant 0.000000e+00 : f32
    %320 = vector.broadcast %cst_9 : f32 to vector<32x16xf32>
    %321 = arith.maximumf %319, %320 : vector<32x16xf32>
    %c0_10 = arith.constant 0 : index
    %c0_11 = arith.constant 0 : index
    %c0_12 = arith.constant 0 : index
    %c0_13 = arith.constant 0 : index
    %322 = vector.load %arg6[%c0_10, %c0_11, %c0_12, %c0_13] : memref<1x32x8x16xf32, #tpu.memory_space<vmem>>, vector<1x32x1x16xf32>
    %323 = vector.shape_cast %322 : vector<1x32x1x16xf32> to vector<32x16xf32>
    %324 = vector.shape_cast %321 : vector<32x16xf32> to vector<1x32x1x16xf32>
    tpu.vector_store %arg6[%c0_10, %c0_11, %c0_12, %c0_13], %324 {strides = array<i32>} : memref<1x32x8x16xf32, #tpu.memory_space<vmem>>, vector<1x32x1x16xf32>,
    %325 = tpu.concatenate %295, %296, %297, %298, %299, %300, %301, %302, %303 in 0 : vector<40x16xf32>, vector<40x16xf32>, vector<40x16xf32>, vector<40x16xf32>, vector<40x16xf32>, vector<40x16xf32>, vector<40x16xf32>, vector<40x16xf32>, vector<40x16xf32> -> vector<360x16xf32>
    %c0_14 = arith.constant 0 : index
    %c0_15 = arith.constant 0 : index
    %326 = vector.load %arg3[%c0_14, %c0_15] : memref<32x360xbf16, #tpu.memory_space<vmem>>, vector<32x360xbf16>
    %327 = arith.truncf %325 : vector<360x16xf32> to vector<360x16xbf16>
    %cst_16 = arith.constant dense<0.000000e+00> : vector<32x16xf32>
    %328 = tpu.matmul %326, %327, %cst_16 {dimension_numbers = #tpu.dot_dimension_numbers<[1], [0], [0], [1], [0, 0, 1, 1], [], []>} : vector<32x360xbf16>, vector<360x16xbf16>, vector<32x16xf32> -> vector<32x16xf32>
    %c0_17 = arith.constant 0 : index
    %c0_18 = arith.constant 0 : index
    %329 = vector.load %arg4[%c0_17, %c0_18] : memref<32x1xf32, #tpu.memory_space<vmem>>, vector<32x1xf32>
    %330 = vector.broadcast %329 : vector<32x1xf32> to vector<32x16xf32>
    %331 = arith.mulf %328, %330 : vector<32x16xf32>
    %c0_19 = arith.constant 0 : index
    %c0_20 = arith.constant 0 : index
    %332 = vector.load %arg5[%c0_19, %c0_20] : memref<32x1xf32, #tpu.memory_space<vmem>>, vector<32x1xf32>
    %333 = vector.broadcast %332 : vector<32x1xf32> to vector<32x16xf32>
    %334 = arith.addf %331, %333 : vector<32x16xf32>
    %cst_21 = arith.constant 0.000000e+00 : f32
    %335 = vector.broadcast %cst_21 : f32 to vector<32x16xf32>
    %336 = arith.maximumf %334, %335 : vector<32x16xf32>
    %c0_22 = arith.constant 0 : index
    %c0_23 = arith.constant 0 : index
    %c1 = arith.constant 1 : index
    %c0_24 = arith.constant 0 : index
    %337 = vector.load %arg6[%c0_22, %c0_23, %c1, %c0_24] : memref<1x32x8x16xf32, #tpu.memory_space<vmem>>, vector<1x32x1x16xf32>
    %338 = vector.shape_cast %337 : vector<1x32x1x16xf32> to vector<32x16xf32>
    %339 = vector.shape_cast %336 : vector<32x16xf32> to vector<1x32x1x16xf32>
    tpu.vector_store %arg6[%c0_22, %c0_23, %c1, %c0_24], %339 {strides = array<i32>} : memref<1x32x8x16xf32, #tpu.memory_space<vmem>>, vector<1x32x1x16xf32>,
    %340 = tpu.concatenate %296, %297, %298, %299, %300, %301, %302, %303, %304 in 0 : vector<40x16xf32>, vector<40x16xf32>, vector<40x16xf32>, vector<40x16xf32>, vector<40x16xf32>, vector<40x16xf32>, vector<40x16xf32>, vector<40x16xf32>, vector<40x16xf32> -> vector<360x16xf32>
    %c0_25 = arith.constant 0 : index
    %c0_26 = arith.constant 0 : index
    %341 = vector.load %arg3[%c0_25, %c0_26] : memref<32x360xbf16, #tpu.memory_space<vmem>>, vector<32x360xbf16>
    %342 = arith.truncf %340 : vector<360x16xf32> to vector<360x16xbf16>
    %cst_27 = arith.constant dense<0.000000e+00> : vector<32x16xf32>
    %343 = tpu.matmul %341, %342, %cst_27 {dimension_numbers = #tpu.dot_dimension_numbers<[1], [0], [0], [1], [0, 0, 1, 1], [], []>} : vector<32x360xbf16>, vector<360x16xbf16>, vector<32x16xf32> -> vector<32x16xf32>
    %c0_28 = arith.constant 0 : index
    %c0_29 = arith.constant 0 : index
    %344 = vector.load %arg4[%c0_28, %c0_29] : memref<32x1xf32, #tpu.memory_space<vmem>>, vector<32x1xf32>
    %345 = vector.broadcast %344 : vector<32x1xf32> to vector<32x16xf32>
    %346 = arith.mulf %343, %345 : vector<32x16xf32>
    %c0_30 = arith.constant 0 : index
    %c0_31 = arith.constant 0 : index
    %347 = vector.load %arg5[%c0_30, %c0_31] : memref<32x1xf32, #tpu.memory_space<vmem>>, vector<32x1xf32>
    %348 = vector.broadcast %347 : vector<32x1xf32> to vector<32x16xf32>
    %349 = arith.addf %346, %348 : vector<32x16xf32>
    %cst_32 = arith.constant 0.000000e+00 : f32
    %350 = vector.broadcast %cst_32 : f32 to vector<32x16xf32>
    %351 = arith.maximumf %349, %350 : vector<32x16xf32>
    %c0_33 = arith.constant 0 : index
    %c0_34 = arith.constant 0 : index
    %c2 = arith.constant 2 : index
    %c0_35 = arith.constant 0 : index
    %352 = vector.load %arg6[%c0_33, %c0_34, %c2, %c0_35] : memref<1x32x8x16xf32, #tpu.memory_space<vmem>>, vector<1x32x1x16xf32>
    %353 = vector.shape_cast %352 : vector<1x32x1x16xf32> to vector<32x16xf32>
    %354 = vector.shape_cast %351 : vector<32x16xf32> to vector<1x32x1x16xf32>
    tpu.vector_store %arg6[%c0_33, %c0_34, %c2, %c0_35], %354 {strides = array<i32>} : memref<1x32x8x16xf32, #tpu.memory_space<vmem>>, vector<1x32x1x16xf32>,
    %355 = tpu.concatenate %297, %298, %299, %300, %301, %302, %303, %304, %305 in 0 : vector<40x16xf32>, vector<40x16xf32>, vector<40x16xf32>, vector<40x16xf32>, vector<40x16xf32>, vector<40x16xf32>, vector<40x16xf32>, vector<40x16xf32>, vector<40x16xf32> -> vector<360x16xf32>
    %c0_36 = arith.constant 0 : index
    %c0_37 = arith.constant 0 : index
    %356 = vector.load %arg3[%c0_36, %c0_37] : memref<32x360xbf16, #tpu.memory_space<vmem>>, vector<32x360xbf16>
    %357 = arith.truncf %355 : vector<360x16xf32> to vector<360x16xbf16>
    %cst_38 = arith.constant dense<0.000000e+00> : vector<32x16xf32>
    %358 = tpu.matmul %356, %357, %cst_38 {dimension_numbers = #tpu.dot_dimension_numbers<[1], [0], [0], [1], [0, 0, 1, 1], [], []>} : vector<32x360xbf16>, vector<360x16xbf16>, vector<32x16xf32> -> vector<32x16xf32>
    %c0_39 = arith.constant 0 : index
    %c0_40 = arith.constant 0 : index
    %359 = vector.load %arg4[%c0_39, %c0_40] : memref<32x1xf32, #tpu.memory_space<vmem>>, vector<32x1xf32>
    %360 = vector.broadcast %359 : vector<32x1xf32> to vector<32x16xf32>
    %361 = arith.mulf %358, %360 : vector<32x16xf32>
    %c0_41 = arith.constant 0 : index
    %c0_42 = arith.constant 0 : index
    %362 = vector.load %arg5[%c0_41, %c0_42] : memref<32x1xf32, #tpu.memory_space<vmem>>, vector<32x1xf32>
    %363 = vector.broadcast %362 : vector<32x1xf32> to vector<32x16xf32>
    %364 = arith.addf %361, %363 : vector<32x16xf32>
    %cst_43 = arith.constant 0.000000e+00 : f32
    %365 = vector.broadcast %cst_43 : f32 to vector<32x16xf32>
    %366 = arith.maximumf %364, %365 : vector<32x16xf32>
    %c0_44 = arith.constant 0 : index
    %c0_45 = arith.constant 0 : index
    %c3 = arith.constant 3 : index
    %c0_46 = arith.constant 0 : index
    %367 = vector.load %arg6[%c0_44, %c0_45, %c3, %c0_46] : memref<1x32x8x16xf32, #tpu.memory_space<vmem>>, vector<1x32x1x16xf32>
    %368 = vector.shape_cast %367 : vector<1x32x1x16xf32> to vector<32x16xf32>
    %369 = vector.shape_cast %366 : vector<32x16xf32> to vector<1x32x1x16xf32>
    tpu.vector_store %arg6[%c0_44, %c0_45, %c3, %c0_46], %369 {strides = array<i32>} : memref<1x32x8x16xf32, #tpu.memory_space<vmem>>, vector<1x32x1x16xf32>,
    %370 = tpu.concatenate %298, %299, %300, %301, %302, %303, %304, %305, %306 in 0 : vector<40x16xf32>, vector<40x16xf32>, vector<40x16xf32>, vector<40x16xf32>, vector<40x16xf32>, vector<40x16xf32>, vector<40x16xf32>, vector<40x16xf32>, vector<40x16xf32> -> vector<360x16xf32>
    %c0_47 = arith.constant 0 : index
    %c0_48 = arith.constant 0 : index
    %371 = vector.load %arg3[%c0_47, %c0_48] : memref<32x360xbf16, #tpu.memory_space<vmem>>, vector<32x360xbf16>
    %372 = arith.truncf %370 : vector<360x16xf32> to vector<360x16xbf16>
    %cst_49 = arith.constant dense<0.000000e+00> : vector<32x16xf32>
    %373 = tpu.matmul %371, %372, %cst_49 {dimension_numbers = #tpu.dot_dimension_numbers<[1], [0], [0], [1], [0, 0, 1, 1], [], []>} : vector<32x360xbf16>, vector<360x16xbf16>, vector<32x16xf32> -> vector<32x16xf32>
    %c0_50 = arith.constant 0 : index
    %c0_51 = arith.constant 0 : index
    %374 = vector.load %arg4[%c0_50, %c0_51] : memref<32x1xf32, #tpu.memory_space<vmem>>, vector<32x1xf32>
    %375 = vector.broadcast %374 : vector<32x1xf32> to vector<32x16xf32>
    %376 = arith.mulf %373, %375 : vector<32x16xf32>
    %c0_52 = arith.constant 0 : index
    %c0_53 = arith.constant 0 : index
    %377 = vector.load %arg5[%c0_52, %c0_53] : memref<32x1xf32, #tpu.memory_space<vmem>>, vector<32x1xf32>
    %378 = vector.broadcast %377 : vector<32x1xf32> to vector<32x16xf32>
    %379 = arith.addf %376, %378 : vector<32x16xf32>
    %cst_54 = arith.constant 0.000000e+00 : f32
    %380 = vector.broadcast %cst_54 : f32 to vector<32x16xf32>
    %381 = arith.maximumf %379, %380 : vector<32x16xf32>
    %c0_55 = arith.constant 0 : index
    %c0_56 = arith.constant 0 : index
    %c4 = arith.constant 4 : index
    %c0_57 = arith.constant 0 : index
    %382 = vector.load %arg6[%c0_55, %c0_56, %c4, %c0_57] : memref<1x32x8x16xf32, #tpu.memory_space<vmem>>, vector<1x32x1x16xf32>
    %383 = vector.shape_cast %382 : vector<1x32x1x16xf32> to vector<32x16xf32>
    %384 = vector.shape_cast %381 : vector<32x16xf32> to vector<1x32x1x16xf32>
    tpu.vector_store %arg6[%c0_55, %c0_56, %c4, %c0_57], %384 {strides = array<i32>} : memref<1x32x8x16xf32, #tpu.memory_space<vmem>>, vector<1x32x1x16xf32>,
    %385 = tpu.concatenate %299, %300, %301, %302, %303, %304, %305, %306, %307 in 0 : vector<40x16xf32>, vector<40x16xf32>, vector<40x16xf32>, vector<40x16xf32>, vector<40x16xf32>, vector<40x16xf32>, vector<40x16xf32>, vector<40x16xf32>, vector<40x16xf32> -> vector<360x16xf32>
    %c0_58 = arith.constant 0 : index
    %c0_59 = arith.constant 0 : index
    %386 = vector.load %arg3[%c0_58, %c0_59] : memref<32x360xbf16, #tpu.memory_space<vmem>>, vector<32x360xbf16>
    %387 = arith.truncf %385 : vector<360x16xf32> to vector<360x16xbf16>
    %cst_60 = arith.constant dense<0.000000e+00> : vector<32x16xf32>
    %388 = tpu.matmul %386, %387, %cst_60 {dimension_numbers = #tpu.dot_dimension_numbers<[1], [0], [0], [1], [0, 0, 1, 1], [], []>} : vector<32x360xbf16>, vector<360x16xbf16>, vector<32x16xf32> -> vector<32x16xf32>
    %c0_61 = arith.constant 0 : index
    %c0_62 = arith.constant 0 : index
    %389 = vector.load %arg4[%c0_61, %c0_62] : memref<32x1xf32, #tpu.memory_space<vmem>>, vector<32x1xf32>
    %390 = vector.broadcast %389 : vector<32x1xf32> to vector<32x16xf32>
    %391 = arith.mulf %388, %390 : vector<32x16xf32>
    %c0_63 = arith.constant 0 : index
    %c0_64 = arith.constant 0 : index
    %392 = vector.load %arg5[%c0_63, %c0_64] : memref<32x1xf32, #tpu.memory_space<vmem>>, vector<32x1xf32>
    %393 = vector.broadcast %392 : vector<32x1xf32> to vector<32x16xf32>
    %394 = arith.addf %391, %393 : vector<32x16xf32>
    %cst_65 = arith.constant 0.000000e+00 : f32
    %395 = vector.broadcast %cst_65 : f32 to vector<32x16xf32>
    %396 = arith.maximumf %394, %395 : vector<32x16xf32>
    %c0_66 = arith.constant 0 : index
    %c0_67 = arith.constant 0 : index
    %c5 = arith.constant 5 : index
    %c0_68 = arith.constant 0 : index
    %397 = vector.load %arg6[%c0_66, %c0_67, %c5, %c0_68] : memref<1x32x8x16xf32, #tpu.memory_space<vmem>>, vector<1x32x1x16xf32>
    %398 = vector.shape_cast %397 : vector<1x32x1x16xf32> to vector<32x16xf32>
    %399 = vector.shape_cast %396 : vector<32x16xf32> to vector<1x32x1x16xf32>
    tpu.vector_store %arg6[%c0_66, %c0_67, %c5, %c0_68], %399 {strides = array<i32>} : memref<1x32x8x16xf32, #tpu.memory_space<vmem>>, vector<1x32x1x16xf32>,
    %400 = tpu.concatenate %300, %301, %302, %303, %304, %305, %306, %307, %308 in 0 : vector<40x16xf32>, vector<40x16xf32>, vector<40x16xf32>, vector<40x16xf32>, vector<40x16xf32>, vector<40x16xf32>, vector<40x16xf32>, vector<40x16xf32>, vector<40x16xf32> -> vector<360x16xf32>
    %c0_69 = arith.constant 0 : index
    %c0_70 = arith.constant 0 : index
    %401 = vector.load %arg3[%c0_69, %c0_70] : memref<32x360xbf16, #tpu.memory_space<vmem>>, vector<32x360xbf16>
    %402 = arith.truncf %400 : vector<360x16xf32> to vector<360x16xbf16>
    %cst_71 = arith.constant dense<0.000000e+00> : vector<32x16xf32>
    %403 = tpu.matmul %401, %402, %cst_71 {dimension_numbers = #tpu.dot_dimension_numbers<[1], [0], [0], [1], [0, 0, 1, 1], [], []>} : vector<32x360xbf16>, vector<360x16xbf16>, vector<32x16xf32> -> vector<32x16xf32>
    %c0_72 = arith.constant 0 : index
    %c0_73 = arith.constant 0 : index
    %404 = vector.load %arg4[%c0_72, %c0_73] : memref<32x1xf32, #tpu.memory_space<vmem>>, vector<32x1xf32>
    %405 = vector.broadcast %404 : vector<32x1xf32> to vector<32x16xf32>
    %406 = arith.mulf %403, %405 : vector<32x16xf32>
    %c0_74 = arith.constant 0 : index
    %c0_75 = arith.constant 0 : index
    %407 = vector.load %arg5[%c0_74, %c0_75] : memref<32x1xf32, #tpu.memory_space<vmem>>, vector<32x1xf32>
    %408 = vector.broadcast %407 : vector<32x1xf32> to vector<32x16xf32>
    %409 = arith.addf %406, %408 : vector<32x16xf32>
    %cst_76 = arith.constant 0.000000e+00 : f32
    %410 = vector.broadcast %cst_76 : f32 to vector<32x16xf32>
    %411 = arith.maximumf %409, %410 : vector<32x16xf32>
    %c0_77 = arith.constant 0 : index
    %c0_78 = arith.constant 0 : index
    %c6 = arith.constant 6 : index
    %c0_79 = arith.constant 0 : index
    %412 = vector.load %arg6[%c0_77, %c0_78, %c6, %c0_79] : memref<1x32x8x16xf32, #tpu.memory_space<vmem>>, vector<1x32x1x16xf32>
    %413 = vector.shape_cast %412 : vector<1x32x1x16xf32> to vector<32x16xf32>
    %414 = vector.shape_cast %411 : vector<32x16xf32> to vector<1x32x1x16xf32>
    tpu.vector_store %arg6[%c0_77, %c0_78, %c6, %c0_79], %414 {strides = array<i32>} : memref<1x32x8x16xf32, #tpu.memory_space<vmem>>, vector<1x32x1x16xf32>,
    %415 = tpu.concatenate %301, %302, %303, %304, %305, %306, %307, %308, %309 in 0 : vector<40x16xf32>, vector<40x16xf32>, vector<40x16xf32>, vector<40x16xf32>, vector<40x16xf32>, vector<40x16xf32>, vector<40x16xf32>, vector<40x16xf32>, vector<40x16xf32> -> vector<360x16xf32>
    %c0_80 = arith.constant 0 : index
    %c0_81 = arith.constant 0 : index
    %416 = vector.load %arg3[%c0_80, %c0_81] : memref<32x360xbf16, #tpu.memory_space<vmem>>, vector<32x360xbf16>
    %417 = arith.truncf %415 : vector<360x16xf32> to vector<360x16xbf16>
    %cst_82 = arith.constant dense<0.000000e+00> : vector<32x16xf32>
    %418 = tpu.matmul %416, %417, %cst_82 {dimension_numbers = #tpu.dot_dimension_numbers<[1], [0], [0], [1], [0, 0, 1, 1], [], []>} : vector<32x360xbf16>, vector<360x16xbf16>, vector<32x16xf32> -> vector<32x16xf32>
    %c0_83 = arith.constant 0 : index
    %c0_84 = arith.constant 0 : index
    %419 = vector.load %arg4[%c0_83, %c0_84] : memref<32x1xf32, #tpu.memory_space<vmem>>, vector<32x1xf32>
    %420 = vector.broadcast %419 : vector<32x1xf32> to vector<32x16xf32>
    %421 = arith.mulf %418, %420 : vector<32x16xf32>
    %c0_85 = arith.constant 0 : index
    %c0_86 = arith.constant 0 : index
    %422 = vector.load %arg5[%c0_85, %c0_86] : memref<32x1xf32, #tpu.memory_space<vmem>>, vector<32x1xf32>
    %423 = vector.broadcast %422 : vector<32x1xf32> to vector<32x16xf32>
    %424 = arith.addf %421, %423 : vector<32x16xf32>
    %cst_87 = arith.constant 0.000000e+00 : f32
    %425 = vector.broadcast %cst_87 : f32 to vector<32x16xf32>
    %426 = arith.maximumf %424, %425 : vector<32x16xf32>
    %c0_88 = arith.constant 0 : index
    %c0_89 = arith.constant 0 : index
    %c7 = arith.constant 7 : index
    %c0_90 = arith.constant 0 : index
    %427 = vector.load %arg6[%c0_88, %c0_89, %c7, %c0_90] : memref<1x32x8x16xf32, #tpu.memory_space<vmem>>, vector<1x32x1x16xf32>
    %428 = vector.shape_cast %427 : vector<1x32x1x16xf32> to vector<32x16xf32>
    %429 = vector.shape_cast %426 : vector<32x16xf32> to vector<1x32x1x16xf32>
    tpu.vector_store %arg6[%c0_88, %c0_89, %c7, %c0_90], %429 {strides = array<i32>} : memref<1x32x8x16xf32, #tpu.memory_space<vmem>>, vector<1x32x1x16xf32>,
    return
  }
  func.func @transform_0(%arg0: i32, %arg1: i32) -> (i32, i32, i32, i32) {
    %c0_i32 = arith.constant 0 : i32
    %c0_i32_0 = arith.constant 0 : i32
    %c0_i32_1 = arith.constant 0 : i32
    %c0_i32_2 = arith.constant 0 : i32
    return %arg0, %c0_i32, %c0_i32_0, %c0_i32_1 : i32, i32, i32, i32
  }
  func.func @transform_1(%arg0: i32, %arg1: i32) -> (i32, i32) {
    %c0_i32 = arith.constant 0 : i32
    %c0_i32_0 = arith.constant 0 : i32
    %c0_i32_1 = arith.constant 0 : i32
    return %c0_i32, %c0_i32_0 : i32, i32
  }
  func.func @transform_2(%arg0: i32, %arg1: i32) -> (i32, i32) {
    %c0_i32 = arith.constant 0 : i32
    %c0_i32_0 = arith.constant 0 : i32
    %c0_i32_1 = arith.constant 0 : i32
    return %c0_i32, %c0_i32_0 : i32, i32
  }
  func.func @transform_3(%arg0: i32, %arg1: i32) -> (i32, i32) {
    %c0_i32 = arith.constant 0 : i32
    %c0_i32_0 = arith.constant 0 : i32
    %c0_i32_1 = arith.constant 0 : i32
    return %c0_i32, %c0_i32_0 : i32, i32
  }
  func.func @transform_4(%arg0: i32, %arg1: i32) -> (i32, i32, i32, i32) {
    %c0_i32 = arith.constant 0 : i32
    %c0_i32_0 = arith.constant 0 : i32
    %c0_i32_1 = arith.constant 0 : i32
    return %arg0, %c0_i32, %arg1, %c0_i32_0 : i32, i32, i32, i32
  }
}

</mosaic_0001>

<llo_original>
// kernel: tpu_custom_call.1
$region0: #{tpu_custom_call.1}
  #allocation0 [shape = 'u32[]', space=smem, size = 0x4, offset = 0x4, fixed_abs, tag = 'smem constant byte address 0x4 - core index']
  #allocation1 [shape = 'u32[144,128]{1,0:T(1,128)}', space=vmem, size = 0x12000, scoped, tag = 'internal scratch']
  %s0 = inlined_call_operand.hbm [shape: f32[2,4,24,24], index: 0, kind: input, shape index: {}]
  %s1 = inlined_call_operand.vmem [shape: bf16[32,360], index: 1, kind: input, shape index: {}]
  %s2 = inlined_call_operand.vmem [shape: f32[32,1], index: 2, kind: input, shape index: {}]
  %s3 = inlined_call_operand.vmem [shape: f32[32,1], index: 3, kind: input, shape index: {}]
  %s4 = inlined_call_operand.vmem [shape: f32[2,32,16,16], index: 4, kind: output, shape index: {}]
  %s5 = sld [smem:[#allocation0]]
  $region87: #{tpu_custom_call.1} parent=0
    _
  %s7 = ssub.s32 1, %s5
  %s8 = scalar_select 0, %s7, %s5
  $region1: #{tpu_custom_call.1} parent=0
    #allocation2 [shape = 'u8[98304]{0}', space=vmem, size = 0x18000, scoped, tag = 'input window, operand 0']
    #allocation3 [shape = 's32[2]{0}', space=sflag, size = 0x8, scoped, tag = 'scoped memory for tpu_custom_call.1']
    #allocation4 [shape = 'u8[262144]{0}', space=vmem, size = 0x40000, scoped, tag = 'output window, operand 0']
    %9 = vsyncpa [#allocation3], 0
    %s10 = scalar_lea.sflag [#allocation3], 1
    %11 = vsyncpa %s10, 0
    loop: start=0, step=1, limit=6
    $region2: #{tpu_custom_call.1} parent=1 // loop_pre_header
      _
    $region3: #{tpu_custom_call.1} parent=1 // loop_header
      %s13 = sphi 0, %s17
      %p14 = scmp.ge.s32.totalorder %s13, 6
      %s20 = sphi 0, %s32
      %s21 = sphi 0, %s28
      %s22 = sphi 0, %s20
      %s23 = sphi 0, %s21
      %s24 = sphi 0, %s22
      %s25 = sphi 0, %s23
      %s35 = sphi 0, %s37
      %s38 = sphi 0, %s35
      %s39 = sphi 0, %s38
      %s55 = sphi 0, %s39
      %s59 = sphi 0, %s59
      %s61 = sphi 0, %s59
      %s62 = sphi 0, %s61
      %s76 = sphi 0, %s62
      %s80 = sphi 0, %s80
      %s82 = sphi 0, %s80
      %s83 = sphi 0, %s82
      %s97 = sphi 0, %s83
      %s101 = sphi 0, %s101
      %s103 = sphi 0, %s101
      %s104 = sphi 0, %s103
      %s118 = sphi 0, %s104
      %s126 = sphi 0, %s128
      %s129 = sphi 0, %s126
      %s130 = sphi 0, %s129
      %s146 = sphi 0, %s130
    $region4: #{tpu_custom_call.1} parent=1 // loop_header_branch
      %16 = sbr.rel (%p14) target = $region8
    $region5: #{tpu_custom_call.1} parent=1 // loop_body
      %s18 = ssub.s32 %s13, 1
      %s19 = ssub.s32 %s13, 2
      %s26 = sadd.s32 1, %s21
      %p27 = scmp.ge.s32.totalorder %s26, 2
      %s28 = scalar_select %p27, 0, %s26
      %s29 = sadd.s32 1, %s20
      %s30 = scalar_select %p27, %s29, %s20
      %p31 = scmp.ge.s32.totalorder %s30, 2
      %s32 = scalar_select %p31, 0, %s30
      %s33 = ssub.s32 %s20, %s32
      %p34 = scmp.eq.s32.totalorder %s33, 0
      %s36 = sadd.s32 %s35, 1
      %s37 = scalar_select %p34, %s35, %s36
      %p40 = pneg %p34
      %p41 = scmp.eq.s32.totalorder %s13, 3
      %p42 = por %p40, %p41
      %p43 = scmp.ne.s32.totalorder %s35, %s38
      %p44 = scmp.eq.s32.totalorder %s13, 0
      %p45 = por %p43, %p44
      %p46 = scmp.ne.s32.totalorder %s35, %s38
      %p47 = scmp.eq.s32.totalorder %s18, 3
      %p48 = por %p46, %p47
      %p49 = scmp.ne.s32.totalorder %s38, %s39
      %p50 = scmp.eq.s32.totalorder %s18, 0
      %p51 = por %p49, %p50
      %p52 = scmp.ne.s32.totalorder %s38, %s39
      %p53 = scmp.eq.s32.totalorder %s19, 3
      %p54 = por %p52, %p53
      %p56 = scmp.ne.s32.totalorder %s39, %s55
      %p57 = scmp.eq.s32.totalorder %s19, 0
      %p58 = por %p56, %p57
      %s60 = sadd.s32 %s59, 1
      %p63 = scmp.eq.s32.totalorder %s13, 3
      %p64 = scmp.ne.s32.totalorder %s59, %s61
      %p65 = scmp.eq.s32.totalorder %s13, 0
      %p66 = por %p64, %p65
      %p67 = scmp.ne.s32.totalorder %s59, %s61
      %p68 = scmp.eq.s32.totalorder %s18, 3
      %p69 = por %p67, %p68
      %p70 = scmp.ne.s32.totalorder %s61, %s62
      %p71 = scmp.eq.s32.totalorder %s18, 0
      %p72 = por %p70, %p71
      %p73 = scmp.ne.s32.totalorder %s61, %s62
      %p74 = scmp.eq.s32.totalorder %s19, 3
      %p75 = por %p73, %p74
      %p77 = scmp.ne.s32.totalorder %s62, %s76
      %p78 = scmp.eq.s32.totalorder %s19, 0
      %p79 = por %p77, %p78
      %s81 = sadd.s32 %s80, 1
      %p84 = scmp.eq.s32.totalorder %s13, 3
      %p85 = scmp.ne.s32.totalorder %s80, %s82
      %p86 = scmp.eq.s32.totalorder %s13, 0
      %p87 = por %p85, %p86
      %p88 = scmp.ne.s32.totalorder %s80, %s82
      %p89 = scmp.eq.s32.totalorder %s18, 3
      %p90 = por %p88, %p89
      %p91 = scmp.ne.s32.totalorder %s82, %s83
      %p92 = scmp.eq.s32.totalorder %s18, 0
      %p93 = por %p91, %p92
      %p94 = scmp.ne.s32.totalorder %s82, %s83
      %p95 = scmp.eq.s32.totalorder %s19, 3
      %p96 = por %p94, %p95
      %p98 = scmp.ne.s32.totalorder %s83, %s97
      %p99 = scmp.eq.s32.totalorder %s19, 0
      %p100 = por %p98, %p99
      %s102 = sadd.s32 %s101, 1
      %p105 = scmp.eq.s32.totalorder %s13, 3
      %p106 = scmp.ne.s32.totalorder %s101, %s103
      %p107 = scmp.eq.s32.totalorder %s13, 0
      %p108 = por %p106, %p107
      %p109 = scmp.ne.s32.totalorder %s101, %s103
      %p110 = scmp.eq.s32.totalorder %s18, 3
      %p111 = por %p109, %p110
      %p112 = scmp.ne.s32.totalorder %s103, %s104
      %p113 = scmp.eq.s32.totalorder %s18, 0
      %p114 = por %p112, %p113
      %p115 = scmp.ne.s32.totalorder %s103, %s104
      %p116 = scmp.eq.s32.totalorder %s19, 3
      %p117 = por %p115, %p116
      %p119 = scmp.ne.s32.totalorder %s104, %s118
      %p120 = scmp.eq.s32.totalorder %s19, 0
      %p121 = por %p119, %p120
      %s122 = ssub.s32 %s20, %s32
      %s123 = ssub.s32 %s21, %s28
      %s124 = sor.u32 %s122, %s123
      %p125 = scmp.eq.s32.totalorder %s124, 0
      %s127 = sadd.s32 %s126, 1
      %s128 = scalar_select %p125, %s126, %s127
      %p131 = pneg %p125
      %p132 = scmp.eq.s32.totalorder %s13, 3
      %p133 = por %p131, %p132
      %p134 = scmp.ne.s32.totalorder %s126, %s129
      %p135 = scmp.eq.s32.totalorder %s13, 0
      %p136 = por %p134, %p135
      %p137 = scmp.ne.s32.totalorder %s126, %s129
      %p138 = scmp.eq.s32.totalorder %s18, 3
      %p139 = por %p137, %p138
      %p140 = scmp.ne.s32.totalorder %s129, %s130
      %p141 = scmp.eq.s32.totalorder %s18, 0
      %p142 = por %p140, %p141
      %p143 = scmp.ne.s32.totalorder %s129, %s130
      %p144 = scmp.eq.s32.totalorder %s19, 3
      %p145 = por %p143, %p144
      %p147 = scmp.ne.s32.totalorder %s130, %s146
      %p148 = scmp.eq.s32.totalorder %s19, 0
      %p149 = por %p147, %p148
      %p150 = scmp.le.s32.totalorder 1, %s13
      %p151 = scmp.lt.s32.totalorder %s13, 5
      %p152 = pnand %p150, %p151
      %p153 = pneg %p152
      // Predicated region
      $region9: #{tpu_custom_call.1} parent=5 // pred_check
        _
      $region10: #{tpu_custom_call.1} parent=5 // pred_check_branch
        %155 = sbr.rel (%p152) target = $region12
      $region11: #{tpu_custom_call.1} parent=5 // pred_region
        %s156 = ssub.s32 %s13, 1
        // Predicated region
        $region13: #{tpu_custom_call.1} parent=11 // pred_check
          %p157 = pneg %p72
        $region14: #{tpu_custom_call.1} parent=11 // pred_check_branch
          %159 = sbr.rel (%p157) target = $region16
        $region15: #{tpu_custom_call.1} parent=11 // pred_region
          _
        $region16: #{tpu_custom_call.1} parent=11 // pred_fallthru
          _
        // Predicated region
        $region17: #{tpu_custom_call.1} parent=11 // pred_check
          %p160 = pneg %p93
        $region18: #{tpu_custom_call.1} parent=11 // pred_check_branch
          %162 = sbr.rel (%p160) target = $region20
        $region19: #{tpu_custom_call.1} parent=11 // pred_region
          _
        $region20: #{tpu_custom_call.1} parent=11 // pred_fallthru
          _
        // Predicated region
        $region21: #{tpu_custom_call.1} parent=11 // pred_check
          %p163 = pneg %p114
        $region22: #{tpu_custom_call.1} parent=11 // pred_check_branch
          %165 = sbr.rel (%p163) target = $region24
        $region23: #{tpu_custom_call.1} parent=11 // pred_region
          _
        $region24: #{tpu_custom_call.1} parent=11 // pred_fallthru
          _
      $region12: #{tpu_custom_call.1} parent=5 // pred_fallthru
        _
      %p166 = scmp.lt.s32.totalorder %s13, 4
      // Predicated region
      $region25: #{tpu_custom_call.1} parent=5 // pred_check
        %p167 = pneg %p166
      $region26: #{tpu_custom_call.1} parent=5 // pred_check_branch
        %169 = sbr.rel (%p167) target = $region28
      $region27: #{tpu_custom_call.1} parent=5 // pred_region
        // Predicated region
        $region29: #{tpu_custom_call.1} parent=27 // pred_check
          %p170 = pneg %p45
        $region30: #{tpu_custom_call.1} parent=27 // pred_check_branch
          %172 = sbr.rel (%p170) target = $region32
        $region31: #{tpu_custom_call.1} parent=27 // pred_region
          %s173 = sand.u32 %s35, 1
          %s174 = scalar_lea.sflag [#allocation3], %s173
          %s175 = sand.u32 %s35, 1
          %s176 = smul.addr %s175, 96
          %s177 = scalar_lea.vmem [#allocation2], %s176
          %s179 = ssub.s32 1536, 1536
          %180 = vsyncadd %s174, %s179
          %s181 = smul.addr %s20, 12
          %s182 = smul.addr %s181, 128
          %s183 = scalar_lea.hbm %s0, %s182
          %s184 = sshll.u32 %s177, 4
          %s185 = int_to_ptr.vmem [resolvable:$true] %s184
          %190 = dma.hbm_to_vmem [thread:$0]  %s183, 1536, %s185, %s174, 128, 128, 8
        $region32: #{tpu_custom_call.1} parent=27 // pred_fallthru
          _
      $region28: #{tpu_custom_call.1} parent=5 // pred_fallthru
        _
      %p191 = scmp.le.s32.totalorder 1, %s13
      %p192 = scmp.lt.s32.totalorder %s13, 5
      %p193 = pnand %p191, %p192
      %p194 = pneg %p193
      // Predicated region
      $region33: #{tpu_custom_call.1} parent=5 // pred_check
        _
      $region34: #{tpu_custom_call.1} parent=5 // pred_check_branch
        %196 = sbr.rel (%p193) target = $region36
      $region35: #{tpu_custom_call.1} parent=5 // pred_region
        %s197 = ssub.s32 %s13, 1
        %s198 = sand.u32 %s38, 1
        %s199 = scalar_lea.sflag [#allocation3], %s198
        %s200 = sand.u32 %s38, 1
        %s201 = smul.addr %s200, 96
        %s202 = scalar_lea.vmem [#allocation2], %s201
        // Predicated region
        $region37: #{tpu_custom_call.1} parent=35 // pred_check
          %p203 = pneg %p51
        $region38: #{tpu_custom_call.1} parent=35 // pred_check_branch
          %205 = sbr.rel (%p203) target = $region40
        $region39: #{tpu_custom_call.1} parent=35 // pred_region
          %206 = dma.done %s199, 1536
        $region40: #{tpu_custom_call.1} parent=35 // pred_fallthru
          _
        %s207 = sand.u32 %s38, 1
        %s208 = scalar_lea.sflag [#allocation3], %s207
        %s209 = sand.u32 %s38, 1
        %s210 = smul.addr %s209, 96
        %s211 = scalar_lea.vmem [#allocation2], %s210
        %p212 = pneg %p51
        %p213 = pneg %p48
        %p214 = pneg %p72
        %p215 = pneg %p69
        %p216 = pneg %p93
        %p217 = pneg %p90
        %p218 = pneg %p114
        %p219 = pneg %p111
        %p220 = pneg %p142
        %p221 = pneg %p139
        %s222 = sand.u32 %s129, 1
        %s223 = sand.u32 %s129, 1
        %s224 = smul.addr %s223, 256
        %s225 = scalar_lea.vmem [#allocation4], %s224
        %s227 = smul.u32 %s23, 8
        %s228 = scalar_lea.vmem %s202, %s227 [#allocation2]
        %v229 = vld [vmem:[%s228] sm:$0xff]
        %v230 = vld [vmem:[%s228 + $0x8] sm:$0xff]
        %v231 = vld [vmem:[%s228 + $0x18] sm:$0xff]
        %v232 = vld [vmem:[%s228 + $0x20] sm:$0xff]
        %v233 = vld [vmem:[%s228 + $0x30] sm:$0xff]
        %v234 = vld [vmem:[%s228 + $0x38] sm:$0xff]
        %v235 = vld [vmem:[%s228 + $0x48] sm:$0xff]
        %v236 = vld [vmem:[%s228 + $0x50] sm:$0xff]
        %v241 = vrot.slane %v231, 7
        %vm242 = vcmask 1041409
        %v243 = vsel %vm242, %v241, %v229
        %v244 = vrot.slane %v233, 6
        %vm245 = vcmask 1042434
        %v246 = vsel %vm245, %v244, %v243
        %v247 = vrot.slane %v235, 5
        %vm248 = vcmask 1043459
        %v249 = vsel %vm248, %v247, %v246
        %v251 = vrot.slane %v229, 4
        %v252 = vrot.slane %v231, 3
        %vm253 = vcmask 1045509
        %v254 = vsel %vm253, %v252, %v251
        %v255 = vrot.slane %v233, 2
        %vm256 = vcmask 1046534
        %v257 = vsel %vm256, %v255, %v254
        %v258 = vrot.slane %v235, 1
        %vm259 = vcmask 1047559
        %v260 = vsel %vm259, %v258, %v257
        %261 = vrot.lane.b32.xlu0 %v260, 127
        %v262 = vpop.permute.xlu0 %261
        %264 = vrot.lane.b32.xlu0 %v249, 126
        %v265 = vpop.permute.xlu0 %264
        %267 = vrot.lane.b32.xlu0 %v260, 125
        %v268 = vpop.permute.xlu0 %267
        %270 = vrot.lane.b32.xlu0 %v249, 124
        %v271 = vpop.permute.xlu0 %270
        %273 = vrot.lane.b32.xlu0 %v260, 123
        %v274 = vpop.permute.xlu0 %273
        %276 = vrot.lane.b32.xlu0 %v249, 122
        %v277 = vpop.permute.xlu0 %276
        %279 = vrot.lane.b32.xlu0 %v260, 121
        %v280 = vpop.permute.xlu0 %279
        %282 = vrot.lane.b32.xlu0 %v249, 120
        %v283 = vpop.permute.xlu0 %282
        %vm285 = vcmask 1043456
        %v286 = vsel %vm285, %v249, %v262
        %v287 = vsel %vm285, %v265, %v268
        %v288 = vsel %vm285, %v271, %v274
        %v289 = vsel %vm285, %v277, %v280
        %v290 = vsel %vm285, %v283, 0.0
        %v291 = vrot.slane %v229, 1
        %v292 = vsel %vm242, %v231, %v291
        %v293 = vrot.slane %v233, 7
        %v294 = vsel %vm245, %v293, %v292
        %v295 = vrot.slane %v235, 6
        %v296 = vsel %vm248, %v295, %v294
        %v298 = vrot.slane %v229, 5
        %v299 = vrot.slane %v231, 4
        %v300 = vsel %vm253, %v299, %v298
        %v301 = vrot.slane %v233, 3
        %v302 = vsel %vm256, %v301, %v300
        %v303 = vrot.slane %v235, 2
        %v304 = vsel %vm259, %v303, %v302
        %305 = vrot.lane.b32.xlu0 %v304, 127
        %v306 = vpop.permute.xlu0 %305
        %308 = vrot.lane.b32.xlu0 %v296, 126
        %v309 = vpop.permute.xlu0 %308
        %311 = vrot.lane.b32.xlu0 %v304, 125
        %v312 = vpop.permute.xlu0 %311
        %314 = vrot.lane.b32.xlu0 %v296, 124
        %v315 = vpop.permute.xlu0 %314
        %317 = vrot.lane.b32.xlu0 %v304, 123
        %v318 = vpop.permute.xlu0 %317
        %320 = vrot.lane.b32.xlu0 %v296, 122
        %v321 = vpop.permute.xlu0 %320
        %323 = vrot.lane.b32.xlu0 %v304, 121
        %v324 = vpop.permute.xlu0 %323
        %326 = vrot.lane.b32.xlu0 %v296, 120
        %v327 = vpop.permute.xlu0 %326
        %v329 = vsel %vm285, %v296, %v306
        %v330 = vsel %vm285, %v309, %v312
        %v331 = vsel %vm285, %v315, %v318
        %v332 = vsel %vm285, %v321, %v324
        %v333 = vsel %vm285, %v327, 0.0
        %v334 = vrot.slane %v229, 2
        %v335 = vrot.slane %v231, 1
        %v336 = vsel %vm242, %v335, %v334
        %v337 = vsel %vm245, %v233, %v336
        %v338 = vrot.slane %v235, 7
        %v339 = vsel %vm248, %v338, %v337
        %v341 = vrot.slane %v229, 6
        %v342 = vrot.slane %v231, 5
        %v343 = vsel %vm253, %v342, %v341
        %v344 = vrot.slane %v233, 4
        %v345 = vsel %vm256, %v344, %v343
        %v346 = vrot.slane %v235, 3
        %v347 = vsel %vm259, %v346, %v345
        %348 = vrot.lane.b32.xlu0 %v347, 127
        %v349 = vpop.permute.xlu0 %348
        %351 = vrot.lane.b32.xlu0 %v339, 126
        %v352 = vpop.permute.xlu0 %351
        %354 = vrot.lane.b32.xlu0 %v347, 125
        %v355 = vpop.permute.xlu0 %354
        %357 = vrot.lane.b32.xlu0 %v339, 124
        %v358 = vpop.permute.xlu0 %357
        %360 = vrot.lane.b32.xlu0 %v347, 123
        %v361 = vpop.permute.xlu0 %360
        %363 = vrot.lane.b32.xlu0 %v339, 122
        %v364 = vpop.permute.xlu0 %363
        %366 = vrot.lane.b32.xlu0 %v347, 121
        %v367 = vpop.permute.xlu0 %366
        %369 = vrot.lane.b32.xlu0 %v339, 120
        %v370 = vpop.permute.xlu0 %369
        %v372 = vsel %vm285, %v339, %v349
        %v373 = vsel %vm285, %v352, %v355
        %v374 = vsel %vm285, %v358, %v361
        %v375 = vsel %vm285, %v364, %v367
        %v376 = vsel %vm285, %v370, 0.0
        %v377 = vrot.slane %v229, 3
        %v378 = vrot.slane %v231, 2
        %v379 = vsel %vm242, %v378, %v377
        %v380 = vrot.slane %v233, 1
        %v381 = vsel %vm245, %v380, %v379
        %v382 = vsel %vm248, %v235, %v381
        %v384 = vrot.slane %v229, 7
        %v385 = vrot.slane %v231, 6
        %v386 = vsel %vm253, %v385, %v384
        %v387 = vrot.slane %v233, 5
        %v388 = vsel %vm256, %v387, %v386
        %v389 = vrot.slane %v235, 4
        %v390 = vsel %vm259, %v389, %v388
        %391 = vrot.lane.b32.xlu0 %v390, 127
        %v392 = vpop.permute.xlu0 %391
        %394 = vrot.lane.b32.xlu0 %v382, 126
        %v395 = vpop.permute.xlu0 %394
        %397 = vrot.lane.b32.xlu0 %v390, 125
        %v398 = vpop.permute.xlu0 %397
        %400 = vrot.lane.b32.xlu0 %v382, 124
        %v401 = vpop.permute.xlu0 %400
        %403 = vrot.lane.b32.xlu0 %v390, 123
        %v404 = vpop.permute.xlu0 %403
        %406 = vrot.lane.b32.xlu0 %v382, 122
        %v407 = vpop.permute.xlu0 %406
        %409 = vrot.lane.b32.xlu0 %v390, 121
        %v410 = vpop.permute.xlu0 %409
        %412 = vrot.lane.b32.xlu0 %v382, 120
        %v413 = vpop.permute.xlu0 %412
        %v415 = vsel %vm285, %v382, %v392
        %v416 = vsel %vm285, %v395, %v398
        %v417 = vsel %vm285, %v401, %v404
        %v418 = vsel %vm285, %v407, %v410
        %v419 = vsel %vm285, %v413, 0.0
        %v420 = vsel %vm242, %v252, %v251
        %v421 = vsel %vm245, %v255, %v420
        %v422 = vsel %vm248, %v258, %v421
        %v424 = vsel %vm253, %v241, %v229
        %v425 = vsel %vm256, %v244, %v424
        %v426 = vsel %vm259, %v247, %v425
        %427 = vrot.lane.b32.xlu0 %v426, 127
        %v428 = vpop.permute.xlu0 %427
        %430 = vrot.lane.b32.xlu0 %v422, 126
        %v431 = vpop.permute.xlu0 %430
        %433 = vrot.lane.b32.xlu0 %v426, 125
        %v434 = vpop.permute.xlu0 %433
        %436 = vrot.lane.b32.xlu0 %v422, 124
        %v437 = vpop.permute.xlu0 %436
        %439 = vrot.lane.b32.xlu0 %v426, 123
        %v440 = vpop.permute.xlu0 %439
        %442 = vrot.lane.b32.xlu0 %v422, 122
        %v443 = vpop.permute.xlu0 %442
        %445 = vrot.lane.b32.xlu0 %v426, 121
        %v446 = vpop.permute.xlu0 %445
        %448 = vrot.lane.b32.xlu0 %v422, 120
        %v449 = vpop.permute.xlu0 %448
        %v451 = vsel %vm285, %v422, %v428
        %v452 = vsel %vm285, %v431, %v434
        %v453 = vsel %vm285, %v437, %v440
        %v454 = vsel %vm285, %v443, %v446
        %v455 = vsel %vm285, %v449, 0.0
        %v456 = vsel %vm242, %v299, %v298
        %v457 = vsel %vm245, %v301, %v456
        %v458 = vsel %vm248, %v303, %v457
        %v460 = vsel %vm253, %v231, %v291
        %v461 = vsel %vm256, %v293, %v460
        %v462 = vsel %vm259, %v295, %v461
        %463 = vrot.lane.b32.xlu0 %v462, 127
        %v464 = vpop.permute.xlu0 %463
        %466 = vrot.lane.b32.xlu0 %v458, 126
        %v467 = vpop.permute.xlu0 %466
        %469 = vrot.lane.b32.xlu0 %v462, 125
        %v470 = vpop.permute.xlu0 %469
        %472 = vrot.lane.b32.xlu0 %v458, 124
        %v473 = vpop.permute.xlu0 %472
        %475 = vrot.lane.b32.xlu0 %v462, 123
        %v476 = vpop.permute.xlu0 %475
        %478 = vrot.lane.b32.xlu0 %v458, 122
        %v479 = vpop.permute.xlu0 %478
        %481 = vrot.lane.b32.xlu0 %v462, 121
        %v482 = vpop.permute.xlu0 %481
        %484 = vrot.lane.b32.xlu0 %v458, 120
        %v485 = vpop.permute.xlu0 %484
        %v487 = vsel %vm285, %v458, %v464
        %v488 = vsel %vm285, %v467, %v470
        %v489 = vsel %vm285, %v473, %v476
        %v490 = vsel %vm285, %v479, %v482
        %v491 = vsel %vm285, %v485, 0.0
        %v492 = vsel %vm242, %v342, %v341
        %v493 = vsel %vm245, %v344, %v492
        %v494 = vsel %vm248, %v346, %v493
        %v496 = vsel %vm253, %v335, %v334
        %v497 = vsel %vm256, %v233, %v496
        %v498 = vsel %vm259, %v338, %v497
        %499 = vrot.lane.b32.xlu0 %v498, 127
        %v500 = vpop.permute.xlu0 %499
        %502 = vrot.lane.b32.xlu0 %v494, 126
        %v503 = vpop.permute.xlu0 %502
        %505 = vrot.lane.b32.xlu0 %v498, 125
        %v506 = vpop.permute.xlu0 %505
        %508 = vrot.lane.b32.xlu0 %v494, 124
        %v509 = vpop.permute.xlu0 %508
        %511 = vrot.lane.b32.xlu0 %v498, 123
        %v512 = vpop.permute.xlu0 %511
        %514 = vrot.lane.b32.xlu0 %v494, 122
        %v515 = vpop.permute.xlu0 %514
        %517 = vrot.lane.b32.xlu0 %v498, 121
        %v518 = vpop.permute.xlu0 %517
        %520 = vrot.lane.b32.xlu0 %v494, 120
        %v521 = vpop.permute.xlu0 %520
        %v523 = vsel %vm285, %v494, %v500
        %v524 = vsel %vm285, %v503, %v506
        %v525 = vsel %vm285, %v509, %v512
        %v526 = vsel %vm285, %v515, %v518
        %v527 = vsel %vm285, %v521, 0.0
        %v528 = vsel %vm242, %v385, %v384
        %v529 = vsel %vm245, %v387, %v528
        %v530 = vsel %vm248, %v389, %v529
        %v532 = vsel %vm253, %v378, %v377
        %v533 = vsel %vm256, %v380, %v532
        %v534 = vsel %vm259, %v235, %v533
        %535 = vrot.lane.b32.xlu0 %v534, 127
        %v536 = vpop.permute.xlu0 %535
        %538 = vrot.lane.b32.xlu0 %v530, 126
        %v539 = vpop.permute.xlu0 %538
        %541 = vrot.lane.b32.xlu0 %v534, 125
        %v542 = vpop.permute.xlu0 %541
        %544 = vrot.lane.b32.xlu0 %v530, 124
        %v545 = vpop.permute.xlu0 %544
        %547 = vrot.lane.b32.xlu0 %v534, 123
        %v548 = vpop.permute.xlu0 %547
        %550 = vrot.lane.b32.xlu0 %v530, 122
        %v551 = vpop.permute.xlu0 %550
        %553 = vrot.lane.b32.xlu0 %v534, 121
        %v554 = vpop.permute.xlu0 %553
        %556 = vrot.lane.b32.xlu0 %v530, 120
        %v557 = vpop.permute.xlu0 %556
        %v559 = vsel %vm285, %v530, %v536
        %v560 = vsel %vm285, %v539, %v542
        %v561 = vsel %vm285, %v545, %v548
        %v562 = vsel %vm285, %v551, %v554
        %v563 = vsel %vm285, %v557, 0.0
        %v568 = vrot.slane %v232, 7
        %v569 = vsel %vm242, %v568, %v230
        %v570 = vrot.slane %v234, 6
        %v571 = vsel %vm245, %v570, %v569
        %v572 = vrot.slane %v236, 5
        %v573 = vsel %vm248, %v572, %v571
        %v575 = vrot.slane %v230, 4
        %v576 = vrot.slane %v232, 3
        %v577 = vsel %vm253, %v576, %v575
        %v578 = vrot.slane %v234, 2
        %v579 = vsel %vm256, %v578, %v577
        %v580 = vrot.slane %v236, 1
        %v581 = vsel %vm259, %v580, %v579
        %582 = vrot.lane.b32.xlu0 %v581, 127
        %v583 = vpop.permute.xlu0 %582
        %585 = vrot.lane.b32.xlu0 %v573, 126
        %v586 = vpop.permute.xlu0 %585
        %588 = vrot.lane.b32.xlu0 %v581, 125
        %v589 = vpop.permute.xlu0 %588
        %591 = vrot.lane.b32.xlu0 %v573, 124
        %v592 = vpop.permute.xlu0 %591
        %594 = vrot.lane.b32.xlu0 %v581, 123
        %v595 = vpop.permute.xlu0 %594
        %597 = vrot.lane.b32.xlu0 %v573, 122
        %v598 = vpop.permute.xlu0 %597
        %600 = vrot.lane.b32.xlu0 %v581, 121
        %v601 = vpop.permute.xlu0 %600
        %603 = vrot.lane.b32.xlu0 %v573, 120
        %v604 = vpop.permute.xlu0 %603
        %v606 = vsel %vm285, %v573, %v583
        %v607 = vsel %vm285, %v586, %v589
        %v608 = vsel %vm285, %v592, %v595
        %v609 = vsel %vm285, %v598, %v601
        %v610 = vsel %vm285, %v604, 0.0
        %v611 = vrot.slane %v230, 1
        %v612 = vsel %vm242, %v232, %v611
        %v613 = vrot.slane %v234, 7
        %v614 = vsel %vm245, %v613, %v612
        %v615 = vrot.slane %v236, 6
        %v616 = vsel %vm248, %v615, %v614
        %v618 = vrot.slane %v230, 5
        %v619 = vrot.slane %v232, 4
        %v620 = vsel %vm253, %v619, %v618
        %v621 = vrot.slane %v234, 3
        %v622 = vsel %vm256, %v621, %v620
        %v623 = vrot.slane %v236, 2
        %v624 = vsel %vm259, %v623, %v622
        %625 = vrot.lane.b32.xlu0 %v624, 127
        %v626 = vpop.permute.xlu0 %625
        %628 = vrot.lane.b32.xlu0 %v616, 126
        %v629 = vpop.permute.xlu0 %628
        %631 = vrot.lane.b32.xlu0 %v624, 125
        %v632 = vpop.permute.xlu0 %631
        %634 = vrot.lane.b32.xlu0 %v616, 124
        %v635 = vpop.permute.xlu0 %634
        %637 = vrot.lane.b32.xlu0 %v624, 123
        %v638 = vpop.permute.xlu0 %637
        %640 = vrot.lane.b32.xlu0 %v616, 122
        %v641 = vpop.permute.xlu0 %640
        %643 = vrot.lane.b32.xlu0 %v624, 121
        %v644 = vpop.permute.xlu0 %643
        %646 = vrot.lane.b32.xlu0 %v616, 120
        %v647 = vpop.permute.xlu0 %646
        %v649 = vsel %vm285, %v616, %v626
        %v650 = vsel %vm285, %v629, %v632
        %v651 = vsel %vm285, %v635, %v638
        %v652 = vsel %vm285, %v641, %v644
        %v653 = vsel %vm285, %v647, 0.0
        %v654 = vrot.slane %v230, 2
        %v655 = vrot.slane %v232, 1
        %v656 = vsel %vm242, %v655, %v654
        %v657 = vsel %vm245, %v234, %v656
        %v658 = vrot.slane %v236, 7
        %v659 = vsel %vm248, %v658, %v657
        %v661 = vrot.slane %v230, 6
        %v662 = vrot.slane %v232, 5
        %v663 = vsel %vm253, %v662, %v661
        %v664 = vrot.slane %v234, 4
        %v665 = vsel %vm256, %v664, %v663
        %v666 = vrot.slane %v236, 3
        %v667 = vsel %vm259, %v666, %v665
        %668 = vrot.lane.b32.xlu0 %v667, 127
        %v669 = vpop.permute.xlu0 %668
        %671 = vrot.lane.b32.xlu0 %v659, 126
        %v672 = vpop.permute.xlu0 %671
        %674 = vrot.lane.b32.xlu0 %v667, 125
        %v675 = vpop.permute.xlu0 %674
        %677 = vrot.lane.b32.xlu0 %v659, 124
        %v678 = vpop.permute.xlu0 %677
        %680 = vrot.lane.b32.xlu0 %v667, 123
        %v681 = vpop.permute.xlu0 %680
        %683 = vrot.lane.b32.xlu0 %v659, 122
        %v684 = vpop.permute.xlu0 %683
        %686 = vrot.lane.b32.xlu0 %v667, 121
        %v687 = vpop.permute.xlu0 %686
        %689 = vrot.lane.b32.xlu0 %v659, 120
        %v690 = vpop.permute.xlu0 %689
        %v692 = vsel %vm285, %v659, %v669
        %v693 = vsel %vm285, %v672, %v675
        %v694 = vsel %vm285, %v678, %v681
        %v695 = vsel %vm285, %v684, %v687
        %v696 = vsel %vm285, %v690, 0.0
        %v697 = vrot.slane %v230, 3
        %v698 = vrot.slane %v232, 2
        %v699 = vsel %vm242, %v698, %v697
        %v700 = vrot.slane %v234, 1
        %v701 = vsel %vm245, %v700, %v699
        %v702 = vsel %vm248, %v236, %v701
        %v704 = vrot.slane %v230, 7
        %v705 = vrot.slane %v232, 6
        %v706 = vsel %vm253, %v705, %v704
        %v707 = vrot.slane %v234, 5
        %v708 = vsel %vm256, %v707, %v706
        %v709 = vrot.slane %v236, 4
        %v710 = vsel %vm259, %v709, %v708
        %711 = vrot.lane.b32.xlu0 %v710, 127
        %v712 = vpop.permute.xlu0 %711
        %714 = vrot.lane.b32.xlu0 %v702, 126
        %v715 = vpop.permute.xlu0 %714
        %717 = vrot.lane.b32.xlu0 %v710, 125
        %v718 = vpop.permute.xlu0 %717
        %720 = vrot.lane.b32.xlu0 %v702, 124
        %v721 = vpop.permute.xlu0 %720
        %723 = vrot.lane.b32.xlu0 %v710, 123
        %v724 = vpop.permute.xlu0 %723
        %726 = vrot.lane.b32.xlu0 %v702, 122
        %v727 = vpop.permute.xlu0 %726
        %729 = vrot.lane.b32.xlu0 %v710, 121
        %v730 = vpop.permute.xlu0 %729
        %732 = vrot.lane.b32.xlu0 %v702, 120
        %v733 = vpop.permute.xlu0 %732
        %v735 = vsel %vm285, %v702, %v712
        %v736 = vsel %vm285, %v715, %v718
        %v737 = vsel %vm285, %v721, %v724
        %v738 = vsel %vm285, %v727, %v730
        %v739 = vsel %vm285, %v733, 0.0
        %v740 = vsel %vm242, %v576, %v575
        %v741 = vsel %vm245, %v578, %v740
        %v742 = vsel %vm248, %v580, %v741
        %v744 = vsel %vm253, %v568, %v230
        %v745 = vsel %vm256, %v570, %v744
        %v746 = vsel %vm259, %v572, %v745
        %747 = vrot.lane.b32.xlu0 %v746, 127
        %v748 = vpop.permute.xlu0 %747
        %750 = vrot.lane.b32.xlu0 %v742, 126
        %v751 = vpop.permute.xlu0 %750
        %753 = vrot.lane.b32.xlu0 %v746, 125
        %v754 = vpop.permute.xlu0 %753
        %756 = vrot.lane.b32.xlu0 %v742, 124
        %v757 = vpop.permute.xlu0 %756
        %759 = vrot.lane.b32.xlu0 %v746, 123
        %v760 = vpop.permute.xlu0 %759
        %762 = vrot.lane.b32.xlu0 %v742, 122
        %v763 = vpop.permute.xlu0 %762
        %765 = vrot.lane.b32.xlu0 %v746, 121
        %v766 = vpop.permute.xlu0 %765
        %768 = vrot.lane.b32.xlu0 %v742, 120
        %v769 = vpop.permute.xlu0 %768
        %v771 = vsel %vm285, %v742, %v748
        %v772 = vsel %vm285, %v751, %v754
        %v773 = vsel %vm285, %v757, %v760
        %v774 = vsel %vm285, %v763, %v766
        %v775 = vsel %vm285, %v769, 0.0
        %v776 = vsel %vm242, %v619, %v618
        %v777 = vsel %vm245, %v621, %v776
        %v778 = vsel %vm248, %v623, %v777
        %v780 = vsel %vm253, %v232, %v611
        %v781 = vsel %vm256, %v613, %v780
        %v782 = vsel %vm259, %v615, %v781
        %783 = vrot.lane.b32.xlu0 %v782, 127
        %v784 = vpop.permute.xlu0 %783
        %786 = vrot.lane.b32.xlu0 %v778, 126
        %v787 = vpop.permute.xlu0 %786
        %789 = vrot.lane.b32.xlu0 %v782, 125
        %v790 = vpop.permute.xlu0 %789
        %792 = vrot.lane.b32.xlu0 %v778, 124
        %v793 = vpop.permute.xlu0 %792
        %795 = vrot.lane.b32.xlu0 %v782, 123
        %v796 = vpop.permute.xlu0 %795
        %798 = vrot.lane.b32.xlu0 %v778, 122
        %v799 = vpop.permute.xlu0 %798
        %801 = vrot.lane.b32.xlu0 %v782, 121
        %v802 = vpop.permute.xlu0 %801
        %804 = vrot.lane.b32.xlu0 %v778, 120
        %v805 = vpop.permute.xlu0 %804
        %v807 = vsel %vm285, %v778, %v784
        %v808 = vsel %vm285, %v787, %v790
        %v809 = vsel %vm285, %v793, %v796
        %v810 = vsel %vm285, %v799, %v802
        %v811 = vsel %vm285, %v805, 0.0
        %v812 = vsel %vm242, %v662, %v661
        %v813 = vsel %vm245, %v664, %v812
        %v814 = vsel %vm248, %v666, %v813
        %v816 = vsel %vm253, %v655, %v654
        %v817 = vsel %vm256, %v234, %v816
        %v818 = vsel %vm259, %v658, %v817
        %819 = vrot.lane.b32.xlu0 %v818, 127
        %v820 = vpop.permute.xlu0 %819
        %822 = vrot.lane.b32.xlu0 %v814, 126
        %v823 = vpop.permute.xlu0 %822
        %825 = vrot.lane.b32.xlu0 %v818, 125
        %v826 = vpop.permute.xlu0 %825
        %828 = vrot.lane.b32.xlu0 %v814, 124
        %v829 = vpop.permute.xlu0 %828
        %831 = vrot.lane.b32.xlu0 %v818, 123
        %v832 = vpop.permute.xlu0 %831
        %834 = vrot.lane.b32.xlu0 %v814, 122
        %v835 = vpop.permute.xlu0 %834
        %837 = vrot.lane.b32.xlu0 %v818, 121
        %v838 = vpop.permute.xlu0 %837
        %840 = vrot.lane.b32.xlu0 %v814, 120
        %v841 = vpop.permute.xlu0 %840
        %v843 = vsel %vm285, %v814, %v820
        %v844 = vsel %vm285, %v823, %v826
        %v845 = vsel %vm285, %v829, %v832
        %v846 = vsel %vm285, %v835, %v838
        %v847 = vsel %vm285, %v841, 0.0
        %v848 = vsel %vm242, %v705, %v704
        %v849 = vsel %vm245, %v707, %v848
        %v850 = vsel %vm248, %v709, %v849
        %v852 = vsel %vm253, %v698, %v697
        %v853 = vsel %vm256, %v700, %v852
        %v854 = vsel %vm259, %v236, %v853
        %855 = vrot.lane.b32.xlu0 %v854, 127
        %v856 = vpop.permute.xlu0 %855
        %858 = vrot.lane.b32.xlu0 %v850, 126
        %v859 = vpop.permute.xlu0 %858
        %861 = vrot.lane.b32.xlu0 %v854, 125
        %v862 = vpop.permute.xlu0 %861
        %864 = vrot.lane.b32.xlu0 %v850, 124
        %v865 = vpop.permute.xlu0 %864
        %867 = vrot.lane.b32.xlu0 %v854, 123
        %v868 = vpop.permute.xlu0 %867
        %870 = vrot.lane.b32.xlu0 %v850, 122
        %v871 = vpop.permute.xlu0 %870
        %873 = vrot.lane.b32.xlu0 %v854, 121
        %v874 = vpop.permute.xlu0 %873
        %876 = vrot.lane.b32.xlu0 %v850, 120
        %v877 = vpop.permute.xlu0 %876
        %v879 = vsel %vm285, %v850, %v856
        %v880 = vsel %vm285, %v859, %v862
        %v881 = vsel %vm285, %v865, %v868
        %v882 = vsel %vm285, %v871, %v874
        %v883 = vsel %vm285, %v877, 0.0
        %v884 = vld [vmem:[%s1] sm:$0xff]
        %v885 = vld [vmem:[%s1 + $0x8] sm:$0xf]
        %v886 = vld [vmem:[%s1 + $0xc] sm:$0xff]
        %v887 = vld [vmem:[%s1 + $0x14] sm:$0xf]
        %v888 = vld [vmem:[%s1 + $0x18] sm:$0xff]
        %v889 = vld [vmem:[%s1 + $0x20] sm:$0xf]
        %v890 = vld [vmem:[%s1 + $0x24] sm:$0xff]
        %v891 = vld [vmem:[%s1 + $0x2c] sm:$0xf]
        %v892 = vpack.c.bf16 %v287, %v286
        %v893 = vpack.c.bf16 %v289, %v288
        %v894 = vpack.c.bf16 %v329, %v290
        %v895 = vpack.c.bf16 %v331, %v330
        %v896 = vpack.c.bf16 %v333, %v332
        %v897 = vpack.c.bf16 %v373, %v372
        %v898 = vpack.c.bf16 %v375, %v374
        %v899 = vpack.c.bf16 %v415, %v376
        %v900 = vpack.c.bf16 %v417, %v416
        %v901 = vpack.c.bf16 %v419, %v418
        %v902 = vpack.c.bf16 %v452, %v451
        %v903 = vpack.c.bf16 %v454, %v453
        %v904 = vpack.c.bf16 %v487, %v455
        %v905 = vpack.c.bf16 %v489, %v488
        %v906 = vpack.c.bf16 %v491, %v490
        %v907 = vpack.c.bf16 %v524, %v523
        %v908 = vpack.c.bf16 %v526, %v525
        %v909 = vpack.c.bf16 %v559, %v527
        %v910 = vpack.c.bf16 %v561, %v560
        %v911 = vpack.c.bf16 %v563, %v562
        %v912 = vpack.c.bf16 %v607, %v606
        %v913 = vpack.c.bf16 %v609, %v608
        %v914 = vpack.c.bf16 %v610, %v610
        %v923 = vunpack.c.l.b16 %v884
        %v924 = vunpack.c.h.b16 %v884
        %v925 = vunpack.c.l.b16 %v885
        %v926 = vunpack.c.l.b16 %v886
        %v927 = vunpack.c.h.b16 %v886
        %v928 = vunpack.c.l.b16 %v887
        %v929 = vunpack.c.l.b16 %v888
        %v930 = vunpack.c.h.b16 %v888
        %v931 = vunpack.c.l.b16 %v889
        %v932 = vunpack.c.l.b16 %v890
        %v933 = vunpack.c.h.b16 %v890
        %v934 = vunpack.c.l.b16 %v891
        %v935 = vpack.c.b16 %v926, %v923
        %v936 = vpack.c.b16 %v927, %v924
        %v937 = vpack.c.b16 %v928, %v925
        %v938 = vpack.c.b16 %v932, %v929
        %v939 = vpack.c.b16 %v933, %v930
        %v940 = vpack.c.b16 %v934, %v931
        %vm945 = vcmask 850944
        %v947 = vsel %vm945, %v937, 0
        %v950 = vsel %vm945, %v940, 0
        %v953 = vsel %vm285, %v914, 0
        %955 = vmatprep.subr.bf16.mxu0 0
        %956 = vmatpush1.bf16.msra.mxu0 %v899
        %957 = vmatprep.subr.bf16.mxu0 0
        %958 = vmatpush1.bf16.msra.mxu0 %v898
        %959 = vmatprep.subr.bf16.mxu0 0
        %960 = vmatpush1.bf16.msra.mxu0 %v897
        %961 = vmatprep.subr.bf16.mxu0 0
        %962 = vmatpush1.bf16.msra.mxu0 %v896
        %963 = vmatprep.subr.bf16.mxu0 0
        %964 = vmatpush1.bf16.msra.mxu0 %v895
        %965 = vmatprep.subr.bf16.mxu0 0
        %966 = vmatpush1.bf16.msra.mxu0 %v894
        %967 = vmatprep.subr.bf16.mxu0 0
        %968 = vmatpush1.bf16.msra.mxu0 %v893
        %969 = vmatprep.subr.bf16.mxu0 0
        %970 = vmatpush1.bf16.msra.mxu0 %v892
        %971 = vmatprep.subr.bf16.mxu0 0
        %972 = vmatpush2.bf16.msra.mxu0 %v907
        %973 = vmatprep.subr.bf16.mxu0 0
        %974 = vmatpush2.bf16.msra.mxu0 %v906
        %975 = vmatprep.subr.bf16.mxu0 0
        %976 = vmatpush2.bf16.msra.mxu0 %v905
        %977 = vmatprep.subr.bf16.mxu0 0
        %978 = vmatpush2.bf16.msra.mxu0 %v904
        %979 = vmatprep.subr.bf16.mxu0 0
        %980 = vmatpush2.bf16.msra.mxu0 %v903
        %981 = vmatprep.subr.bf16.mxu0 0
        %982 = vmatpush2.bf16.msra.mxu0 %v902
        %983 = vmatprep.subr.bf16.mxu0 0
        %984 = vmatpush2.bf16.msra.mxu0 %v901
        %985 = vmatprep.subr.bf16.mxu0 0
        %986 = vmatpush2.bf16.msra.mxu0 %v900
        %987 = vmatprep.mubr.bf16.mxu0 %v936
        %988 = vmatmul.mubr.bf16.gmra.mxu0 %v935
        %v989 = vpop.f32.mrf.mxu0
        %v990 = vadd.f32 0.0, %v989
        %v991 = vpop.f32.mrf.mxu0
        %v992 = vpop.f32.mrf.mxu0
        %v993 = vadd.f32 0.0, %v992
        %v994 = vpop.f32.mrf.mxu0
        %995 = vmatprep.mubr.bf16.mxu0 %v939
        %996 = vmatmul.mubr.bf16.gmra.mxu0 %v938
        %v997 = vpop.f32.mrf.mxu0
        %v998 = vadd.f32 0.0, %v997
        %v999 = vpop.f32.mrf.mxu0
        %v1000 = vpop.f32.mrf.mxu0
        %v1001 = vadd.f32 0.0, %v1000
        %v1002 = vpop.f32.mrf.mxu0
        %1003 = vdwg.mxu0
        %1004 = vmatprep.subr.bf16.mxu0 0
        %1005 = vmatpush1.bf16.msra.mxu0 0
        %1006 = vmatprep.subr.bf16.mxu0 0
        %1007 = vmatpush1.bf16.msra.mxu0 %v953
        %1008 = vmatprep.subr.bf16.mxu0 0
        %1009 = vmatpush1.bf16.msra.mxu0 %v913
        %1010 = vmatprep.subr.bf16.mxu0 0
        %1011 = vmatpush1.bf16.msra.mxu0 %v912
        %1012 = vmatprep.subr.bf16.mxu0 0
        %1013 = vmatpush1.bf16.msra.mxu0 %v911
        %1014 = vmatprep.subr.bf16.mxu0 0
        %1015 = vmatpush1.bf16.msra.mxu0 %v910
        %1016 = vmatprep.subr.bf16.mxu0 0
        %1017 = vmatpush1.bf16.msra.mxu0 %v909
        %1018 = vmatprep.subr.bf16.mxu0 0
        %1019 = vmatpush1.bf16.msra.mxu0 %v908
        %1020 = vmatprep.subr.bf16.mxu0 0
        %1021 = vmatpush2.bf16.msra.mxu0 0
        %1022 = vmatprep.subr.bf16.mxu0 0
        %1023 = vmatpush2.bf16.msra.mxu0 0
        %1024 = vmatprep.subr.bf16.mxu0 0
        %1025 = vmatpush2.bf16.msra.mxu0 0
        %1026 = vmatprep.subr.bf16.mxu0 0
        %1027 = vmatpush2.bf16.msra.mxu0 0
        %1028 = vmatprep.subr.bf16.mxu0 0
        %1029 = vmatpush2.bf16.msra.mxu0 0
        %1030 = vmatprep.subr.bf16.mxu0 0
        %1031 = vmatpush2.bf16.msra.mxu0 0
        %1032 = vmatprep.subr.bf16.mxu0 0
        %1033 = vmatpush2.bf16.msra.mxu0 0
        %1034 = vmatprep.subr.bf16.mxu0 0
        %1035 = vmatpush2.bf16.msra.mxu0 0
        %1036 = vmatprep.mubr.bf16.mxu0 0
        %1037 = vmatmul.mubr.bf16.gmra.mxu0 %v947
        %v1038 = vpop.f32.mrf.mxu0
        %v1039 = vadd.f32 %v990, %v1038
        %v1040 = vpop.f32.mrf.mxu0
        %v1041 = vpop.f32.mrf.mxu0
        %v1042 = vadd.f32 %v993, %v1041
        %v1043 = vpop.f32.mrf.mxu0
        %1044 = vmatprep.mubr.bf16.mxu0 0
        %1045 = vmatmul.mubr.bf16.gmra.mxu0 %v950
        %v1046 = vpop.f32.mrf.mxu0
        %v1047 = vadd.f32 %v998, %v1046
        %v1048 = vpop.f32.mrf.mxu0
        %v1049 = vpop.f32.mrf.mxu0
        %v1050 = vadd.f32 %v1001, %v1049
        %v1051 = vpop.f32.mrf.mxu0
        %1052 = vdwg.mxu0
        %v1053 = vld [vmem:[%s2] sm:$0xff]
        %v1054 = vld [vmem:[%s2 + $0x8] sm:$0xff]
        %v1055 = vld [vmem:[%s2 + $0x10] sm:$0xff]
        %v1056 = vld [vmem:[%s2 + $0x18] sm:$0xff]
        %1058 = vset.pattern.permute.xlu0 0
        %1059 = vperm.xlu0 %1058, %v1053
        %v1060 = vpop.permute.xlu0 %1059
        %1063 = vset.pattern.permute.xlu0 0
        %1064 = vperm.xlu0 %1063, %v1054
        %v1065 = vpop.permute.xlu0 %1064
        %1068 = vset.pattern.permute.xlu0 0
        %1069 = vperm.xlu0 %1068, %v1055
        %v1070 = vpop.permute.xlu0 %1069
        %1073 = vset.pattern.permute.xlu0 0
        %1074 = vperm.xlu0 %1073, %v1056
        %v1075 = vpop.permute.xlu0 %1074
        %v1077 = vmul.f32 %v1039, %v1060
        %v1078 = vmul.f32 %v1042, %v1065
        %v1079 = vmul.f32 %v1047, %v1070
        %v1080 = vmul.f32 %v1050, %v1075
        %v1081 = vld [vmem:[%s3] sm:$0xff]
        %v1082 = vld [vmem:[%s3 + $0x8] sm:$0xff]
        %v1083 = vld [vmem:[%s3 + $0x10] sm:$0xff]
        %v1084 = vld [vmem:[%s3 + $0x18] sm:$0xff]
        %1086 = vset.pattern.permute.xlu0 0
        %1087 = vperm.xlu0 %1086, %v1081
        %v1088 = vpop.permute.xlu0 %1087
        %1091 = vset.pattern.permute.xlu0 0
        %1092 = vperm.xlu0 %1091, %v1082
        %v1093 = vpop.permute.xlu0 %1092
        %1096 = vset.pattern.permute.xlu0 0
        %1097 = vperm.xlu0 %1096, %v1083
        %v1098 = vpop.permute.xlu0 %1097
        %1101 = vset.pattern.permute.xlu0 0
        %1102 = vperm.xlu0 %1101, %v1084
        %v1103 = vpop.permute.xlu0 %1102
        %v1105 = vadd.f32 %v1077, %v1088
        %v1106 = vadd.f32 %v1078, %v1093
        %v1107 = vadd.f32 %v1079, %v1098
        %v1108 = vadd.f32 %v1080, %v1103
        %v1109 = vmax.f32 %v1105, 0.0
        %v1110 = vmax.f32 %v1106, 0.0
        %v1111 = vmax.f32 %v1107, 0.0
        %v1112 = vmax.f32 %v1108, 0.0
        %v1117 = vcombine.high %v1109, %v1109
        %v1119 = vunpack.c.l.s4 1966171168
        %v1120 = vunpack.c.0.s8 %v1119
        %v1121 = vlaneseq
        %v1122 = vshrl.u32 %v1121, 7
        %v1123 = vsub.s32 %v1120, %v1122
        %v1124 = vrot.slane %v1109, %v1123
        %v1126 = vunpack.c.l.s4 1966171168
        %v1127 = vunpack.c.0.s8 %v1126
        %v1128 = vlaneseq
        %v1129 = vshrl.u32 %v1128, 7
        %v1130 = vsub.s32 %v1127, %v1129
        %v1131 = vrot.slane %v1117, %v1130
        %v1132 = vcombine.high %v1124, %v1124
        %v1133 = vcombine.high %v1131, %v1131
        %v1135 = vunpack.c.l.s4 1966171168
        %v1136 = vunpack.c.0.s8 %v1135
        %v1137 = vlaneseq
        %v1138 = vshrl.u32 %v1137, 7
        %v1139 = vsub.s32 %v1136, %v1138
        %v1140 = vrot.slane %v1124, %v1139
        %v1142 = vunpack.c.l.s4 1966171168
        %v1143 = vunpack.c.0.s8 %v1142
        %v1144 = vlaneseq
        %v1145 = vshrl.u32 %v1144, 7
        %v1146 = vsub.s32 %v1143, %v1145
        %v1147 = vrot.slane %v1131, %v1146
        %v1149 = vunpack.c.l.s4 1966171168
        %v1150 = vunpack.c.0.s8 %v1149
        %v1151 = vlaneseq
        %v1152 = vshrl.u32 %v1151, 7
        %v1153 = vsub.s32 %v1150, %v1152
        %v1154 = vrot.slane %v1132, %v1153
        %v1156 = vunpack.c.l.s4 1966171168
        %v1157 = vunpack.c.0.s8 %v1156
        %v1158 = vlaneseq
        %v1159 = vshrl.u32 %v1158, 7
        %v1160 = vsub.s32 %v1157, %v1159
        %v1161 = vrot.slane %v1133, %v1160
        %v1162 = vcombine.high %v1140, %v1140
        %v1163 = vcombine.high %v1147, %v1147
        %v1164 = vcombine.high %v1154, %v1154
        %v1165 = vcombine.high %v1161, %v1161
        %v1166 = vcombine.high %v1110, %v1110
        %v1168 = vunpack.c.l.s4 1966171168
        %v1169 = vunpack.c.0.s8 %v1168
        %v1170 = vlaneseq
        %v1171 = vshrl.u32 %v1170, 7
        %v1172 = vsub.s32 %v1169, %v1171
        %v1173 = vrot.slane %v1110, %v1172
        %v1175 = vunpack.c.l.s4 1966171168
        %v1176 = vunpack.c.0.s8 %v1175
        %v1177 = vlaneseq
        %v1178 = vshrl.u32 %v1177, 7
        %v1179 = vsub.s32 %v1176, %v1178
        %v1180 = vrot.slane %v1166, %v1179
        %v1181 = vcombine.high %v1173, %v1173
        %v1182 = vcombine.high %v1180, %v1180
        %v1184 = vunpack.c.l.s4 1966171168
        %v1185 = vunpack.c.0.s8 %v1184
        %v1186 = vlaneseq
        %v1187 = vshrl.u32 %v1186, 7
        %v1188 = vsub.s32 %v1185, %v1187
        %v1189 = vrot.slane %v1173, %v1188
        %v1191 = vunpack.c.l.s4 1966171168
        %v1192 = vunpack.c.0.s8 %v1191
        %v1193 = vlaneseq
        %v1194 = vshrl.u32 %v1193, 7
        %v1195 = vsub.s32 %v1192, %v1194
        %v1196 = vrot.slane %v1180, %v1195
        %v1198 = vunpack.c.l.s4 1966171168
        %v1199 = vunpack.c.0.s8 %v1198
        %v1200 = vlaneseq
        %v1201 = vshrl.u32 %v1200, 7
        %v1202 = vsub.s32 %v1199, %v1201
        %v1203 = vrot.slane %v1181, %v1202
        %v1205 = vunpack.c.l.s4 1966171168
        %v1206 = vunpack.c.0.s8 %v1205
        %v1207 = vlaneseq
        %v1208 = vshrl.u32 %v1207, 7
        %v1209 = vsub.s32 %v1206, %v1208
        %v1210 = vrot.slane %v1182, %v1209
        %v1211 = vcombine.high %v1189, %v1189
        %v1212 = vcombine.high %v1196, %v1196
        %v1213 = vcombine.high %v1203, %v1203
        %v1214 = vcombine.high %v1210, %v1210
        %v1215 = vcombine.high %v1111, %v1111
        %v1217 = vunpack.c.l.s4 1966171168
        %v1218 = vunpack.c.0.s8 %v1217
        %v1219 = vlaneseq
        %v1220 = vshrl.u32 %v1219, 7
        %v1221 = vsub.s32 %v1218, %v1220
        %v1222 = vrot.slane %v1111, %v1221
        %v1224 = vunpack.c.l.s4 1966171168
        %v1225 = vunpack.c.0.s8 %v1224
        %v1226 = vlaneseq
        %v1227 = vshrl.u32 %v1226, 7
        %v1228 = vsub.s32 %v1225, %v1227
        %v1229 = vrot.slane %v1215, %v1228
        %v1230 = vcombine.high %v1222, %v1222
        %v1231 = vcombine.high %v1229, %v1229
        %v1233 = vunpack.c.l.s4 1966171168
        %v1234 = vunpack.c.0.s8 %v1233
        %v1235 = vlaneseq
        %v1236 = vshrl.u32 %v1235, 7
        %v1237 = vsub.s32 %v1234, %v1236
        %v1238 = vrot.slane %v1222, %v1237
        %v1240 = vunpack.c.l.s4 1966171168
        %v1241 = vunpack.c.0.s8 %v1240
        %v1242 = vlaneseq
        %v1243 = vshrl.u32 %v1242, 7
        %v1244 = vsub.s32 %v1241, %v1243
        %v1245 = vrot.slane %v1229, %v1244
        %v1247 = vunpack.c.l.s4 1966171168
        %v1248 = vunpack.c.0.s8 %v1247
        %v1249 = vlaneseq
        %v1250 = vshrl.u32 %v1249, 7
        %v1251 = vsub.s32 %v1248, %v1250
        %v1252 = vrot.slane %v1230, %v1251
        %v1254 = vunpack.c.l.s4 1966171168
        %v1255 = vunpack.c.0.s8 %v1254
        %v1256 = vlaneseq
        %v1257 = vshrl.u32 %v1256, 7
        %v1258 = vsub.s32 %v1255, %v1257
        %v1259 = vrot.slane %v1231, %v1258
        %v1260 = vcombine.high %v1238, %v1238
        %v1261 = vcombine.high %v1245, %v1245
        %v1262 = vcombine.high %v1252, %v1252
        %v1263 = vcombine.high %v1259, %v1259
        %v1264 = vcombine.high %v1112, %v1112
        %v1266 = vunpack.c.l.s4 1966171168
        %v1267 = vunpack.c.0.s8 %v1266
        %v1268 = vlaneseq
        %v1269 = vshrl.u32 %v1268, 7
        %v1270 = vsub.s32 %v1267, %v1269
        %v1271 = vrot.slane %v1112, %v1270
        %v1273 = vunpack.c.l.s4 1966171168
        %v1274 = vunpack.c.0.s8 %v1273
        %v1275 = vlaneseq
        %v1276 = vshrl.u32 %v1275, 7
        %v1277 = vsub.s32 %v1274, %v1276
        %v1278 = vrot.slane %v1264, %v1277
        %v1279 = vcombine.high %v1271, %v1271
        %v1280 = vcombine.high %v1278, %v1278
        %v1282 = vunpack.c.l.s4 1966171168
        %v1283 = vunpack.c.0.s8 %v1282
        %v1284 = vlaneseq
        %v1285 = vshrl.u32 %v1284, 7
        %v1286 = vsub.s32 %v1283, %v1285
        %v1287 = vrot.slane %v1271, %v1286
        %v1289 = vunpack.c.l.s4 1966171168
        %v1290 = vunpack.c.0.s8 %v1289
        %v1291 = vlaneseq
        %v1292 = vshrl.u32 %v1291, 7
        %v1293 = vsub.s32 %v1290, %v1292
        %v1294 = vrot.slane %v1278, %v1293
        %v1296 = vunpack.c.l.s4 1966171168
        %v1297 = vunpack.c.0.s8 %v1296
        %v1298 = vlaneseq
        %v1299 = vshrl.u32 %v1298, 7
        %v1300 = vsub.s32 %v1297, %v1299
        %v1301 = vrot.slane %v1279, %v1300
        %v1303 = vunpack.c.l.s4 1966171168
        %v1304 = vunpack.c.0.s8 %v1303
        %v1305 = vlaneseq
        %v1306 = vshrl.u32 %v1305, 7
        %v1307 = vsub.s32 %v1304, %v1306
        %v1308 = vrot.slane %v1280, %v1307
        %v1309 = vcombine.high %v1287, %v1287
        %v1310 = vcombine.high %v1294, %v1294
        %v1311 = vcombine.high %v1301, %v1301
        %v1312 = vcombine.high %v1308, %v1308
        %vm1345 = vcmask 122880
        %1346 = vst.msk [vmem:[%s225] sm:$0x1] %vm1345, %v1140
        %1347 = vst.msk [vmem:[%s225 + $0x8] sm:$0x1] %vm1345, %v1154
        %1348 = vst.msk [vmem:[%s225 + $0x10] sm:$0x1] %vm1345, %v1162
        %1349 = vst.msk [vmem:[%s225 + $0x18] sm:$0x1] %vm1345, %v1164
        %1350 = vst.msk [vmem:[%s225 + $0x20] sm:$0x1] %vm1345, %v1147
        %1351 = vst.msk [vmem:[%s225 + $0x28] sm:$0x1] %vm1345, %v1161
        %1352 = vst.msk [vmem:[%s225 + $0x30] sm:$0x1] %vm1345, %v1163
        %1353 = vst.msk [vmem:[%s225 + $0x38] sm:$0x1] %vm1345, %v1165
        %1354 = vst.msk [vmem:[%s225 + $0x40] sm:$0x1] %vm1345, %v1189
        %1355 = vst.msk [vmem:[%s225 + $0x48] sm:$0x1] %vm1345, %v1203
        %1356 = vst.msk [vmem:[%s225 + $0x50] sm:$0x1] %vm1345, %v1211
        %1357 = vst.msk [vmem:[%s225 + $0x58] sm:$0x1] %vm1345, %v1213
        %1358 = vst.msk [vmem:[%s225 + $0x60] sm:$0x1] %vm1345, %v1196
        %1359 = vst.msk [vmem:[%s225 + $0x68] sm:$0x1] %vm1345, %v1210
        %1360 = vst.msk [vmem:[%s225 + $0x70] sm:$0x1] %vm1345, %v1212
        %1361 = vst.msk [vmem:[%s225 + $0x78] sm:$0x1] %vm1345, %v1214
        %1362 = vst.msk [vmem:[%s225 + $0x80] sm:$0x1] %vm1345, %v1238
        %1363 = vst.msk [vmem:[%s225 + $0x88] sm:$0x1] %vm1345, %v1252
        %1364 = vst.msk [vmem:[%s225 + $0x90] sm:$0x1] %vm1345, %v1260
        %1365 = vst.msk [vmem:[%s225 + $0x98] sm:$0x1] %vm1345, %v1262
        %1366 = vst.msk [vmem:[%s225 + $0xa0] sm:$0x1] %vm1345, %v1245
        %1367 = vst.msk [vmem:[%s225 + $0xa8] sm:$0x1] %vm1345, %v1259
        %1368 = vst.msk [vmem:[%s225 + $0xb0] sm:$0x1] %vm1345, %v1261
        %1369 = vst.msk [vmem:[%s225 + $0xb8] sm:$0x1] %vm1345, %v1263
        %1370 = vst.msk [vmem:[%s225 + $0xc0] sm:$0x1] %vm1345, %v1287
        %1371 = vst.msk [vmem:[%s225 + $0xc8] sm:$0x1] %vm1345, %v1301
        %1372 = vst.msk [vmem:[%s225 + $0xd0] sm:$0x1] %vm1345, %v1309
        %1373 = vst.msk [vmem:[%s225 + $0xd8] sm:$0x1] %vm1345, %v1311
        %1374 = vst.msk [vmem:[%s225 + $0xe0] sm:$0x1] %vm1345, %v1294
        %1375 = vst.msk [vmem:[%s225 + $0xe8] sm:$0x1] %vm1345, %v1308
        %1376 = vst.msk [vmem:[%s225 + $0xf0] sm:$0x1] %vm1345, %v1310
        %1377 = vst.msk [vmem:[%s225 + $0xf8] sm:$0x1] %vm1345, %v1312
        %v1378 = vld [vmem:[%s1] sm:$0xff]
        %v1379 = vld [vmem:[%s1 + $0x8] sm:$0xf]
        %v1380 = vld [vmem:[%s1 + $0xc] sm:$0xff]
        %v1381 = vld [vmem:[%s1 + $0x14] sm:$0xf]
        %v1382 = vld [vmem:[%s1 + $0x18] sm:$0xff]
        %v1383 = vld [vmem:[%s1 + $0x20] sm:$0xf]
        %v1384 = vld [vmem:[%s1 + $0x24] sm:$0xff]
        %v1385 = vld [vmem:[%s1 + $0x2c] sm:$0xf]
        %v1386 = vpack.c.bf16 %v330, %v329
        %v1387 = vpack.c.bf16 %v332, %v331
        %v1388 = vpack.c.bf16 %v372, %v333
        %v1389 = vpack.c.bf16 %v374, %v373
        %v1390 = vpack.c.bf16 %v376, %v375
        %v1391 = vpack.c.bf16 %v416, %v415
        %v1392 = vpack.c.bf16 %v418, %v417
        %v1393 = vpack.c.bf16 %v451, %v419
        %v1394 = vpack.c.bf16 %v453, %v452
        %v1395 = vpack.c.bf16 %v455, %v454
        %v1396 = vpack.c.bf16 %v488, %v487
        %v1397 = vpack.c.bf16 %v490, %v489
        %v1398 = vpack.c.bf16 %v523, %v491
        %v1399 = vpack.c.bf16 %v525, %v524
        %v1400 = vpack.c.bf16 %v527, %v526
        %v1401 = vpack.c.bf16 %v560, %v559
        %v1402 = vpack.c.bf16 %v562, %v561
        %v1403 = vpack.c.bf16 %v606, %v563
        %v1404 = vpack.c.bf16 %v608, %v607
        %v1405 = vpack.c.bf16 %v610, %v609
        %v1406 = vpack.c.bf16 %v650, %v649
        %v1407 = vpack.c.bf16 %v652, %v651
        %v1408 = vpack.c.bf16 %v653, %v653
        %v1417 = vunpack.c.l.b16 %v1378
        %v1418 = vunpack.c.h.b16 %v1378
        %v1419 = vunpack.c.l.b16 %v1379
        %v1420 = vunpack.c.l.b16 %v1380
        %v1421 = vunpack.c.h.b16 %v1380
        %v1422 = vunpack.c.l.b16 %v1381
        %v1423 = vunpack.c.l.b16 %v1382
        %v1424 = vunpack.c.h.b16 %v1382
        %v1425 = vunpack.c.l.b16 %v1383
        %v1426 = vunpack.c.l.b16 %v1384
        %v1427 = vunpack.c.h.b16 %v1384
        %v1428 = vunpack.c.l.b16 %v1385
        %v1429 = vpack.c.b16 %v1420, %v1417
        %v1430 = vpack.c.b16 %v1421, %v1418
        %v1431 = vpack.c.b16 %v1422, %v1419
        %v1432 = vpack.c.b16 %v1426, %v1423
        %v1433 = vpack.c.b16 %v1427, %v1424
        %v1434 = vpack.c.b16 %v1428, %v1425
        %v1440 = vsel %vm945, %v1431, 0
        %v1443 = vsel %vm945, %v1434, 0
        %v1446 = vsel %vm285, %v1408, 0
        %1448 = vmatprep.subr.bf16.mxu0 0
        %1449 = vmatpush1.bf16.msra.mxu0 %v1393
        %1450 = vmatprep.subr.bf16.mxu0 0
        %1451 = vmatpush1.bf16.msra.mxu0 %v1392
        %1452 = vmatprep.subr.bf16.mxu0 0
        %1453 = vmatpush1.bf16.msra.mxu0 %v1391
        %1454 = vmatprep.subr.bf16.mxu0 0
        %1455 = vmatpush1.bf16.msra.mxu0 %v1390
        %1456 = vmatprep.subr.bf16.mxu0 0
        %1457 = vmatpush1.bf16.msra.mxu0 %v1389
        %1458 = vmatprep.subr.bf16.mxu0 0
        %1459 = vmatpush1.bf16.msra.mxu0 %v1388
        %1460 = vmatprep.subr.bf16.mxu0 0
        %1461 = vmatpush1.bf16.msra.mxu0 %v1387
        %1462 = vmatprep.subr.bf16.mxu0 0
        %1463 = vmatpush1.bf16.msra.mxu0 %v1386
        %1464 = vmatprep.subr.bf16.mxu0 0
        %1465 = vmatpush2.bf16.msra.mxu0 %v1401
        %1466 = vmatprep.subr.bf16.mxu0 0
        %1467 = vmatpush2.bf16.msra.mxu0 %v1400
        %1468 = vmatprep.subr.bf16.mxu0 0
        %1469 = vmatpush2.bf16.msra.mxu0 %v1399
        %1470 = vmatprep.subr.bf16.mxu0 0
        %1471 = vmatpush2.bf16.msra.mxu0 %v1398
        %1472 = vmatprep.subr.bf16.mxu0 0
        %1473 = vmatpush2.bf16.msra.mxu0 %v1397
        %1474 = vmatprep.subr.bf16.mxu0 0
        %1475 = vmatpush2.bf16.msra.mxu0 %v1396
        %1476 = vmatprep.subr.bf16.mxu0 0
        %1477 = vmatpush2.bf16.msra.mxu0 %v1395
        %1478 = vmatprep.subr.bf16.mxu0 0
        %1479 = vmatpush2.bf16.msra.mxu0 %v1394
        %1480 = vmatprep.mubr.bf16.mxu0 %v1430
        %1481 = vmatmul.mubr.bf16.gmra.mxu0 %v1429
        %v1482 = vpop.f32.mrf.mxu0
        %v1483 = vadd.f32 0.0, %v1482
        %v1484 = vpop.f32.mrf.mxu0
        %v1485 = vpop.f32.mrf.mxu0
        %v1486 = vadd.f32 0.0, %v1485
        %v1487 = vpop.f32.mrf.mxu0
        %1488 = vmatprep.mubr.bf16.mxu0 %v1433
        %1489 = vmatmul.mubr.bf16.gmra.mxu0 %v1432
        %v1490 = vpop.f32.mrf.mxu0
        %v1491 = vadd.f32 0.0, %v1490
        %v1492 = vpop.f32.mrf.mxu0
        %v1493 = vpop.f32.mrf.mxu0
        %v1494 = vadd.f32 0.0, %v1493
        %v1495 = vpop.f32.mrf.mxu0
        %1496 = vdwg.mxu0
        %1497 = vmatprep.subr.bf16.mxu0 0
        %1498 = vmatpush1.bf16.msra.mxu0 0
        %1499 = vmatprep.subr.bf16.mxu0 0
        %1500 = vmatpush1.bf16.msra.mxu0 %v1446
        %1501 = vmatprep.subr.bf16.mxu0 0
        %1502 = vmatpush1.bf16.msra.mxu0 %v1407
        %1503 = vmatprep.subr.bf16.mxu0 0
        %1504 = vmatpush1.bf16.msra.mxu0 %v1406
        %1505 = vmatprep.subr.bf16.mxu0 0
        %1506 = vmatpush1.bf16.msra.mxu0 %v1405
        %1507 = vmatprep.subr.bf16.mxu0 0
        %1508 = vmatpush1.bf16.msra.mxu0 %v1404
        %1509 = vmatprep.subr.bf16.mxu0 0
        %1510 = vmatpush1.bf16.msra.mxu0 %v1403
        %1511 = vmatprep.subr.bf16.mxu0 0
        %1512 = vmatpush1.bf16.msra.mxu0 %v1402
        %1513 = vmatprep.subr.bf16.mxu0 0
        %1514 = vmatpush2.bf16.msra.mxu0 0
        %1515 = vmatprep.subr.bf16.mxu0 0
        %1516 = vmatpush2.bf16.msra.mxu0 0
        %1517 = vmatprep.subr.bf16.mxu0 0
        %1518 = vmatpush2.bf16.msra.mxu0 0
        %1519 = vmatprep.subr.bf16.mxu0 0
        %1520 = vmatpush2.bf16.msra.mxu0 0
        %1521 = vmatprep.subr.bf16.mxu0 0
        %1522 = vmatpush2.bf16.msra.mxu0 0
        %1523 = vmatprep.subr.bf16.mxu0 0
        %1524 = vmatpush2.bf16.msra.mxu0 0
        %1525 = vmatprep.subr.bf16.mxu0 0
        %1526 = vmatpush2.bf16.msra.mxu0 0
        %1527 = vmatprep.subr.bf16.mxu0 0
        %1528 = vmatpush2.bf16.msra.mxu0 0
        %1529 = vmatprep.mubr.bf16.mxu0 0
        %1530 = vmatmul.mubr.bf16.gmra.mxu0 %v1440
        %v1531 = vpop.f32.mrf.mxu0
        %v1532 = vadd.f32 %v1483, %v1531
        %v1533 = vpop.f32.mrf.mxu0
        %v1534 = vpop.f32.mrf.mxu0
        %v1535 = vadd.f32 %v1486, %v1534
        %v1536 = vpop.f32.mrf.mxu0
        %1537 = vmatprep.mubr.bf16.mxu0 0
        %1538 = vmatmul.mubr.bf16.gmra.mxu0 %v1443
        %v1539 = vpop.f32.mrf.mxu0
        %v1540 = vadd.f32 %v1491, %v1539
        %v1541 = vpop.f32.mrf.mxu0
        %v1542 = vpop.f32.mrf.mxu0
        %v1543 = vadd.f32 %v1494, %v1542
        %v1544 = vpop.f32.mrf.mxu0
        %1545 = vdwg.mxu0
        %v1546 = vld [vmem:[%s2] sm:$0xff]
        %v1547 = vld [vmem:[%s2 + $0x8] sm:$0xff]
        %v1548 = vld [vmem:[%s2 + $0x10] sm:$0xff]
        %v1549 = vld [vmem:[%s2 + $0x18] sm:$0xff]
        %1551 = vset.pattern.permute.xlu0 0
        %1552 = vperm.xlu0 %1551, %v1546
        %v1553 = vpop.permute.xlu0 %1552
        %1556 = vset.pattern.permute.xlu0 0
        %1557 = vperm.xlu0 %1556, %v1547
        %v1558 = vpop.permute.xlu0 %1557
        %1561 = vset.pattern.permute.xlu0 0
        %1562 = vperm.xlu0 %1561, %v1548
        %v1563 = vpop.permute.xlu0 %1562
        %1566 = vset.pattern.permute.xlu0 0
        %1567 = vperm.xlu0 %1566, %v1549
        %v1568 = vpop.permute.xlu0 %1567
        %v1570 = vmul.f32 %v1532, %v1553
        %v1571 = vmul.f32 %v1535, %v1558
        %v1572 = vmul.f32 %v1540, %v1563
        %v1573 = vmul.f32 %v1543, %v1568
        %v1574 = vld [vmem:[%s3] sm:$0xff]
        %v1575 = vld [vmem:[%s3 + $0x8] sm:$0xff]
        %v1576 = vld [vmem:[%s3 + $0x10] sm:$0xff]
        %v1577 = vld [vmem:[%s3 + $0x18] sm:$0xff]
        %1579 = vset.pattern.permute.xlu0 0
        %1580 = vperm.xlu0 %1579, %v1574
        %v1581 = vpop.permute.xlu0 %1580
        %1584 = vset.pattern.permute.xlu0 0
        %1585 = vperm.xlu0 %1584, %v1575
        %v1586 = vpop.permute.xlu0 %1585
        %1589 = vset.pattern.permute.xlu0 0
        %1590 = vperm.xlu0 %1589, %v1576
        %v1591 = vpop.permute.xlu0 %1590
        %1594 = vset.pattern.permute.xlu0 0
        %1595 = vperm.xlu0 %1594, %v1577
        %v1596 = vpop.permute.xlu0 %1595
        %v1598 = vadd.f32 %v1570, %v1581
        %v1599 = vadd.f32 %v1571, %v1586
        %v1600 = vadd.f32 %v1572, %v1591
        %v1601 = vadd.f32 %v1573, %v1596
        %v1602 = vmax.f32 %v1598, 0.0
        %v1603 = vmax.f32 %v1599, 0.0
        %v1604 = vmax.f32 %v1600, 0.0
        %v1605 = vmax.f32 %v1601, 0.0
        %v1610 = vcombine.high %v1602, %v1602
        %v1612 = vunpack.c.l.s4 1966171168
        %v1613 = vunpack.c.0.s8 %v1612
        %v1614 = vlaneseq
        %v1615 = vshrl.u32 %v1614, 7
        %v1616 = vsub.s32 %v1613, %v1615
        %v1617 = vrot.slane %v1602, %v1616
        %v1619 = vunpack.c.l.s4 1966171168
        %v1620 = vunpack.c.0.s8 %v1619
        %v1621 = vlaneseq
        %v1622 = vshrl.u32 %v1621, 7
        %v1623 = vsub.s32 %v1620, %v1622
        %v1624 = vrot.slane %v1610, %v1623
        %v1625 = vcombine.high %v1617, %v1617
        %v1626 = vcombine.high %v1624, %v1624
        %v1628 = vunpack.c.l.s4 1966171168
        %v1629 = vunpack.c.0.s8 %v1628
        %v1630 = vlaneseq
        %v1631 = vshrl.u32 %v1630, 7
        %v1632 = vsub.s32 %v1629, %v1631
        %v1633 = vrot.slane %v1617, %v1632
        %v1635 = vunpack.c.l.s4 1966171168
        %v1636 = vunpack.c.0.s8 %v1635
        %v1637 = vlaneseq
        %v1638 = vshrl.u32 %v1637, 7
        %v1639 = vsub.s32 %v1636, %v1638
        %v1640 = vrot.slane %v1624, %v1639
        %v1642 = vunpack.c.l.s4 1966171168
        %v1643 = vunpack.c.0.s8 %v1642
        %v1644 = vlaneseq
        %v1645 = vshrl.u32 %v1644, 7
        %v1646 = vsub.s32 %v1643, %v1645
        %v1647 = vrot.slane %v1625, %v1646
        %v1649 = vunpack.c.l.s4 1966171168
        %v1650 = vunpack.c.0.s8 %v1649
        %v1651 = vlaneseq
        %v1652 = vshrl.u32 %v1651, 7
        %v1653 = vsub.s32 %v1650, %v1652
        %v1654 = vrot.slane %v1626, %v1653
        %v1655 = vcombine.high %v1633, %v1633
        %v1656 = vcombine.high %v1640, %v1640
        %v1657 = vcombine.high %v1647, %v1647
        %v1658 = vcombine.high %v1654, %v1654
        %v1659 = vcombine.high %v1603, %v1603
        %v1661 = vunpack.c.l.s4 1966171168
        %v1662 = vunpack.c.0.s8 %v1661
        %v1663 = vlaneseq
        %v1664 = vshrl.u32 %v1663, 7
        %v1665 = vsub.s32 %v1662, %v1664
        %v1666 = vrot.slane %v1603, %v1665
        %v1668 = vunpack.c.l.s4 1966171168
        %v1669 = vunpack.c.0.s8 %v1668
        %v1670 = vlaneseq
        %v1671 = vshrl.u32 %v1670, 7
        %v1672 = vsub.s32 %v1669, %v1671
        %v1673 = vrot.slane %v1659, %v1672
        %v1674 = vcombine.high %v1666, %v1666
        %v1675 = vcombine.high %v1673, %v1673
        %v1677 = vunpack.c.l.s4 1966171168
        %v1678 = vunpack.c.0.s8 %v1677
        %v1679 = vlaneseq
        %v1680 = vshrl.u32 %v1679, 7
        %v1681 = vsub.s32 %v1678, %v1680
        %v1682 = vrot.slane %v1666, %v1681
        %v1684 = vunpack.c.l.s4 1966171168
        %v1685 = vunpack.c.0.s8 %v1684
        %v1686 = vlaneseq
        %v1687 = vshrl.u32 %v1686, 7
        %v1688 = vsub.s32 %v1685, %v1687
        %v1689 = vrot.slane %v1673, %v1688
        %v1691 = vunpack.c.l.s4 1966171168
        %v1692 = vunpack.c.0.s8 %v1691
        %v1693 = vlaneseq
        %v1694 = vshrl.u32 %v1693, 7
        %v1695 = vsub.s32 %v1692, %v1694
        %v1696 = vrot.slane %v1674, %v1695
        %v1698 = vunpack.c.l.s4 1966171168
        %v1699 = vunpack.c.0.s8 %v1698
        %v1700 = vlaneseq
        %v1701 = vshrl.u32 %v1700, 7
        %v1702 = vsub.s32 %v1699, %v1701
        %v1703 = vrot.slane %v1675, %v1702
        %v1704 = vcombine.high %v1682, %v1682
        %v1705 = vcombine.high %v1689, %v1689
        %v1706 = vcombine.high %v1696, %v1696
        %v1707 = vcombine.high %v1703, %v1703
        %v1708 = vcombine.high %v1604, %v1604
        %v1710 = vunpack.c.l.s4 1966171168
        %v1711 = vunpack.c.0.s8 %v1710
        %v1712 = vlaneseq
        %v1713 = vshrl.u32 %v1712, 7
        %v1714 = vsub.s32 %v1711, %v1713
        %v1715 = vrot.slane %v1604, %v1714
        %v1717 = vunpack.c.l.s4 1966171168
        %v1718 = vunpack.c.0.s8 %v1717
        %v1719 = vlaneseq
        %v1720 = vshrl.u32 %v1719, 7
        %v1721 = vsub.s32 %v1718, %v1720
        %v1722 = vrot.slane %v1708, %v1721
        %v1723 = vcombine.high %v1715, %v1715
        %v1724 = vcombine.high %v1722, %v1722
        %v1726 = vunpack.c.l.s4 1966171168
        %v1727 = vunpack.c.0.s8 %v1726
        %v1728 = vlaneseq
        %v1729 = vshrl.u32 %v1728, 7
        %v1730 = vsub.s32 %v1727, %v1729
        %v1731 = vrot.slane %v1715, %v1730
        %v1733 = vunpack.c.l.s4 1966171168
        %v1734 = vunpack.c.0.s8 %v1733
        %v1735 = vlaneseq
        %v1736 = vshrl.u32 %v1735, 7
        %v1737 = vsub.s32 %v1734, %v1736
        %v1738 = vrot.slane %v1722, %v1737
        %v1740 = vunpack.c.l.s4 1966171168
        %v1741 = vunpack.c.0.s8 %v1740
        %v1742 = vlaneseq
        %v1743 = vshrl.u32 %v1742, 7
        %v1744 = vsub.s32 %v1741, %v1743
        %v1745 = vrot.slane %v1723, %v1744
        %v1747 = vunpack.c.l.s4 1966171168
        %v1748 = vunpack.c.0.s8 %v1747
        %v1749 = vlaneseq
        %v1750 = vshrl.u32 %v1749, 7
        %v1751 = vsub.s32 %v1748, %v1750
        %v1752 = vrot.slane %v1724, %v1751
        %v1753 = vcombine.high %v1731, %v1731
        %v1754 = vcombine.high %v1738, %v1738
        %v1755 = vcombine.high %v1745, %v1745
        %v1756 = vcombine.high %v1752, %v1752
        %v1757 = vcombine.high %v1605, %v1605
        %v1759 = vunpack.c.l.s4 1966171168
        %v1760 = vunpack.c.0.s8 %v1759
        %v1761 = vlaneseq
        %v1762 = vshrl.u32 %v1761, 7
        %v1763 = vsub.s32 %v1760, %v1762
        %v1764 = vrot.slane %v1605, %v1763
        %v1766 = vunpack.c.l.s4 1966171168
        %v1767 = vunpack.c.0.s8 %v1766
        %v1768 = vlaneseq
        %v1769 = vshrl.u32 %v1768, 7
        %v1770 = vsub.s32 %v1767, %v1769
        %v1771 = vrot.slane %v1757, %v1770
        %v1772 = vcombine.high %v1764, %v1764
        %v1773 = vcombine.high %v1771, %v1771
        %v1775 = vunpack.c.l.s4 1966171168
        %v1776 = vunpack.c.0.s8 %v1775
        %v1777 = vlaneseq
        %v1778 = vshrl.u32 %v1777, 7
        %v1779 = vsub.s32 %v1776, %v1778
        %v1780 = vrot.slane %v1764, %v1779
        %v1782 = vunpack.c.l.s4 1966171168
        %v1783 = vunpack.c.0.s8 %v1782
        %v1784 = vlaneseq
        %v1785 = vshrl.u32 %v1784, 7
        %v1786 = vsub.s32 %v1783, %v1785
        %v1787 = vrot.slane %v1771, %v1786
        %v1789 = vunpack.c.l.s4 1966171168
        %v1790 = vunpack.c.0.s8 %v1789
        %v1791 = vlaneseq
        %v1792 = vshrl.u32 %v1791, 7
        %v1793 = vsub.s32 %v1790, %v1792
        %v1794 = vrot.slane %v1772, %v1793
        %v1796 = vunpack.c.l.s4 1966171168
        %v1797 = vunpack.c.0.s8 %v1796
        %v1798 = vlaneseq
        %v1799 = vshrl.u32 %v1798, 7
        %v1800 = vsub.s32 %v1797, %v1799
        %v1801 = vrot.slane %v1773, %v1800
        %v1802 = vcombine.high %v1780, %v1780
        %v1803 = vcombine.high %v1787, %v1787
        %v1804 = vcombine.high %v1794, %v1794
        %v1805 = vcombine.high %v1801, %v1801
        %1838 = vst.msk [vmem:[%s225 + $0x1] sm:$0x1] %vm1345, %v1633
        %1839 = vst.msk [vmem:[%s225 + $0x9] sm:$0x1] %vm1345, %v1647
        %1840 = vst.msk [vmem:[%s225 + $0x11] sm:$0x1] %vm1345, %v1655
        %1841 = vst.msk [vmem:[%s225 + $0x19] sm:$0x1] %vm1345, %v1657
        %1842 = vst.msk [vmem:[%s225 + $0x21] sm:$0x1] %vm1345, %v1640
        %1843 = vst.msk [vmem:[%s225 + $0x29] sm:$0x1] %vm1345, %v1654
        %1844 = vst.msk [vmem:[%s225 + $0x31] sm:$0x1] %vm1345, %v1656
        %1845 = vst.msk [vmem:[%s225 + $0x39] sm:$0x1] %vm1345, %v1658
        %1846 = vst.msk [vmem:[%s225 + $0x41] sm:$0x1] %vm1345, %v1682
        %1847 = vst.msk [vmem:[%s225 + $0x49] sm:$0x1] %vm1345, %v1696
        %1848 = vst.msk [vmem:[%s225 + $0x51] sm:$0x1] %vm1345, %v1704
        %1849 = vst.msk [vmem:[%s225 + $0x59] sm:$0x1] %vm1345, %v1706
        %1850 = vst.msk [vmem:[%s225 + $0x61] sm:$0x1] %vm1345, %v1689
        %1851 = vst.msk [vmem:[%s225 + $0x69] sm:$0x1] %vm1345, %v1703
        %1852 = vst.msk [vmem:[%s225 + $0x71] sm:$0x1] %vm1345, %v1705
        %1853 = vst.msk [vmem:[%s225 + $0x79] sm:$0x1] %vm1345, %v1707
        %1854 = vst.msk [vmem:[%s225 + $0x81] sm:$0x1] %vm1345, %v1731
        %1855 = vst.msk [vmem:[%s225 + $0x89] sm:$0x1] %vm1345, %v1745
        %1856 = vst.msk [vmem:[%s225 + $0x91] sm:$0x1] %vm1345, %v1753
        %1857 = vst.msk [vmem:[%s225 + $0x99] sm:$0x1] %vm1345, %v1755
        %1858 = vst.msk [vmem:[%s225 + $0xa1] sm:$0x1] %vm1345, %v1738
        %1859 = vst.msk [vmem:[%s225 + $0xa9] sm:$0x1] %vm1345, %v1752
        %1860 = vst.msk [vmem:[%s225 + $0xb1] sm:$0x1] %vm1345, %v1754
        %1861 = vst.msk [vmem:[%s225 + $0xb9] sm:$0x1] %vm1345, %v1756
        %1862 = vst.msk [vmem:[%s225 + $0xc1] sm:$0x1] %vm1345, %v1780
        %1863 = vst.msk [vmem:[%s225 + $0xc9] sm:$0x1] %vm1345, %v1794
        %1864 = vst.msk [vmem:[%s225 + $0xd1] sm:$0x1] %vm1345, %v1802
        %1865 = vst.msk [vmem:[%s225 + $0xd9] sm:$0x1] %vm1345, %v1804
        %1866 = vst.msk [vmem:[%s225 + $0xe1] sm:$0x1] %vm1345, %v1787
        %1867 = vst.msk [vmem:[%s225 + $0xe9] sm:$0x1] %vm1345, %v1801
        %1868 = vst.msk [vmem:[%s225 + $0xf1] sm:$0x1] %vm1345, %v1803
        %1869 = vst.msk [vmem:[%s225 + $0xf9] sm:$0x1] %vm1345, %v1805
        %v1870 = vld [vmem:[%s1] sm:$0xff]
        %v1871 = vld [vmem:[%s1 + $0x8] sm:$0xf]
        %v1872 = vld [vmem:[%s1 + $0xc] sm:$0xff]
        %v1873 = vld [vmem:[%s1 + $0x14] sm:$0xf]
        %v1874 = vld [vmem:[%s1 + $0x18] sm:$0xff]
        %v1875 = vld [vmem:[%s1 + $0x20] sm:$0xf]
        %v1876 = vld [vmem:[%s1 + $0x24] sm:$0xff]
        %v1877 = vld [vmem:[%s1 + $0x2c] sm:$0xf]
        %v1878 = vpack.c.bf16 %v649, %v610
        %v1879 = vpack.c.bf16 %v651, %v650
        %v1880 = vpack.c.bf16 %v653, %v652
        %v1881 = vpack.c.bf16 %v693, %v692
        %v1882 = vpack.c.bf16 %v695, %v694
        %v1883 = vpack.c.bf16 %v696, %v696
        %v1892 = vunpack.c.l.b16 %v1870
        %v1893 = vunpack.c.h.b16 %v1870
        %v1894 = vunpack.c.l.b16 %v1871
        %v1895 = vunpack.c.l.b16 %v1872
        %v1896 = vunpack.c.h.b16 %v1872
        %v1897 = vunpack.c.l.b16 %v1873
        %v1898 = vunpack.c.l.b16 %v1874
        %v1899 = vunpack.c.h.b16 %v1874
        %v1900 = vunpack.c.l.b16 %v1875
        %v1901 = vunpack.c.l.b16 %v1876
        %v1902 = vunpack.c.h.b16 %v1876
        %v1903 = vunpack.c.l.b16 %v1877
        %v1904 = vpack.c.b16 %v1895, %v1892
        %v1905 = vpack.c.b16 %v1896, %v1893
        %v1906 = vpack.c.b16 %v1897, %v1894
        %v1907 = vpack.c.b16 %v1901, %v1898
        %v1908 = vpack.c.b16 %v1902, %v1899
        %v1909 = vpack.c.b16 %v1903, %v1900
        %v1915 = vsel %vm945, %v1906, 0
        %v1918 = vsel %vm945, %v1909, 0
        %v1921 = vsel %vm285, %v1883, 0
        %1923 = vmatprep.subr.bf16.mxu0 0
        %1924 = vmatpush1.bf16.msra.mxu0 %v904
        %1925 = vmatprep.subr.bf16.mxu0 0
        %1926 = vmatpush1.bf16.msra.mxu0 %v903
        %1927 = vmatprep.subr.bf16.mxu0 0
        %1928 = vmatpush1.bf16.msra.mxu0 %v902
        %1929 = vmatprep.subr.bf16.mxu0 0
        %1930 = vmatpush1.bf16.msra.mxu0 %v901
        %1931 = vmatprep.subr.bf16.mxu0 0
        %1932 = vmatpush1.bf16.msra.mxu0 %v900
        %1933 = vmatprep.subr.bf16.mxu0 0
        %1934 = vmatpush1.bf16.msra.mxu0 %v899
        %1935 = vmatprep.subr.bf16.mxu0 0
        %1936 = vmatpush1.bf16.msra.mxu0 %v898
        %1937 = vmatprep.subr.bf16.mxu0 0
        %1938 = vmatpush1.bf16.msra.mxu0 %v897
        %1939 = vmatprep.subr.bf16.mxu0 0
        %1940 = vmatpush2.bf16.msra.mxu0 %v912
        %1941 = vmatprep.subr.bf16.mxu0 0
        %1942 = vmatpush2.bf16.msra.mxu0 %v911
        %1943 = vmatprep.subr.bf16.mxu0 0
        %1944 = vmatpush2.bf16.msra.mxu0 %v910
        %1945 = vmatprep.subr.bf16.mxu0 0
        %1946 = vmatpush2.bf16.msra.mxu0 %v909
        %1947 = vmatprep.subr.bf16.mxu0 0
        %1948 = vmatpush2.bf16.msra.mxu0 %v908
        %1949 = vmatprep.subr.bf16.mxu0 0
        %1950 = vmatpush2.bf16.msra.mxu0 %v907
        %1951 = vmatprep.subr.bf16.mxu0 0
        %1952 = vmatpush2.bf16.msra.mxu0 %v906
        %1953 = vmatprep.subr.bf16.mxu0 0
        %1954 = vmatpush2.bf16.msra.mxu0 %v905
        %1955 = vmatprep.mubr.bf16.mxu0 %v1905
        %1956 = vmatmul.mubr.bf16.gmra.mxu0 %v1904
        %v1957 = vpop.f32.mrf.mxu0
        %v1958 = vadd.f32 0.0, %v1957
        %v1959 = vpop.f32.mrf.mxu0
        %v1960 = vpop.f32.mrf.mxu0
        %v1961 = vadd.f32 0.0, %v1960
        %v1962 = vpop.f32.mrf.mxu0
        %1963 = vmatprep.mubr.bf16.mxu0 %v1908
        %1964 = vmatmul.mubr.bf16.gmra.mxu0 %v1907
        %v1965 = vpop.f32.mrf.mxu0
        %v1966 = vadd.f32 0.0, %v1965
        %v1967 = vpop.f32.mrf.mxu0
        %v1968 = vpop.f32.mrf.mxu0
        %v1969 = vadd.f32 0.0, %v1968
        %v1970 = vpop.f32.mrf.mxu0
        %1971 = vdwg.mxu0
        %1972 = vmatprep.subr.bf16.mxu0 0
        %1973 = vmatpush1.bf16.msra.mxu0 0
        %1974 = vmatprep.subr.bf16.mxu0 0
        %1975 = vmatpush1.bf16.msra.mxu0 %v1921
        %1976 = vmatprep.subr.bf16.mxu0 0
        %1977 = vmatpush1.bf16.msra.mxu0 %v1882
        %1978 = vmatprep.subr.bf16.mxu0 0
        %1979 = vmatpush1.bf16.msra.mxu0 %v1881
        %1980 = vmatprep.subr.bf16.mxu0 0
        %1981 = vmatpush1.bf16.msra.mxu0 %v1880
        %1982 = vmatprep.subr.bf16.mxu0 0
        %1983 = vmatpush1.bf16.msra.mxu0 %v1879
        %1984 = vmatprep.subr.bf16.mxu0 0
        %1985 = vmatpush1.bf16.msra.mxu0 %v1878
        %1986 = vmatprep.subr.bf16.mxu0 0
        %1987 = vmatpush1.bf16.msra.mxu0 %v913
        %1988 = vmatprep.subr.bf16.mxu0 0
        %1989 = vmatpush2.bf16.msra.mxu0 0
        %1990 = vmatprep.subr.bf16.mxu0 0
        %1991 = vmatpush2.bf16.msra.mxu0 0
        %1992 = vmatprep.subr.bf16.mxu0 0
        %1993 = vmatpush2.bf16.msra.mxu0 0
        %1994 = vmatprep.subr.bf16.mxu0 0
        %1995 = vmatpush2.bf16.msra.mxu0 0
        %1996 = vmatprep.subr.bf16.mxu0 0
        %1997 = vmatpush2.bf16.msra.mxu0 0
        %1998 = vmatprep.subr.bf16.mxu0 0
        %1999 = vmatpush2.bf16.msra.mxu0 0
        %2000 = vmatprep.subr.bf16.mxu0 0
        %2001 = vmatpush2.bf16.msra.mxu0 0
        %2002 = vmatprep.subr.bf16.mxu0 0
        %2003 = vmatpush2.bf16.msra.mxu0 0
        %2004 = vmatprep.mubr.bf16.mxu0 0
        %2005 = vmatmul.mubr.bf16.gmra.mxu0 %v1915
        %v2006 = vpop.f32.mrf.mxu0
        %v2007 = vadd.f32 %v1958, %v2006
        %v2008 = vpop.f32.mrf.mxu0
        %v2009 = vpop.f32.mrf.mxu0
        %v2010 = vadd.f32 %v1961, %v2009
        %v2011 = vpop.f32.mrf.mxu0
        %2012 = vmatprep.mubr.bf16.mxu0 0
        %2013 = vmatmul.mubr.bf16.gmra.mxu0 %v1918
        %v2014 = vpop.f32.mrf.mxu0
        %v2015 = vadd.f32 %v1966, %v2014
        %v2016 = vpop.f32.mrf.mxu0
        %v2017 = vpop.f32.mrf.mxu0
        %v2018 = vadd.f32 %v1969, %v2017
        %v2019 = vpop.f32.mrf.mxu0
        %2020 = vdwg.mxu0
        %v2021 = vld [vmem:[%s2] sm:$0xff]
        %v2022 = vld [vmem:[%s2 + $0x8] sm:$0xff]
        %v2023 = vld [vmem:[%s2 + $0x10] sm:$0xff]
        %v2024 = vld [vmem:[%s2 + $0x18] sm:$0xff]
        %2026 = vset.pattern.permute.xlu0 0
        %2027 = vperm.xlu0 %2026, %v2021
        %v2028 = vpop.permute.xlu0 %2027
        %2031 = vset.pattern.permute.xlu0 0
        %2032 = vperm.xlu0 %2031, %v2022
        %v2033 = vpop.permute.xlu0 %2032
        %2036 = vset.pattern.permute.xlu0 0
        %2037 = vperm.xlu0 %2036, %v2023
        %v2038 = vpop.permute.xlu0 %2037
        %2041 = vset.pattern.permute.xlu0 0
        %2042 = vperm.xlu0 %2041, %v2024
        %v2043 = vpop.permute.xlu0 %2042
        %v2045 = vmul.f32 %v2007, %v2028
        %v2046 = vmul.f32 %v2010, %v2033
        %v2047 = vmul.f32 %v2015, %v2038
        %v2048 = vmul.f32 %v2018, %v2043
        %v2049 = vld [vmem:[%s3] sm:$0xff]
        %v2050 = vld [vmem:[%s3 + $0x8] sm:$0xff]
        %v2051 = vld [vmem:[%s3 + $0x10] sm:$0xff]
        %v2052 = vld [vmem:[%s3 + $0x18] sm:$0xff]
        %2054 = vset.pattern.permute.xlu0 0
        %2055 = vperm.xlu0 %2054, %v2049
        %v2056 = vpop.permute.xlu0 %2055
        %2059 = vset.pattern.permute.xlu0 0
        %2060 = vperm.xlu0 %2059, %v2050
        %v2061 = vpop.permute.xlu0 %2060
        %2064 = vset.pattern.permute.xlu0 0
        %2065 = vperm.xlu0 %2064, %v2051
        %v2066 = vpop.permute.xlu0 %2065
        %2069 = vset.pattern.permute.xlu0 0
        %2070 = vperm.xlu0 %2069, %v2052
        %v2071 = vpop.permute.xlu0 %2070
        %v2073 = vadd.f32 %v2045, %v2056
        %v2074 = vadd.f32 %v2046, %v2061
        %v2075 = vadd.f32 %v2047, %v2066
        %v2076 = vadd.f32 %v2048, %v2071
        %v2077 = vmax.f32 %v2073, 0.0
        %v2078 = vmax.f32 %v2074, 0.0
        %v2079 = vmax.f32 %v2075, 0.0
        %v2080 = vmax.f32 %v2076, 0.0
        %v2085 = vcombine.high %v2077, %v2077
        %v2087 = vunpack.c.l.s4 1966171168
        %v2088 = vunpack.c.0.s8 %v2087
        %v2089 = vlaneseq
        %v2090 = vshrl.u32 %v2089, 7
        %v2091 = vsub.s32 %v2088, %v2090
        %v2092 = vrot.slane %v2077, %v2091
        %v2094 = vunpack.c.l.s4 1966171168
        %v2095 = vunpack.c.0.s8 %v2094
        %v2096 = vlaneseq
        %v2097 = vshrl.u32 %v2096, 7
        %v2098 = vsub.s32 %v2095, %v2097
        %v2099 = vrot.slane %v2085, %v2098
        %v2100 = vcombine.high %v2092, %v2092
        %v2101 = vcombine.high %v2099, %v2099
        %v2103 = vunpack.c.l.s4 1966171168
        %v2104 = vunpack.c.0.s8 %v2103
        %v2105 = vlaneseq
        %v2106 = vshrl.u32 %v2105, 7
        %v2107 = vsub.s32 %v2104, %v2106
        %v2108 = vrot.slane %v2092, %v2107
        %v2110 = vunpack.c.l.s4 1966171168
        %v2111 = vunpack.c.0.s8 %v2110
        %v2112 = vlaneseq
        %v2113 = vshrl.u32 %v2112, 7
        %v2114 = vsub.s32 %v2111, %v2113
        %v2115 = vrot.slane %v2099, %v2114
        %v2117 = vunpack.c.l.s4 1966171168
        %v2118 = vunpack.c.0.s8 %v2117
        %v2119 = vlaneseq
        %v2120 = vshrl.u32 %v2119, 7
        %v2121 = vsub.s32 %v2118, %v2120
        %v2122 = vrot.slane %v2100, %v2121
        %v2124 = vunpack.c.l.s4 1966171168
        %v2125 = vunpack.c.0.s8 %v2124
        %v2126 = vlaneseq
        %v2127 = vshrl.u32 %v2126, 7
        %v2128 = vsub.s32 %v2125, %v2127
        %v2129 = vrot.slane %v2101, %v2128
        %v2130 = vcombine.high %v2108, %v2108
        %v2131 = vcombine.high %v2115, %v2115
        %v2132 = vcombine.high %v2122, %v2122
        %v2133 = vcombine.high %v2129, %v2129
        %v2134 = vcombine.high %v2078, %v2078
        %v2136 = vunpack.c.l.s4 1966171168
        %v2137 = vunpack.c.0.s8 %v2136
        %v2138 = vlaneseq
        %v2139 = vshrl.u32 %v2138, 7
        %v2140 = vsub.s32 %v2137, %v2139
        %v2141 = vrot.slane %v2078, %v2140
        %v2143 = vunpack.c.l.s4 1966171168
        %v2144 = vunpack.c.0.s8 %v2143
        %v2145 = vlaneseq
        %v2146 = vshrl.u32 %v2145, 7
        %v2147 = vsub.s32 %v2144, %v2146
        %v2148 = vrot.slane %v2134, %v2147
        %v2149 = vcombine.high %v2141, %v2141
        %v2150 = vcombine.high %v2148, %v2148
        %v2152 = vunpack.c.l.s4 1966171168
        %v2153 = vunpack.c.0.s8 %v2152
        %v2154 = vlaneseq
        %v2155 = vshrl.u32 %v2154, 7
        %v2156 = vsub.s32 %v2153, %v2155
        %v2157 = vrot.slane %v2141, %v2156
        %v2159 = vunpack.c.l.s4 1966171168
        %v2160 = vunpack.c.0.s8 %v2159
        %v2161 = vlaneseq
        %v2162 = vshrl.u32 %v2161, 7
        %v2163 = vsub.s32 %v2160, %v2162
        %v2164 = vrot.slane %v2148, %v2163
        %v2166 = vunpack.c.l.s4 1966171168
        %v2167 = vunpack.c.0.s8 %v2166
        %v2168 = vlaneseq
        %v2169 = vshrl.u32 %v2168, 7
        %v2170 = vsub.s32 %v2167, %v2169
        %v2171 = vrot.slane %v2149, %v2170
        %v2173 = vunpack.c.l.s4 1966171168
        %v2174 = vunpack.c.0.s8 %v2173
        %v2175 = vlaneseq
        %v2176 = vshrl.u32 %v2175, 7
        %v2177 = vsub.s32 %v2174, %v2176
        %v2178 = vrot.slane %v2150, %v2177
        %v2179 = vcombine.high %v2157, %v2157
        %v2180 = vcombine.high %v2164, %v2164
        %v2181 = vcombine.high %v2171, %v2171
        %v2182 = vcombine.high %v2178, %v2178
        %v2183 = vcombine.high %v2079, %v2079
        %v2185 = vunpack.c.l.s4 1966171168
        %v2186 = vunpack.c.0.s8 %v2185
        %v2187 = vlaneseq
        %v2188 = vshrl.u32 %v2187, 7
        %v2189 = vsub.s32 %v2186, %v2188
        %v2190 = vrot.slane %v2079, %v2189
        %v2192 = vunpack.c.l.s4 1966171168
        %v2193 = vunpack.c.0.s8 %v2192
        %v2194 = vlaneseq
        %v2195 = vshrl.u32 %v2194, 7
        %v2196 = vsub.s32 %v2193, %v2195
        %v2197 = vrot.slane %v2183, %v2196
        %v2198 = vcombine.high %v2190, %v2190
        %v2199 = vcombine.high %v2197, %v2197
        %v2201 = vunpack.c.l.s4 1966171168
        %v2202 = vunpack.c.0.s8 %v2201
        %v2203 = vlaneseq
        %v2204 = vshrl.u32 %v2203, 7
        %v2205 = vsub.s32 %v2202, %v2204
        %v2206 = vrot.slane %v2190, %v2205
        %v2208 = vunpack.c.l.s4 1966171168
        %v2209 = vunpack.c.0.s8 %v2208
        %v2210 = vlaneseq
        %v2211 = vshrl.u32 %v2210, 7
        %v2212 = vsub.s32 %v2209, %v2211
        %v2213 = vrot.slane %v2197, %v2212
        %v2215 = vunpack.c.l.s4 1966171168
        %v2216 = vunpack.c.0.s8 %v2215
        %v2217 = vlaneseq
        %v2218 = vshrl.u32 %v2217, 7
        %v2219 = vsub.s32 %v2216, %v2218
        %v2220 = vrot.slane %v2198, %v2219
        %v2222 = vunpack.c.l.s4 1966171168
        %v2223 = vunpack.c.0.s8 %v2222
        %v2224 = vlaneseq
        %v2225 = vshrl.u32 %v2224, 7
        %v2226 = vsub.s32 %v2223, %v2225
        %v2227 = vrot.slane %v2199, %v2226
        %v2228 = vcombine.high %v2206, %v2206
        %v2229 = vcombine.high %v2213, %v2213
        %v2230 = vcombine.high %v2220, %v2220
        %v2231 = vcombine.high %v2227, %v2227
        %v2232 = vcombine.high %v2080, %v2080
        %v2234 = vunpack.c.l.s4 1966171168
        %v2235 = vunpack.c.0.s8 %v2234
        %v2236 = vlaneseq
        %v2237 = vshrl.u32 %v2236, 7
        %v2238 = vsub.s32 %v2235, %v2237
        %v2239 = vrot.slane %v2080, %v2238
        %v2241 = vunpack.c.l.s4 1966171168
        %v2242 = vunpack.c.0.s8 %v2241
        %v2243 = vlaneseq
        %v2244 = vshrl.u32 %v2243, 7
        %v2245 = vsub.s32 %v2242, %v2244
        %v2246 = vrot.slane %v2232, %v2245
        %v2247 = vcombine.high %v2239, %v2239
        %v2248 = vcombine.high %v2246, %v2246
        %v2250 = vunpack.c.l.s4 1966171168
        %v2251 = vunpack.c.0.s8 %v2250
        %v2252 = vlaneseq
        %v2253 = vshrl.u32 %v2252, 7
        %v2254 = vsub.s32 %v2251, %v2253
        %v2255 = vrot.slane %v2239, %v2254
        %v2257 = vunpack.c.l.s4 1966171168
        %v2258 = vunpack.c.0.s8 %v2257
        %v2259 = vlaneseq
        %v2260 = vshrl.u32 %v2259, 7
        %v2261 = vsub.s32 %v2258, %v2260
        %v2262 = vrot.slane %v2246, %v2261
        %v2264 = vunpack.c.l.s4 1966171168
        %v2265 = vunpack.c.0.s8 %v2264
        %v2266 = vlaneseq
        %v2267 = vshrl.u32 %v2266, 7
        %v2268 = vsub.s32 %v2265, %v2267
        %v2269 = vrot.slane %v2247, %v2268
        %v2271 = vunpack.c.l.s4 1966171168
        %v2272 = vunpack.c.0.s8 %v2271
        %v2273 = vlaneseq
        %v2274 = vshrl.u32 %v2273, 7
        %v2275 = vsub.s32 %v2272, %v2274
        %v2276 = vrot.slane %v2248, %v2275
        %v2277 = vcombine.high %v2255, %v2255
        %v2278 = vcombine.high %v2262, %v2262
        %v2279 = vcombine.high %v2269, %v2269
        %v2280 = vcombine.high %v2276, %v2276
        %2313 = vst.msk [vmem:[%s225 + $0x2] sm:$0x1] %vm1345, %v2108
        %2314 = vst.msk [vmem:[%s225 + $0xa] sm:$0x1] %vm1345, %v2122
        %2315 = vst.msk [vmem:[%s225 + $0x12] sm:$0x1] %vm1345, %v2130
        %2316 = vst.msk [vmem:[%s225 + $0x1a] sm:$0x1] %vm1345, %v2132
        %2317 = vst.msk [vmem:[%s225 + $0x22] sm:$0x1] %vm1345, %v2115
        %2318 = vst.msk [vmem:[%s225 + $0x2a] sm:$0x1] %vm1345, %v2129
        %2319 = vst.msk [vmem:[%s225 + $0x32] sm:$0x1] %vm1345, %v2131
        %2320 = vst.msk [vmem:[%s225 + $0x3a] sm:$0x1] %vm1345, %v2133
        %2321 = vst.msk [vmem:[%s225 + $0x42] sm:$0x1] %vm1345, %v2157
        %2322 = vst.msk [vmem:[%s225 + $0x4a] sm:$0x1] %vm1345, %v2171
        %2323 = vst.msk [vmem:[%s225 + $0x52] sm:$0x1] %vm1345, %v2179
        %2324 = vst.msk [vmem:[%s225 + $0x5a] sm:$0x1] %vm1345, %v2181
        %2325 = vst.msk [vmem:[%s225 + $0x62] sm:$0x1] %vm1345, %v2164
        %2326 = vst.msk [vmem:[%s225 + $0x6a] sm:$0x1] %vm1345, %v2178
        %2327 = vst.msk [vmem:[%s225 + $0x72] sm:$0x1] %vm1345, %v2180
        %2328 = vst.msk [vmem:[%s225 + $0x7a] sm:$0x1] %vm1345, %v2182
        %2329 = vst.msk [vmem:[%s225 + $0x82] sm:$0x1] %vm1345, %v2206
        %2330 = vst.msk [vmem:[%s225 + $0x8a] sm:$0x1] %vm1345, %v2220
        %2331 = vst.msk [vmem:[%s225 + $0x92] sm:$0x1] %vm1345, %v2228
        %2332 = vst.msk [vmem:[%s225 + $0x9a] sm:$0x1] %vm1345, %v2230
        %2333 = vst.msk [vmem:[%s225 + $0xa2] sm:$0x1] %vm1345, %v2213
        %2334 = vst.msk [vmem:[%s225 + $0xaa] sm:$0x1] %vm1345, %v2227
        %2335 = vst.msk [vmem:[%s225 + $0xb2] sm:$0x1] %vm1345, %v2229
        %2336 = vst.msk [vmem:[%s225 + $0xba] sm:$0x1] %vm1345, %v2231
        %2337 = vst.msk [vmem:[%s225 + $0xc2] sm:$0x1] %vm1345, %v2255
        %2338 = vst.msk [vmem:[%s225 + $0xca] sm:$0x1] %vm1345, %v2269
        %2339 = vst.msk [vmem:[%s225 + $0xd2] sm:$0x1] %vm1345, %v2277
        %2340 = vst.msk [vmem:[%s225 + $0xda] sm:$0x1] %vm1345, %v2279
        %2341 = vst.msk [vmem:[%s225 + $0xe2] sm:$0x1] %vm1345, %v2262
        %2342 = vst.msk [vmem:[%s225 + $0xea] sm:$0x1] %vm1345, %v2276
        %2343 = vst.msk [vmem:[%s225 + $0xf2] sm:$0x1] %vm1345, %v2278
        %2344 = vst.msk [vmem:[%s225 + $0xfa] sm:$0x1] %vm1345, %v2280
        %v2345 = vld [vmem:[%s1] sm:$0xff]
        %v2346 = vld [vmem:[%s1 + $0x8] sm:$0xf]
        %v2347 = vld [vmem:[%s1 + $0xc] sm:$0xff]
        %v2348 = vld [vmem:[%s1 + $0x14] sm:$0xf]
        %v2349 = vld [vmem:[%s1 + $0x18] sm:$0xff]
        %v2350 = vld [vmem:[%s1 + $0x20] sm:$0xf]
        %v2351 = vld [vmem:[%s1 + $0x24] sm:$0xff]
        %v2352 = vld [vmem:[%s1 + $0x2c] sm:$0xf]
        %v2353 = vpack.c.bf16 %v692, %v653
        %v2354 = vpack.c.bf16 %v694, %v693
        %v2355 = vpack.c.bf16 %v696, %v695
        %v2356 = vpack.c.bf16 %v736, %v735
        %v2357 = vpack.c.bf16 %v738, %v737
        %v2358 = vpack.c.bf16 %v739, %v739
        %v2367 = vunpack.c.l.b16 %v2345
        %v2368 = vunpack.c.h.b16 %v2345
        %v2369 = vunpack.c.l.b16 %v2346
        %v2370 = vunpack.c.l.b16 %v2347
        %v2371 = vunpack.c.h.b16 %v2347
        %v2372 = vunpack.c.l.b16 %v2348
        %v2373 = vunpack.c.l.b16 %v2349
        %v2374 = vunpack.c.h.b16 %v2349
        %v2375 = vunpack.c.l.b16 %v2350
        %v2376 = vunpack.c.l.b16 %v2351
        %v2377 = vunpack.c.h.b16 %v2351
        %v2378 = vunpack.c.l.b16 %v2352
        %v2379 = vpack.c.b16 %v2370, %v2367
        %v2380 = vpack.c.b16 %v2371, %v2368
        %v2381 = vpack.c.b16 %v2372, %v2369
        %v2382 = vpack.c.b16 %v2376, %v2373
        %v2383 = vpack.c.b16 %v2377, %v2374
        %v2384 = vpack.c.b16 %v2378, %v2375
        %v2390 = vsel %vm945, %v2381, 0
        %v2393 = vsel %vm945, %v2384, 0
        %v2396 = vsel %vm285, %v2358, 0
        %2398 = vmatprep.subr.bf16.mxu0 0
        %2399 = vmatpush1.bf16.msra.mxu0 %v1398
        %2400 = vmatprep.subr.bf16.mxu0 0
        %2401 = vmatpush1.bf16.msra.mxu0 %v1397
        %2402 = vmatprep.subr.bf16.mxu0 0
        %2403 = vmatpush1.bf16.msra.mxu0 %v1396
        %2404 = vmatprep.subr.bf16.mxu0 0
        %2405 = vmatpush1.bf16.msra.mxu0 %v1395
        %2406 = vmatprep.subr.bf16.mxu0 0
        %2407 = vmatpush1.bf16.msra.mxu0 %v1394
        %2408 = vmatprep.subr.bf16.mxu0 0
        %2409 = vmatpush1.bf16.msra.mxu0 %v1393
        %2410 = vmatprep.subr.bf16.mxu0 0
        %2411 = vmatpush1.bf16.msra.mxu0 %v1392
        %2412 = vmatprep.subr.bf16.mxu0 0
        %2413 = vmatpush1.bf16.msra.mxu0 %v1391
        %2414 = vmatprep.subr.bf16.mxu0 0
        %2415 = vmatpush2.bf16.msra.mxu0 %v1406
        %2416 = vmatprep.subr.bf16.mxu0 0
        %2417 = vmatpush2.bf16.msra.mxu0 %v1405
        %2418 = vmatprep.subr.bf16.mxu0 0
        %2419 = vmatpush2.bf16.msra.mxu0 %v1404
        %2420 = vmatprep.subr.bf16.mxu0 0
        %2421 = vmatpush2.bf16.msra.mxu0 %v1403
        %2422 = vmatprep.subr.bf16.mxu0 0
        %2423 = vmatpush2.bf16.msra.mxu0 %v1402
        %2424 = vmatprep.subr.bf16.mxu0 0
        %2425 = vmatpush2.bf16.msra.mxu0 %v1401
        %2426 = vmatprep.subr.bf16.mxu0 0
        %2427 = vmatpush2.bf16.msra.mxu0 %v1400
        %2428 = vmatprep.subr.bf16.mxu0 0
        %2429 = vmatpush2.bf16.msra.mxu0 %v1399
        %2430 = vmatprep.mubr.bf16.mxu0 %v2380
        %2431 = vmatmul.mubr.bf16.gmra.mxu0 %v2379
        %v2432 = vpop.f32.mrf.mxu0
        %v2433 = vadd.f32 0.0, %v2432
        %v2434 = vpop.f32.mrf.mxu0
        %v2435 = vpop.f32.mrf.mxu0
        %v2436 = vadd.f32 0.0, %v2435
        %v2437 = vpop.f32.mrf.mxu0
        %2438 = vmatprep.mubr.bf16.mxu0 %v2383
        %2439 = vmatmul.mubr.bf16.gmra.mxu0 %v2382
        %v2440 = vpop.f32.mrf.mxu0
        %v2441 = vadd.f32 0.0, %v2440
        %v2442 = vpop.f32.mrf.mxu0
        %v2443 = vpop.f32.mrf.mxu0
        %v2444 = vadd.f32 0.0, %v2443
        %v2445 = vpop.f32.mrf.mxu0
        %2446 = vdwg.mxu0
        %2447 = vmatprep.subr.bf16.mxu0 0
        %2448 = vmatpush1.bf16.msra.mxu0 0
        %2449 = vmatprep.subr.bf16.mxu0 0
        %2450 = vmatpush1.bf16.msra.mxu0 %v2396
        %2451 = vmatprep.subr.bf16.mxu0 0
        %2452 = vmatpush1.bf16.msra.mxu0 %v2357
        %2453 = vmatprep.subr.bf16.mxu0 0
        %2454 = vmatpush1.bf16.msra.mxu0 %v2356
        %2455 = vmatprep.subr.bf16.mxu0 0
        %2456 = vmatpush1.bf16.msra.mxu0 %v2355
        %2457 = vmatprep.subr.bf16.mxu0 0
        %2458 = vmatpush1.bf16.msra.mxu0 %v2354
        %2459 = vmatprep.subr.bf16.mxu0 0
        %2460 = vmatpush1.bf16.msra.mxu0 %v2353
        %2461 = vmatprep.subr.bf16.mxu0 0
        %2462 = vmatpush1.bf16.msra.mxu0 %v1407
        %2463 = vmatprep.subr.bf16.mxu0 0
        %2464 = vmatpush2.bf16.msra.mxu0 0
        %2465 = vmatprep.subr.bf16.mxu0 0
        %2466 = vmatpush2.bf16.msra.mxu0 0
        %2467 = vmatprep.subr.bf16.mxu0 0
        %2468 = vmatpush2.bf16.msra.mxu0 0
        %2469 = vmatprep.subr.bf16.mxu0 0
        %2470 = vmatpush2.bf16.msra.mxu0 0
        %2471 = vmatprep.subr.bf16.mxu0 0
        %2472 = vmatpush2.bf16.msra.mxu0 0
        %2473 = vmatprep.subr.bf16.mxu0 0
        %2474 = vmatpush2.bf16.msra.mxu0 0
        %2475 = vmatprep.subr.bf16.mxu0 0
        %2476 = vmatpush2.bf16.msra.mxu0 0
        %2477 = vmatprep.subr.bf16.mxu0 0
        %2478 = vmatpush2.bf16.msra.mxu0 0
        %2479 = vmatprep.mubr.bf16.mxu0 0
        %2480 = vmatmul.mubr.bf16.gmra.mxu0 %v2390
        %v2481 = vpop.f32.mrf.mxu0
        %v2482 = vadd.f32 %v2433, %v2481
        %v2483 = vpop.f32.mrf.mxu0
        %v2484 = vpop.f32.mrf.mxu0
        %v2485 = vadd.f32 %v2436, %v2484
        %v2486 = vpop.f32.mrf.mxu0
        %2487 = vmatprep.mubr.bf16.mxu0 0
        %2488 = vmatmul.mubr.bf16.gmra.mxu0 %v2393
        %v2489 = vpop.f32.mrf.mxu0
        %v2490 = vadd.f32 %v2441, %v2489
        %v2491 = vpop.f32.mrf.mxu0
        %v2492 = vpop.f32.mrf.mxu0
        %v2493 = vadd.f32 %v2444, %v2492
        %v2494 = vpop.f32.mrf.mxu0
        %2495 = vdwg.mxu0
        %v2496 = vld [vmem:[%s2] sm:$0xff]
        %v2497 = vld [vmem:[%s2 + $0x8] sm:$0xff]
        %v2498 = vld [vmem:[%s2 + $0x10] sm:$0xff]
        %v2499 = vld [vmem:[%s2 + $0x18] sm:$0xff]
        %2501 = vset.pattern.permute.xlu0 0
        %2502 = vperm.xlu0 %2501, %v2496
        %v2503 = vpop.permute.xlu0 %2502
        %2506 = vset.pattern.permute.xlu0 0
        %2507 = vperm.xlu0 %2506, %v2497
        %v2508 = vpop.permute.xlu0 %2507
        %2511 = vset.pattern.permute.xlu0 0
        %2512 = vperm.xlu0 %2511, %v2498
        %v2513 = vpop.permute.xlu0 %2512
        %2516 = vset.pattern.permute.xlu0 0
        %2517 = vperm.xlu0 %2516, %v2499
        %v2518 = vpop.permute.xlu0 %2517
        %v2520 = vmul.f32 %v2482, %v2503
        %v2521 = vmul.f32 %v2485, %v2508
        %v2522 = vmul.f32 %v2490, %v2513
        %v2523 = vmul.f32 %v2493, %v2518
        %v2524 = vld [vmem:[%s3] sm:$0xff]
        %v2525 = vld [vmem:[%s3 + $0x8] sm:$0xff]
        %v2526 = vld [vmem:[%s3 + $0x10] sm:$0xff]
        %v2527 = vld [vmem:[%s3 + $0x18] sm:$0xff]
        %2529 = vset.pattern.permute.xlu0 0
        %2530 = vperm.xlu0 %2529, %v2524
        %v2531 = vpop.permute.xlu0 %2530
        %2534 = vset.pattern.permute.xlu0 0
        %2535 = vperm.xlu0 %2534, %v2525
        %v2536 = vpop.permute.xlu0 %2535
        %2539 = vset.pattern.permute.xlu0 0
        %2540 = vperm.xlu0 %2539, %v2526
        %v2541 = vpop.permute.xlu0 %2540
        %2544 = vset.pattern.permute.xlu0 0
        %2545 = vperm.xlu0 %2544, %v2527
        %v2546 = vpop.permute.xlu0 %2545
        %v2548 = vadd.f32 %v2520, %v2531
        %v2549 = vadd.f32 %v2521, %v2536
        %v2550 = vadd.f32 %v2522, %v2541
        %v2551 = vadd.f32 %v2523, %v2546
        %v2552 = vmax.f32 %v2548, 0.0
        %v2553 = vmax.f32 %v2549, 0.0
        %v2554 = vmax.f32 %v2550, 0.0
        %v2555 = vmax.f32 %v2551, 0.0
        %v2560 = vcombine.high %v2552, %v2552
        %v2562 = vunpack.c.l.s4 1966171168
        %v2563 = vunpack.c.0.s8 %v2562
        %v2564 = vlaneseq
        %v2565 = vshrl.u32 %v2564, 7
        %v2566 = vsub.s32 %v2563, %v2565
        %v2567 = vrot.slane %v2552, %v2566
        %v2569 = vunpack.c.l.s4 1966171168
        %v2570 = vunpack.c.0.s8 %v2569
        %v2571 = vlaneseq
        %v2572 = vshrl.u32 %v2571, 7
        %v2573 = vsub.s32 %v2570, %v2572
        %v2574 = vrot.slane %v2560, %v2573
        %v2575 = vcombine.high %v2567, %v2567
        %v2576 = vcombine.high %v2574, %v2574
        %v2578 = vunpack.c.l.s4 1966171168
        %v2579 = vunpack.c.0.s8 %v2578
        %v2580 = vlaneseq
        %v2581 = vshrl.u32 %v2580, 7
        %v2582 = vsub.s32 %v2579, %v2581
        %v2583 = vrot.slane %v2567, %v2582
        %v2585 = vunpack.c.l.s4 1966171168
        %v2586 = vunpack.c.0.s8 %v2585
        %v2587 = vlaneseq
        %v2588 = vshrl.u32 %v2587, 7
        %v2589 = vsub.s32 %v2586, %v2588
        %v2590 = vrot.slane %v2574, %v2589
        %v2592 = vunpack.c.l.s4 1966171168
        %v2593 = vunpack.c.0.s8 %v2592
        %v2594 = vlaneseq
        %v2595 = vshrl.u32 %v2594, 7
        %v2596 = vsub.s32 %v2593, %v2595
        %v2597 = vrot.slane %v2575, %v2596
        %v2599 = vunpack.c.l.s4 1966171168
        %v2600 = vunpack.c.0.s8 %v2599
        %v2601 = vlaneseq
        %v2602 = vshrl.u32 %v2601, 7
        %v2603 = vsub.s32 %v2600, %v2602
        %v2604 = vrot.slane %v2576, %v2603
        %v2605 = vcombine.high %v2583, %v2583
        %v2606 = vcombine.high %v2590, %v2590
        %v2607 = vcombine.high %v2597, %v2597
        %v2608 = vcombine.high %v2604, %v2604
        %v2609 = vcombine.high %v2553, %v2553
        %v2611 = vunpack.c.l.s4 1966171168
        %v2612 = vunpack.c.0.s8 %v2611
        %v2613 = vlaneseq
        %v2614 = vshrl.u32 %v2613, 7
        %v2615 = vsub.s32 %v2612, %v2614
        %v2616 = vrot.slane %v2553, %v2615
        %v2618 = vunpack.c.l.s4 1966171168
        %v2619 = vunpack.c.0.s8 %v2618
        %v2620 = vlaneseq
        %v2621 = vshrl.u32 %v2620, 7
        %v2622 = vsub.s32 %v2619, %v2621
        %v2623 = vrot.slane %v2609, %v2622
        %v2624 = vcombine.high %v2616, %v2616
        %v2625 = vcombine.high %v2623, %v2623
        %v2627 = vunpack.c.l.s4 1966171168
        %v2628 = vunpack.c.0.s8 %v2627
        %v2629 = vlaneseq
        %v2630 = vshrl.u32 %v2629, 7
        %v2631 = vsub.s32 %v2628, %v2630
        %v2632 = vrot.slane %v2616, %v2631
        %v2634 = vunpack.c.l.s4 1966171168
        %v2635 = vunpack.c.0.s8 %v2634
        %v2636 = vlaneseq
        %v2637 = vshrl.u32 %v2636, 7
        %v2638 = vsub.s32 %v2635, %v2637
        %v2639 = vrot.slane %v2623, %v2638
        %v2641 = vunpack.c.l.s4 1966171168
        %v2642 = vunpack.c.0.s8 %v2641
        %v2643 = vlaneseq
        %v2644 = vshrl.u32 %v2643, 7
        %v2645 = vsub.s32 %v2642, %v2644
        %v2646 = vrot.slane %v2624, %v2645
        %v2648 = vunpack.c.l.s4 1966171168
        %v2649 = vunpack.c.0.s8 %v2648
        %v2650 = vlaneseq
        %v2651 = vshrl.u32 %v2650, 7
        %v2652 = vsub.s32 %v2649, %v2651
        %v2653 = vrot.slane %v2625, %v2652
        %v2654 = vcombine.high %v2632, %v2632
        %v2655 = vcombine.high %v2639, %v2639
        %v2656 = vcombine.high %v2646, %v2646
        %v2657 = vcombine.high %v2653, %v2653
        %v2658 = vcombine.high %v2554, %v2554
        %v2660 = vunpack.c.l.s4 1966171168
        %v2661 = vunpack.c.0.s8 %v2660
        %v2662 = vlaneseq
        %v2663 = vshrl.u32 %v2662, 7
        %v2664 = vsub.s32 %v2661, %v2663
        %v2665 = vrot.slane %v2554, %v2664
        %v2667 = vunpack.c.l.s4 1966171168
        %v2668 = vunpack.c.0.s8 %v2667
        %v2669 = vlaneseq
        %v2670 = vshrl.u32 %v2669, 7
        %v2671 = vsub.s32 %v2668, %v2670
        %v2672 = vrot.slane %v2658, %v2671
        %v2673 = vcombine.high %v2665, %v2665
        %v2674 = vcombine.high %v2672, %v2672
        %v2676 = vunpack.c.l.s4 1966171168
        %v2677 = vunpack.c.0.s8 %v2676
        %v2678 = vlaneseq
        %v2679 = vshrl.u32 %v2678, 7
        %v2680 = vsub.s32 %v2677, %v2679
        %v2681 = vrot.slane %v2665, %v2680
        %v2683 = vunpack.c.l.s4 1966171168
        %v2684 = vunpack.c.0.s8 %v2683
        %v2685 = vlaneseq
        %v2686 = vshrl.u32 %v2685, 7
        %v2687 = vsub.s32 %v2684, %v2686
        %v2688 = vrot.slane %v2672, %v2687
        %v2690 = vunpack.c.l.s4 1966171168
        %v2691 = vunpack.c.0.s8 %v2690
        %v2692 = vlaneseq
        %v2693 = vshrl.u32 %v2692, 7
        %v2694 = vsub.s32 %v2691, %v2693
        %v2695 = vrot.slane %v2673, %v2694
        %v2697 = vunpack.c.l.s4 1966171168
        %v2698 = vunpack.c.0.s8 %v2697
        %v2699 = vlaneseq
        %v2700 = vshrl.u32 %v2699, 7
        %v2701 = vsub.s32 %v2698, %v2700
        %v2702 = vrot.slane %v2674, %v2701
        %v2703 = vcombine.high %v2681, %v2681
        %v2704 = vcombine.high %v2688, %v2688
        %v2705 = vcombine.high %v2695, %v2695
        %v2706 = vcombine.high %v2702, %v2702
        %v2707 = vcombine.high %v2555, %v2555
        %v2709 = vunpack.c.l.s4 1966171168
        %v2710 = vunpack.c.0.s8 %v2709
        %v2711 = vlaneseq
        %v2712 = vshrl.u32 %v2711, 7
        %v2713 = vsub.s32 %v2710, %v2712
        %v2714 = vrot.slane %v2555, %v2713
        %v2716 = vunpack.c.l.s4 1966171168
        %v2717 = vunpack.c.0.s8 %v2716
        %v2718 = vlaneseq
        %v2719 = vshrl.u32 %v2718, 7
        %v2720 = vsub.s32 %v2717, %v2719
        %v2721 = vrot.slane %v2707, %v2720
        %v2722 = vcombine.high %v2714, %v2714
        %v2723 = vcombine.high %v2721, %v2721
        %v2725 = vunpack.c.l.s4 1966171168
        %v2726 = vunpack.c.0.s8 %v2725
        %v2727 = vlaneseq
        %v2728 = vshrl.u32 %v2727, 7
        %v2729 = vsub.s32 %v2726, %v2728
        %v2730 = vrot.slane %v2714, %v2729
        %v2732 = vunpack.c.l.s4 1966171168
        %v2733 = vunpack.c.0.s8 %v2732
        %v2734 = vlaneseq
        %v2735 = vshrl.u32 %v2734, 7
        %v2736 = vsub.s32 %v2733, %v2735
        %v2737 = vrot.slane %v2721, %v2736
        %v2739 = vunpack.c.l.s4 1966171168
        %v2740 = vunpack.c.0.s8 %v2739
        %v2741 = vlaneseq
        %v2742 = vshrl.u32 %v2741, 7
        %v2743 = vsub.s32 %v2740, %v2742
        %v2744 = vrot.slane %v2722, %v2743
        %v2746 = vunpack.c.l.s4 1966171168
        %v2747 = vunpack.c.0.s8 %v2746
        %v2748 = vlaneseq
        %v2749 = vshrl.u32 %v2748, 7
        %v2750 = vsub.s32 %v2747, %v2749
        %v2751 = vrot.slane %v2723, %v2750
        %v2752 = vcombine.high %v2730, %v2730
        %v2753 = vcombine.high %v2737, %v2737
        %v2754 = vcombine.high %v2744, %v2744
        %v2755 = vcombine.high %v2751, %v2751
        %2788 = vst.msk [vmem:[%s225 + $0x3] sm:$0x1] %vm1345, %v2583
        %2789 = vst.msk [vmem:[%s225 + $0xb] sm:$0x1] %vm1345, %v2597
        %2790 = vst.msk [vmem:[%s225 + $0x13] sm:$0x1] %vm1345, %v2605
        %2791 = vst.msk [vmem:[%s225 + $0x1b] sm:$0x1] %vm1345, %v2607
        %2792 = vst.msk [vmem:[%s225 + $0x23] sm:$0x1] %vm1345, %v2590
        %2793 = vst.msk [vmem:[%s225 + $0x2b] sm:$0x1] %vm1345, %v2604
        %2794 = vst.msk [vmem:[%s225 + $0x33] sm:$0x1] %vm1345, %v2606
        %2795 = vst.msk [vmem:[%s225 + $0x3b] sm:$0x1] %vm1345, %v2608
        %2796 = vst.msk [vmem:[%s225 + $0x43] sm:$0x1] %vm1345, %v2632
        %2797 = vst.msk [vmem:[%s225 + $0x4b] sm:$0x1] %vm1345, %v2646
        %2798 = vst.msk [vmem:[%s225 + $0x53] sm:$0x1] %vm1345, %v2654
        %2799 = vst.msk [vmem:[%s225 + $0x5b] sm:$0x1] %vm1345, %v2656
        %2800 = vst.msk [vmem:[%s225 + $0x63] sm:$0x1] %vm1345, %v2639
        %2801 = vst.msk [vmem:[%s225 + $0x6b] sm:$0x1] %vm1345, %v2653
        %2802 = vst.msk [vmem:[%s225 + $0x73] sm:$0x1] %vm1345, %v2655
        %2803 = vst.msk [vmem:[%s225 + $0x7b] sm:$0x1] %vm1345, %v2657
        %2804 = vst.msk [vmem:[%s225 + $0x83] sm:$0x1] %vm1345, %v2681
        %2805 = vst.msk [vmem:[%s225 + $0x8b] sm:$0x1] %vm1345, %v2695
        %2806 = vst.msk [vmem:[%s225 + $0x93] sm:$0x1] %vm1345, %v2703
        %2807 = vst.msk [vmem:[%s225 + $0x9b] sm:$0x1] %vm1345, %v2705
        %2808 = vst.msk [vmem:[%s225 + $0xa3] sm:$0x1] %vm1345, %v2688
        %2809 = vst.msk [vmem:[%s225 + $0xab] sm:$0x1] %vm1345, %v2702
        %2810 = vst.msk [vmem:[%s225 + $0xb3] sm:$0x1] %vm1345, %v2704
        %2811 = vst.msk [vmem:[%s225 + $0xbb] sm:$0x1] %vm1345, %v2706
        %2812 = vst.msk [vmem:[%s225 + $0xc3] sm:$0x1] %vm1345, %v2730
        %2813 = vst.msk [vmem:[%s225 + $0xcb] sm:$0x1] %vm1345, %v2744
        %2814 = vst.msk [vmem:[%s225 + $0xd3] sm:$0x1] %vm1345, %v2752
        %2815 = vst.msk [vmem:[%s225 + $0xdb] sm:$0x1] %vm1345, %v2754
        %2816 = vst.msk [vmem:[%s225 + $0xe3] sm:$0x1] %vm1345, %v2737
        %2817 = vst.msk [vmem:[%s225 + $0xeb] sm:$0x1] %vm1345, %v2751
        %2818 = vst.msk [vmem:[%s225 + $0xf3] sm:$0x1] %vm1345, %v2753
        %2819 = vst.msk [vmem:[%s225 + $0xfb] sm:$0x1] %vm1345, %v2755
        %v2820 = vld [vmem:[%s1] sm:$0xff]
        %v2821 = vld [vmem:[%s1 + $0x8] sm:$0xf]
        %v2822 = vld [vmem:[%s1 + $0xc] sm:$0xff]
        %v2823 = vld [vmem:[%s1 + $0x14] sm:$0xf]
        %v2824 = vld [vmem:[%s1 + $0x18] sm:$0xff]
        %v2825 = vld [vmem:[%s1 + $0x20] sm:$0xf]
        %v2826 = vld [vmem:[%s1 + $0x24] sm:$0xff]
        %v2827 = vld [vmem:[%s1 + $0x2c] sm:$0xf]
        %v2828 = vpack.c.bf16 %v735, %v696
        %v2829 = vpack.c.bf16 %v737, %v736
        %v2830 = vpack.c.bf16 %v739, %v738
        %v2831 = vpack.c.bf16 %v772, %v771
        %v2832 = vpack.c.bf16 %v774, %v773
        %v2833 = vpack.c.bf16 %v775, %v775
        %v2842 = vunpack.c.l.b16 %v2820
        %v2843 = vunpack.c.h.b16 %v2820
        %v2844 = vunpack.c.l.b16 %v2821
        %v2845 = vunpack.c.l.b16 %v2822
        %v2846 = vunpack.c.h.b16 %v2822
        %v2847 = vunpack.c.l.b16 %v2823
        %v2848 = vunpack.c.l.b16 %v2824
        %v2849 = vunpack.c.h.b16 %v2824
        %v2850 = vunpack.c.l.b16 %v2825
        %v2851 = vunpack.c.l.b16 %v2826
        %v2852 = vunpack.c.h.b16 %v2826
        %v2853 = vunpack.c.l.b16 %v2827
        %v2854 = vpack.c.b16 %v2845, %v2842
        %v2855 = vpack.c.b16 %v2846, %v2843
        %v2856 = vpack.c.b16 %v2847, %v2844
        %v2857 = vpack.c.b16 %v2851, %v2848
        %v2858 = vpack.c.b16 %v2852, %v2849
        %v2859 = vpack.c.b16 %v2853, %v2850
        %v2865 = vsel %vm945, %v2856, 0
        %v2868 = vsel %vm945, %v2859, 0
        %v2871 = vsel %vm285, %v2833, 0
        %2873 = vmatprep.subr.bf16.mxu0 0
        %2874 = vmatpush1.bf16.msra.mxu0 %v909
        %2875 = vmatprep.subr.bf16.mxu0 0
        %2876 = vmatpush1.bf16.msra.mxu0 %v908
        %2877 = vmatprep.subr.bf16.mxu0 0
        %2878 = vmatpush1.bf16.msra.mxu0 %v907
        %2879 = vmatprep.subr.bf16.mxu0 0
        %2880 = vmatpush1.bf16.msra.mxu0 %v906
        %2881 = vmatprep.subr.bf16.mxu0 0
        %2882 = vmatpush1.bf16.msra.mxu0 %v905
        %2883 = vmatprep.subr.bf16.mxu0 0
        %2884 = vmatpush1.bf16.msra.mxu0 %v904
        %2885 = vmatprep.subr.bf16.mxu0 0
        %2886 = vmatpush1.bf16.msra.mxu0 %v903
        %2887 = vmatprep.subr.bf16.mxu0 0
        %2888 = vmatpush1.bf16.msra.mxu0 %v902
        %2889 = vmatprep.subr.bf16.mxu0 0
        %2890 = vmatpush2.bf16.msra.mxu0 %v1881
        %2891 = vmatprep.subr.bf16.mxu0 0
        %2892 = vmatpush2.bf16.msra.mxu0 %v1880
        %2893 = vmatprep.subr.bf16.mxu0 0
        %2894 = vmatpush2.bf16.msra.mxu0 %v1879
        %2895 = vmatprep.subr.bf16.mxu0 0
        %2896 = vmatpush2.bf16.msra.mxu0 %v1878
        %2897 = vmatprep.subr.bf16.mxu0 0
        %2898 = vmatpush2.bf16.msra.mxu0 %v913
        %2899 = vmatprep.subr.bf16.mxu0 0
        %2900 = vmatpush2.bf16.msra.mxu0 %v912
        %2901 = vmatprep.subr.bf16.mxu0 0
        %2902 = vmatpush2.bf16.msra.mxu0 %v911
        %2903 = vmatprep.subr.bf16.mxu0 0
        %2904 = vmatpush2.bf16.msra.mxu0 %v910
        %2905 = vmatprep.mubr.bf16.mxu0 %v2855
        %2906 = vmatmul.mubr.bf16.gmra.mxu0 %v2854
        %v2907 = vpop.f32.mrf.mxu0
        %v2908 = vadd.f32 0.0, %v2907
        %v2909 = vpop.f32.mrf.mxu0
        %v2910 = vpop.f32.mrf.mxu0
        %v2911 = vadd.f32 0.0, %v2910
        %v2912 = vpop.f32.mrf.mxu0
        %2913 = vmatprep.mubr.bf16.mxu0 %v2858
        %2914 = vmatmul.mubr.bf16.gmra.mxu0 %v2857
        %v2915 = vpop.f32.mrf.mxu0
        %v2916 = vadd.f32 0.0, %v2915
        %v2917 = vpop.f32.mrf.mxu0
        %v2918 = vpop.f32.mrf.mxu0
        %v2919 = vadd.f32 0.0, %v2918
        %v2920 = vpop.f32.mrf.mxu0
        %2921 = vdwg.mxu0
        %2922 = vmatprep.subr.bf16.mxu0 0
        %2923 = vmatpush1.bf16.msra.mxu0 0
        %2924 = vmatprep.subr.bf16.mxu0 0
        %2925 = vmatpush1.bf16.msra.mxu0 %v2871
        %2926 = vmatprep.subr.bf16.mxu0 0
        %2927 = vmatpush1.bf16.msra.mxu0 %v2832
        %2928 = vmatprep.subr.bf16.mxu0 0
        %2929 = vmatpush1.bf16.msra.mxu0 %v2831
        %2930 = vmatprep.subr.bf16.mxu0 0
        %2931 = vmatpush1.bf16.msra.mxu0 %v2830
        %2932 = vmatprep.subr.bf16.mxu0 0
        %2933 = vmatpush1.bf16.msra.mxu0 %v2829
        %2934 = vmatprep.subr.bf16.mxu0 0
        %2935 = vmatpush1.bf16.msra.mxu0 %v2828
        %2936 = vmatprep.subr.bf16.mxu0 0
        %2937 = vmatpush1.bf16.msra.mxu0 %v1882
        %2938 = vmatprep.subr.bf16.mxu0 0
        %2939 = vmatpush2.bf16.msra.mxu0 0
        %2940 = vmatprep.subr.bf16.mxu0 0
        %2941 = vmatpush2.bf16.msra.mxu0 0
        %2942 = vmatprep.subr.bf16.mxu0 0
        %2943 = vmatpush2.bf16.msra.mxu0 0
        %2944 = vmatprep.subr.bf16.mxu0 0
        %2945 = vmatpush2.bf16.msra.mxu0 0
        %2946 = vmatprep.subr.bf16.mxu0 0
        %2947 = vmatpush2.bf16.msra.mxu0 0
        %2948 = vmatprep.subr.bf16.mxu0 0
        %2949 = vmatpush2.bf16.msra.mxu0 0
        %2950 = vmatprep.subr.bf16.mxu0 0
        %2951 = vmatpush2.bf16.msra.mxu0 0
        %2952 = vmatprep.subr.bf16.mxu0 0
        %2953 = vmatpush2.bf16.msra.mxu0 0
        %2954 = vmatprep.mubr.bf16.mxu0 0
        %2955 = vmatmul.mubr.bf16.gmra.mxu0 %v2865
        %v2956 = vpop.f32.mrf.mxu0
        %v2957 = vadd.f32 %v2908, %v2956
        %v2958 = vpop.f32.mrf.mxu0
        %v2959 = vpop.f32.mrf.mxu0
        %v2960 = vadd.f32 %v2911, %v2959
        %v2961 = vpop.f32.mrf.mxu0
        %2962 = vmatprep.mubr.bf16.mxu0 0
        %2963 = vmatmul.mubr.bf16.gmra.mxu0 %v2868
        %v2964 = vpop.f32.mrf.mxu0
        %v2965 = vadd.f32 %v2916, %v2964
        %v2966 = vpop.f32.mrf.mxu0
        %v2967 = vpop.f32.mrf.mxu0
        %v2968 = vadd.f32 %v2919, %v2967
        %v2969 = vpop.f32.mrf.mxu0
        %2970 = vdwg.mxu0
        %v2971 = vld [vmem:[%s2] sm:$0xff]
        %v2972 = vld [vmem:[%s2 + $0x8] sm:$0xff]
        %v2973 = vld [vmem:[%s2 + $0x10] sm:$0xff]
        %v2974 = vld [vmem:[%s2 + $0x18] sm:$0xff]
        %2976 = vset.pattern.permute.xlu0 0
        %2977 = vperm.xlu0 %2976, %v2971
        %v2978 = vpop.permute.xlu0 %2977
        %2981 = vset.pattern.permute.xlu0 0
        %2982 = vperm.xlu0 %2981, %v2972
        %v2983 = vpop.permute.xlu0 %2982
        %2986 = vset.pattern.permute.xlu0 0
        %2987 = vperm.xlu0 %2986, %v2973
        %v2988 = vpop.permute.xlu0 %2987
        %2991 = vset.pattern.permute.xlu0 0
        %2992 = vperm.xlu0 %2991, %v2974
        %v2993 = vpop.permute.xlu0 %2992
        %v2995 = vmul.f32 %v2957, %v2978
        %v2996 = vmul.f32 %v2960, %v2983
        %v2997 = vmul.f32 %v2965, %v2988
        %v2998 = vmul.f32 %v2968, %v2993
        %v2999 = vld [vmem:[%s3] sm:$0xff]
        %v3000 = vld [vmem:[%s3 + $0x8] sm:$0xff]
        %v3001 = vld [vmem:[%s3 + $0x10] sm:$0xff]
        %v3002 = vld [vmem:[%s3 + $0x18] sm:$0xff]
        %3004 = vset.pattern.permute.xlu0 0
        %3005 = vperm.xlu0 %3004, %v2999
        %v3006 = vpop.permute.xlu0 %3005
        %3009 = vset.pattern.permute.xlu0 0
        %3010 = vperm.xlu0 %3009, %v3000
        %v3011 = vpop.permute.xlu0 %3010
        %3014 = vset.pattern.permute.xlu0 0
        %3015 = vperm.xlu0 %3014, %v3001
        %v3016 = vpop.permute.xlu0 %3015
        %3019 = vset.pattern.permute.xlu0 0
        %3020 = vperm.xlu0 %3019, %v3002
        %v3021 = vpop.permute.xlu0 %3020
        %v3023 = vadd.f32 %v2995, %v3006
        %v3024 = vadd.f32 %v2996, %v3011
        %v3025 = vadd.f32 %v2997, %v3016
        %v3026 = vadd.f32 %v2998, %v3021
        %v3027 = vmax.f32 %v3023, 0.0
        %v3028 = vmax.f32 %v3024, 0.0
        %v3029 = vmax.f32 %v3025, 0.0
        %v3030 = vmax.f32 %v3026, 0.0
        %v3035 = vcombine.high %v3027, %v3027
        %v3037 = vunpack.c.l.s4 1966171168
        %v3038 = vunpack.c.0.s8 %v3037
        %v3039 = vlaneseq
        %v3040 = vshrl.u32 %v3039, 7
        %v3041 = vsub.s32 %v3038, %v3040
        %v3042 = vrot.slane %v3027, %v3041
        %v3044 = vunpack.c.l.s4 1966171168
        %v3045 = vunpack.c.0.s8 %v3044
        %v3046 = vlaneseq
        %v3047 = vshrl.u32 %v3046, 7
        %v3048 = vsub.s32 %v3045, %v3047
        %v3049 = vrot.slane %v3035, %v3048
        %v3050 = vcombine.high %v3042, %v3042
        %v3051 = vcombine.high %v3049, %v3049
        %v3053 = vunpack.c.l.s4 1966171168
        %v3054 = vunpack.c.0.s8 %v3053
        %v3055 = vlaneseq
        %v3056 = vshrl.u32 %v3055, 7
        %v3057 = vsub.s32 %v3054, %v3056
        %v3058 = vrot.slane %v3042, %v3057
        %v3060 = vunpack.c.l.s4 1966171168
        %v3061 = vunpack.c.0.s8 %v3060
        %v3062 = vlaneseq
        %v3063 = vshrl.u32 %v3062, 7
        %v3064 = vsub.s32 %v3061, %v3063
        %v3065 = vrot.slane %v3049, %v3064
        %v3067 = vunpack.c.l.s4 1966171168
        %v3068 = vunpack.c.0.s8 %v3067
        %v3069 = vlaneseq
        %v3070 = vshrl.u32 %v3069, 7
        %v3071 = vsub.s32 %v3068, %v3070
        %v3072 = vrot.slane %v3050, %v3071
        %v3074 = vunpack.c.l.s4 1966171168
        %v3075 = vunpack.c.0.s8 %v3074
        %v3076 = vlaneseq
        %v3077 = vshrl.u32 %v3076, 7
        %v3078 = vsub.s32 %v3075, %v3077
        %v3079 = vrot.slane %v3051, %v3078
        %v3080 = vcombine.high %v3058, %v3058
        %v3081 = vcombine.high %v3065, %v3065
        %v3082 = vcombine.high %v3072, %v3072
        %v3083 = vcombine.high %v3079, %v3079
        %v3084 = vcombine.high %v3028, %v3028
        %v3086 = vunpack.c.l.s4 1966171168
        %v3087 = vunpack.c.0.s8 %v3086
        %v3088 = vlaneseq
        %v3089 = vshrl.u32 %v3088, 7
        %v3090 = vsub.s32 %v3087, %v3089
        %v3091 = vrot.slane %v3028, %v3090
        %v3093 = vunpack.c.l.s4 1966171168
        %v3094 = vunpack.c.0.s8 %v3093
        %v3095 = vlaneseq
        %v3096 = vshrl.u32 %v3095, 7
        %v3097 = vsub.s32 %v3094, %v3096
        %v3098 = vrot.slane %v3084, %v3097
        %v3099 = vcombine.high %v3091, %v3091
        %v3100 = vcombine.high %v3098, %v3098
        %v3102 = vunpack.c.l.s4 1966171168
        %v3103 = vunpack.c.0.s8 %v3102
        %v3104 = vlaneseq
        %v3105 = vshrl.u32 %v3104, 7
        %v3106 = vsub.s32 %v3103, %v3105
        %v3107 = vrot.slane %v3091, %v3106
        %v3109 = vunpack.c.l.s4 1966171168
        %v3110 = vunpack.c.0.s8 %v3109
        %v3111 = vlaneseq
        %v3112 = vshrl.u32 %v3111, 7
        %v3113 = vsub.s32 %v3110, %v3112
        %v3114 = vrot.slane %v3098, %v3113
        %v3116 = vunpack.c.l.s4 1966171168
        %v3117 = vunpack.c.0.s8 %v3116
        %v3118 = vlaneseq
        %v3119 = vshrl.u32 %v3118, 7
        %v3120 = vsub.s32 %v3117, %v3119
        %v3121 = vrot.slane %v3099, %v3120
        %v3123 = vunpack.c.l.s4 1966171168
        %v3124 = vunpack.c.0.s8 %v3123
        %v3125 = vlaneseq
        %v3126 = vshrl.u32 %v3125, 7
        %v3127 = vsub.s32 %v3124, %v3126
        %v3128 = vrot.slane %v3100, %v3127
        %v3129 = vcombine.high %v3107, %v3107
        %v3130 = vcombine.high %v3114, %v3114
        %v3131 = vcombine.high %v3121, %v3121
        %v3132 = vcombine.high %v3128, %v3128
        %v3133 = vcombine.high %v3029, %v3029
        %v3135 = vunpack.c.l.s4 1966171168
        %v3136 = vunpack.c.0.s8 %v3135
        %v3137 = vlaneseq
        %v3138 = vshrl.u32 %v3137, 7
        %v3139 = vsub.s32 %v3136, %v3138
        %v3140 = vrot.slane %v3029, %v3139
        %v3142 = vunpack.c.l.s4 1966171168
        %v3143 = vunpack.c.0.s8 %v3142
        %v3144 = vlaneseq
        %v3145 = vshrl.u32 %v3144, 7
        %v3146 = vsub.s32 %v3143, %v3145
        %v3147 = vrot.slane %v3133, %v3146
        %v3148 = vcombine.high %v3140, %v3140
        %v3149 = vcombine.high %v3147, %v3147
        %v3151 = vunpack.c.l.s4 1966171168
        %v3152 = vunpack.c.0.s8 %v3151
        %v3153 = vlaneseq
        %v3154 = vshrl.u32 %v3153, 7
        %v3155 = vsub.s32 %v3152, %v3154
        %v3156 = vrot.slane %v3140, %v3155
        %v3158 = vunpack.c.l.s4 1966171168
        %v3159 = vunpack.c.0.s8 %v3158
        %v3160 = vlaneseq
        %v3161 = vshrl.u32 %v3160, 7
        %v3162 = vsub.s32 %v3159, %v3161
        %v3163 = vrot.slane %v3147, %v3162
        %v3165 = vunpack.c.l.s4 1966171168
        %v3166 = vunpack.c.0.s8 %v3165
        %v3167 = vlaneseq
        %v3168 = vshrl.u32 %v3167, 7
        %v3169 = vsub.s32 %v3166, %v3168
        %v3170 = vrot.slane %v3148, %v3169
        %v3172 = vunpack.c.l.s4 1966171168
        %v3173 = vunpack.c.0.s8 %v3172
        %v3174 = vlaneseq
        %v3175 = vshrl.u32 %v3174, 7
        %v3176 = vsub.s32 %v3173, %v3175
        %v3177 = vrot.slane %v3149, %v3176
        %v3178 = vcombine.high %v3156, %v3156
        %v3179 = vcombine.high %v3163, %v3163
        %v3180 = vcombine.high %v3170, %v3170
        %v3181 = vcombine.high %v3177, %v3177
        %v3182 = vcombine.high %v3030, %v3030
        %v3184 = vunpack.c.l.s4 1966171168
        %v3185 = vunpack.c.0.s8 %v3184
        %v3186 = vlaneseq
        %v3187 = vshrl.u32 %v3186, 7
        %v3188 = vsub.s32 %v3185, %v3187
        %v3189 = vrot.slane %v3030, %v3188
        %v3191 = vunpack.c.l.s4 1966171168
        %v3192 = vunpack.c.0.s8 %v3191
        %v3193 = vlaneseq
        %v3194 = vshrl.u32 %v3193, 7
        %v3195 = vsub.s32 %v3192, %v3194
        %v3196 = vrot.slane %v3182, %v3195
        %v3197 = vcombine.high %v3189, %v3189
        %v3198 = vcombine.high %v3196, %v3196
        %v3200 = vunpack.c.l.s4 1966171168
        %v3201 = vunpack.c.0.s8 %v3200
        %v3202 = vlaneseq
        %v3203 = vshrl.u32 %v3202, 7
        %v3204 = vsub.s32 %v3201, %v3203
        %v3205 = vrot.slane %v3189, %v3204
        %v3207 = vunpack.c.l.s4 1966171168
        %v3208 = vunpack.c.0.s8 %v3207
        %v3209 = vlaneseq
        %v3210 = vshrl.u32 %v3209, 7
        %v3211 = vsub.s32 %v3208, %v3210
        %v3212 = vrot.slane %v3196, %v3211
        %v3214 = vunpack.c.l.s4 1966171168
        %v3215 = vunpack.c.0.s8 %v3214
        %v3216 = vlaneseq
        %v3217 = vshrl.u32 %v3216, 7
        %v3218 = vsub.s32 %v3215, %v3217
        %v3219 = vrot.slane %v3197, %v3218
        %v3221 = vunpack.c.l.s4 1966171168
        %v3222 = vunpack.c.0.s8 %v3221
        %v3223 = vlaneseq
        %v3224 = vshrl.u32 %v3223, 7
        %v3225 = vsub.s32 %v3222, %v3224
        %v3226 = vrot.slane %v3198, %v3225
        %v3227 = vcombine.high %v3205, %v3205
        %v3228 = vcombine.high %v3212, %v3212
        %v3229 = vcombine.high %v3219, %v3219
        %v3230 = vcombine.high %v3226, %v3226
        %3263 = vst.msk [vmem:[%s225 + $0x4] sm:$0x1] %vm1345, %v3058
        %3264 = vst.msk [vmem:[%s225 + $0xc] sm:$0x1] %vm1345, %v3072
        %3265 = vst.msk [vmem:[%s225 + $0x14] sm:$0x1] %vm1345, %v3080
        %3266 = vst.msk [vmem:[%s225 + $0x1c] sm:$0x1] %vm1345, %v3082
        %3267 = vst.msk [vmem:[%s225 + $0x24] sm:$0x1] %vm1345, %v3065
        %3268 = vst.msk [vmem:[%s225 + $0x2c] sm:$0x1] %vm1345, %v3079
        %3269 = vst.msk [vmem:[%s225 + $0x34] sm:$0x1] %vm1345, %v3081
        %3270 = vst.msk [vmem:[%s225 + $0x3c] sm:$0x1] %vm1345, %v3083
        %3271 = vst.msk [vmem:[%s225 + $0x44] sm:$0x1] %vm1345, %v3107
        %3272 = vst.msk [vmem:[%s225 + $0x4c] sm:$0x1] %vm1345, %v3121
        %3273 = vst.msk [vmem:[%s225 + $0x54] sm:$0x1] %vm1345, %v3129
        %3274 = vst.msk [vmem:[%s225 + $0x5c] sm:$0x1] %vm1345, %v3131
        %3275 = vst.msk [vmem:[%s225 + $0x64] sm:$0x1] %vm1345, %v3114
        %3276 = vst.msk [vmem:[%s225 + $0x6c] sm:$0x1] %vm1345, %v3128
        %3277 = vst.msk [vmem:[%s225 + $0x74] sm:$0x1] %vm1345, %v3130
        %3278 = vst.msk [vmem:[%s225 + $0x7c] sm:$0x1] %vm1345, %v3132
        %3279 = vst.msk [vmem:[%s225 + $0x84] sm:$0x1] %vm1345, %v3156
        %3280 = vst.msk [vmem:[%s225 + $0x8c] sm:$0x1] %vm1345, %v3170
        %3281 = vst.msk [vmem:[%s225 + $0x94] sm:$0x1] %vm1345, %v3178
        %3282 = vst.msk [vmem:[%s225 + $0x9c] sm:$0x1] %vm1345, %v3180
        %3283 = vst.msk [vmem:[%s225 + $0xa4] sm:$0x1] %vm1345, %v3163
        %3284 = vst.msk [vmem:[%s225 + $0xac] sm:$0x1] %vm1345, %v3177
        %3285 = vst.msk [vmem:[%s225 + $0xb4] sm:$0x1] %vm1345, %v3179
        %3286 = vst.msk [vmem:[%s225 + $0xbc] sm:$0x1] %vm1345, %v3181
        %3287 = vst.msk [vmem:[%s225 + $0xc4] sm:$0x1] %vm1345, %v3205
        %3288 = vst.msk [vmem:[%s225 + $0xcc] sm:$0x1] %vm1345, %v3219
        %3289 = vst.msk [vmem:[%s225 + $0xd4] sm:$0x1] %vm1345, %v3227
        %3290 = vst.msk [vmem:[%s225 + $0xdc] sm:$0x1] %vm1345, %v3229
        %3291 = vst.msk [vmem:[%s225 + $0xe4] sm:$0x1] %vm1345, %v3212
        %3292 = vst.msk [vmem:[%s225 + $0xec] sm:$0x1] %vm1345, %v3226
        %3293 = vst.msk [vmem:[%s225 + $0xf4] sm:$0x1] %vm1345, %v3228
        %3294 = vst.msk [vmem:[%s225 + $0xfc] sm:$0x1] %vm1345, %v3230
        %v3295 = vld [vmem:[%s1] sm:$0xff]
        %v3296 = vld [vmem:[%s1 + $0x8] sm:$0xf]
        %v3297 = vld [vmem:[%s1 + $0xc] sm:$0xff]
        %v3298 = vld [vmem:[%s1 + $0x14] sm:$0xf]
        %v3299 = vld [vmem:[%s1 + $0x18] sm:$0xff]
        %v3300 = vld [vmem:[%s1 + $0x20] sm:$0xf]
        %v3301 = vld [vmem:[%s1 + $0x24] sm:$0xff]
        %v3302 = vld [vmem:[%s1 + $0x2c] sm:$0xf]
        %v3303 = vpack.c.bf16 %v771, %v739
        %v3304 = vpack.c.bf16 %v773, %v772
        %v3305 = vpack.c.bf16 %v775, %v774
        %v3306 = vpack.c.bf16 %v808, %v807
        %v3307 = vpack.c.bf16 %v810, %v809
        %v3308 = vpack.c.bf16 %v811, %v811
        %v3317 = vunpack.c.l.b16 %v3295
        %v3318 = vunpack.c.h.b16 %v3295
        %v3319 = vunpack.c.l.b16 %v3296
        %v3320 = vunpack.c.l.b16 %v3297
        %v3321 = vunpack.c.h.b16 %v3297
        %v3322 = vunpack.c.l.b16 %v3298
        %v3323 = vunpack.c.l.b16 %v3299
        %v3324 = vunpack.c.h.b16 %v3299
        %v3325 = vunpack.c.l.b16 %v3300
        %v3326 = vunpack.c.l.b16 %v3301
        %v3327 = vunpack.c.h.b16 %v3301
        %v3328 = vunpack.c.l.b16 %v3302
        %v3329 = vpack.c.b16 %v3320, %v3317
        %v3330 = vpack.c.b16 %v3321, %v3318
        %v3331 = vpack.c.b16 %v3322, %v3319
        %v3332 = vpack.c.b16 %v3326, %v3323
        %v3333 = vpack.c.b16 %v3327, %v3324
        %v3334 = vpack.c.b16 %v3328, %v3325
        %v3340 = vsel %vm945, %v3331, 0
        %v3343 = vsel %vm945, %v3334, 0
        %v3346 = vsel %vm285, %v3308, 0
        %3348 = vmatprep.subr.bf16.mxu0 0
        %3349 = vmatpush1.bf16.msra.mxu0 %v1403
        %3350 = vmatprep.subr.bf16.mxu0 0
        %3351 = vmatpush1.bf16.msra.mxu0 %v1402
        %3352 = vmatprep.subr.bf16.mxu0 0
        %3353 = vmatpush1.bf16.msra.mxu0 %v1401
        %3354 = vmatprep.subr.bf16.mxu0 0
        %3355 = vmatpush1.bf16.msra.mxu0 %v1400
        %3356 = vmatprep.subr.bf16.mxu0 0
        %3357 = vmatpush1.bf16.msra.mxu0 %v1399
        %3358 = vmatprep.subr.bf16.mxu0 0
        %3359 = vmatpush1.bf16.msra.mxu0 %v1398
        %3360 = vmatprep.subr.bf16.mxu0 0
        %3361 = vmatpush1.bf16.msra.mxu0 %v1397
        %3362 = vmatprep.subr.bf16.mxu0 0
        %3363 = vmatpush1.bf16.msra.mxu0 %v1396
        %3364 = vmatprep.subr.bf16.mxu0 0
        %3365 = vmatpush2.bf16.msra.mxu0 %v2356
        %3366 = vmatprep.subr.bf16.mxu0 0
        %3367 = vmatpush2.bf16.msra.mxu0 %v2355
        %3368 = vmatprep.subr.bf16.mxu0 0
        %3369 = vmatpush2.bf16.msra.mxu0 %v2354
        %3370 = vmatprep.subr.bf16.mxu0 0
        %3371 = vmatpush2.bf16.msra.mxu0 %v2353
        %3372 = vmatprep.subr.bf16.mxu0 0
        %3373 = vmatpush2.bf16.msra.mxu0 %v1407
        %3374 = vmatprep.subr.bf16.mxu0 0
        %3375 = vmatpush2.bf16.msra.mxu0 %v1406
        %3376 = vmatprep.subr.bf16.mxu0 0
        %3377 = vmatpush2.bf16.msra.mxu0 %v1405
        %3378 = vmatprep.subr.bf16.mxu0 0
        %3379 = vmatpush2.bf16.msra.mxu0 %v1404
        %3380 = vmatprep.mubr.bf16.mxu0 %v3330
        %3381 = vmatmul.mubr.bf16.gmra.mxu0 %v3329
        %v3382 = vpop.f32.mrf.mxu0
        %v3383 = vadd.f32 0.0, %v3382
        %v3384 = vpop.f32.mrf.mxu0
        %v3385 = vpop.f32.mrf.mxu0
        %v3386 = vadd.f32 0.0, %v3385
        %v3387 = vpop.f32.mrf.mxu0
        %3388 = vmatprep.mubr.bf16.mxu0 %v3333
        %3389 = vmatmul.mubr.bf16.gmra.mxu0 %v3332
        %v3390 = vpop.f32.mrf.mxu0
        %v3391 = vadd.f32 0.0, %v3390
        %v3392 = vpop.f32.mrf.mxu0
        %v3393 = vpop.f32.mrf.mxu0
        %v3394 = vadd.f32 0.0, %v3393
        %v3395 = vpop.f32.mrf.mxu0
        %3396 = vdwg.mxu0
        %3397 = vmatprep.subr.bf16.mxu0 0
        %3398 = vmatpush1.bf16.msra.mxu0 0
        %3399 = vmatprep.subr.bf16.mxu0 0
        %3400 = vmatpush1.bf16.msra.mxu0 %v3346
        %3401 = vmatprep.subr.bf16.mxu0 0
        %3402 = vmatpush1.bf16.msra.mxu0 %v3307
        %3403 = vmatprep.subr.bf16.mxu0 0
        %3404 = vmatpush1.bf16.msra.mxu0 %v3306
        %3405 = vmatprep.subr.bf16.mxu0 0
        %3406 = vmatpush1.bf16.msra.mxu0 %v3305
        %3407 = vmatprep.subr.bf16.mxu0 0
        %3408 = vmatpush1.bf16.msra.mxu0 %v3304
        %3409 = vmatprep.subr.bf16.mxu0 0
        %3410 = vmatpush1.bf16.msra.mxu0 %v3303
        %3411 = vmatprep.subr.bf16.mxu0 0
        %3412 = vmatpush1.bf16.msra.mxu0 %v2357
        %3413 = vmatprep.subr.bf16.mxu0 0
        %3414 = vmatpush2.bf16.msra.mxu0 0
        %3415 = vmatprep.subr.bf16.mxu0 0
        %3416 = vmatpush2.bf16.msra.mxu0 0
        %3417 = vmatprep.subr.bf16.mxu0 0
        %3418 = vmatpush2.bf16.msra.mxu0 0
        %3419 = vmatprep.subr.bf16.mxu0 0
        %3420 = vmatpush2.bf16.msra.mxu0 0
        %3421 = vmatprep.subr.bf16.mxu0 0
        %3422 = vmatpush2.bf16.msra.mxu0 0
        %3423 = vmatprep.subr.bf16.mxu0 0
        %3424 = vmatpush2.bf16.msra.mxu0 0
        %3425 = vmatprep.subr.bf16.mxu0 0
        %3426 = vmatpush2.bf16.msra.mxu0 0
        %3427 = vmatprep.subr.bf16.mxu0 0
        %3428 = vmatpush2.bf16.msra.mxu0 0
        %3429 = vmatprep.mubr.bf16.mxu0 0
        %3430 = vmatmul.mubr.bf16.gmra.mxu0 %v3340
        %v3431 = vpop.f32.mrf.mxu0
        %v3432 = vadd.f32 %v3383, %v3431
        %v3433 = vpop.f32.mrf.mxu0
        %v3434 = vpop.f32.mrf.mxu0
        %v3435 = vadd.f32 %v3386, %v3434
        %v3436 = vpop.f32.mrf.mxu0
        %3437 = vmatprep.mubr.bf16.mxu0 0
        %3438 = vmatmul.mubr.bf16.gmra.mxu0 %v3343
        %v3439 = vpop.f32.mrf.mxu0
        %v3440 = vadd.f32 %v3391, %v3439
        %v3441 = vpop.f32.mrf.mxu0
        %v3442 = vpop.f32.mrf.mxu0
        %v3443 = vadd.f32 %v3394, %v3442
        %v3444 = vpop.f32.mrf.mxu0
        %3445 = vdwg.mxu0
        %v3446 = vld [vmem:[%s2] sm:$0xff]
        %v3447 = vld [vmem:[%s2 + $0x8] sm:$0xff]
        %v3448 = vld [vmem:[%s2 + $0x10] sm:$0xff]
        %v3449 = vld [vmem:[%s2 + $0x18] sm:$0xff]
        %3451 = vset.pattern.permute.xlu0 0
        %3452 = vperm.xlu0 %3451, %v3446
        %v3453 = vpop.permute.xlu0 %3452
        %3456 = vset.pattern.permute.xlu0 0
        %3457 = vperm.xlu0 %3456, %v3447
        %v3458 = vpop.permute.xlu0 %3457
        %3461 = vset.pattern.permute.xlu0 0
        %3462 = vperm.xlu0 %3461, %v3448
        %v3463 = vpop.permute.xlu0 %3462
        %3466 = vset.pattern.permute.xlu0 0
        %3467 = vperm.xlu0 %3466, %v3449
        %v3468 = vpop.permute.xlu0 %3467
        %v3470 = vmul.f32 %v3432, %v3453
        %v3471 = vmul.f32 %v3435, %v3458
        %v3472 = vmul.f32 %v3440, %v3463
        %v3473 = vmul.f32 %v3443, %v3468
        %v3474 = vld [vmem:[%s3] sm:$0xff]
        %v3475 = vld [vmem:[%s3 + $0x8] sm:$0xff]
        %v3476 = vld [vmem:[%s3 + $0x10] sm:$0xff]
        %v3477 = vld [vmem:[%s3 + $0x18] sm:$0xff]
        %3479 = vset.pattern.permute.xlu0 0
        %3480 = vperm.xlu0 %3479, %v3474
        %v3481 = vpop.permute.xlu0 %3480
        %3484 = vset.pattern.permute.xlu0 0
        %3485 = vperm.xlu0 %3484, %v3475
        %v3486 = vpop.permute.xlu0 %3485
        %3489 = vset.pattern.permute.xlu0 0
        %3490 = vperm.xlu0 %3489, %v3476
        %v3491 = vpop.permute.xlu0 %3490
        %3494 = vset.pattern.permute.xlu0 0
        %3495 = vperm.xlu0 %3494, %v3477
        %v3496 = vpop.permute.xlu0 %3495
        %v3498 = vadd.f32 %v3470, %v3481
        %v3499 = vadd.f32 %v3471, %v3486
        %v3500 = vadd.f32 %v3472, %v3491
        %v3501 = vadd.f32 %v3473, %v3496
        %v3502 = vmax.f32 %v3498, 0.0
        %v3503 = vmax.f32 %v3499, 0.0
        %v3504 = vmax.f32 %v3500, 0.0
        %v3505 = vmax.f32 %v3501, 0.0
        %v3510 = vcombine.high %v3502, %v3502
        %v3512 = vunpack.c.l.s4 1966171168
        %v3513 = vunpack.c.0.s8 %v3512
        %v3514 = vlaneseq
        %v3515 = vshrl.u32 %v3514, 7
        %v3516 = vsub.s32 %v3513, %v3515
        %v3517 = vrot.slane %v3502, %v3516
        %v3519 = vunpack.c.l.s4 1966171168
        %v3520 = vunpack.c.0.s8 %v3519
        %v3521 = vlaneseq
        %v3522 = vshrl.u32 %v3521, 7
        %v3523 = vsub.s32 %v3520, %v3522
        %v3524 = vrot.slane %v3510, %v3523
        %v3525 = vcombine.high %v3517, %v3517
        %v3526 = vcombine.high %v3524, %v3524
        %v3528 = vunpack.c.l.s4 1966171168
        %v3529 = vunpack.c.0.s8 %v3528
        %v3530 = vlaneseq
        %v3531 = vshrl.u32 %v3530, 7
        %v3532 = vsub.s32 %v3529, %v3531
        %v3533 = vrot.slane %v3517, %v3532
        %v3535 = vunpack.c.l.s4 1966171168
        %v3536 = vunpack.c.0.s8 %v3535
        %v3537 = vlaneseq
        %v3538 = vshrl.u32 %v3537, 7
        %v3539 = vsub.s32 %v3536, %v3538
        %v3540 = vrot.slane %v3524, %v3539
        %v3542 = vunpack.c.l.s4 1966171168
        %v3543 = vunpack.c.0.s8 %v3542
        %v3544 = vlaneseq
        %v3545 = vshrl.u32 %v3544, 7
        %v3546 = vsub.s32 %v3543, %v3545
        %v3547 = vrot.slane %v3525, %v3546
        %v3549 = vunpack.c.l.s4 1966171168
        %v3550 = vunpack.c.0.s8 %v3549
        %v3551 = vlaneseq
        %v3552 = vshrl.u32 %v3551, 7
        %v3553 = vsub.s32 %v3550, %v3552
        %v3554 = vrot.slane %v3526, %v3553
        %v3555 = vcombine.high %v3533, %v3533
        %v3556 = vcombine.high %v3540, %v3540
        %v3557 = vcombine.high %v3547, %v3547
        %v3558 = vcombine.high %v3554, %v3554
        %v3559 = vcombine.high %v3503, %v3503
        %v3561 = vunpack.c.l.s4 1966171168
        %v3562 = vunpack.c.0.s8 %v3561
        %v3563 = vlaneseq
        %v3564 = vshrl.u32 %v3563, 7
        %v3565 = vsub.s32 %v3562, %v3564
        %v3566 = vrot.slane %v3503, %v3565
        %v3568 = vunpack.c.l.s4 1966171168
        %v3569 = vunpack.c.0.s8 %v3568
        %v3570 = vlaneseq
        %v3571 = vshrl.u32 %v3570, 7
        %v3572 = vsub.s32 %v3569, %v3571
        %v3573 = vrot.slane %v3559, %v3572
        %v3574 = vcombine.high %v3566, %v3566
        %v3575 = vcombine.high %v3573, %v3573
        %v3577 = vunpack.c.l.s4 1966171168
        %v3578 = vunpack.c.0.s8 %v3577
        %v3579 = vlaneseq
        %v3580 = vshrl.u32 %v3579, 7
        %v3581 = vsub.s32 %v3578, %v3580
        %v3582 = vrot.slane %v3566, %v3581
        %v3584 = vunpack.c.l.s4 1966171168
        %v3585 = vunpack.c.0.s8 %v3584
        %v3586 = vlaneseq
        %v3587 = vshrl.u32 %v3586, 7
        %v3588 = vsub.s32 %v3585, %v3587
        %v3589 = vrot.slane %v3573, %v3588
        %v3591 = vunpack.c.l.s4 1966171168
        %v3592 = vunpack.c.0.s8 %v3591
        %v3593 = vlaneseq
        %v3594 = vshrl.u32 %v3593, 7
        %v3595 = vsub.s32 %v3592, %v3594
        %v3596 = vrot.slane %v3574, %v3595
        %v3598 = vunpack.c.l.s4 1966171168
        %v3599 = vunpack.c.0.s8 %v3598
        %v3600 = vlaneseq
        %v3601 = vshrl.u32 %v3600, 7
        %v3602 = vsub.s32 %v3599, %v3601
        %v3603 = vrot.slane %v3575, %v3602
        %v3604 = vcombine.high %v3582, %v3582
        %v3605 = vcombine.high %v3589, %v3589
        %v3606 = vcombine.high %v3596, %v3596
        %v3607 = vcombine.high %v3603, %v3603
        %v3608 = vcombine.high %v3504, %v3504
        %v3610 = vunpack.c.l.s4 1966171168
        %v3611 = vunpack.c.0.s8 %v3610
        %v3612 = vlaneseq
        %v3613 = vshrl.u32 %v3612, 7
        %v3614 = vsub.s32 %v3611, %v3613
        %v3615 = vrot.slane %v3504, %v3614
        %v3617 = vunpack.c.l.s4 1966171168
        %v3618 = vunpack.c.0.s8 %v3617
        %v3619 = vlaneseq
        %v3620 = vshrl.u32 %v3619, 7
        %v3621 = vsub.s32 %v3618, %v3620
        %v3622 = vrot.slane %v3608, %v3621
        %v3623 = vcombine.high %v3615, %v3615
        %v3624 = vcombine.high %v3622, %v3622
        %v3626 = vunpack.c.l.s4 1966171168
        %v3627 = vunpack.c.0.s8 %v3626
        %v3628 = vlaneseq
        %v3629 = vshrl.u32 %v3628, 7
        %v3630 = vsub.s32 %v3627, %v3629
        %v3631 = vrot.slane %v3615, %v3630
        %v3633 = vunpack.c.l.s4 1966171168
        %v3634 = vunpack.c.0.s8 %v3633
        %v3635 = vlaneseq
        %v3636 = vshrl.u32 %v3635, 7
        %v3637 = vsub.s32 %v3634, %v3636
        %v3638 = vrot.slane %v3622, %v3637
        %v3640 = vunpack.c.l.s4 1966171168
        %v3641 = vunpack.c.0.s8 %v3640
        %v3642 = vlaneseq
        %v3643 = vshrl.u32 %v3642, 7
        %v3644 = vsub.s32 %v3641, %v3643
        %v3645 = vrot.slane %v3623, %v3644
        %v3647 = vunpack.c.l.s4 1966171168
        %v3648 = vunpack.c.0.s8 %v3647
        %v3649 = vlaneseq
        %v3650 = vshrl.u32 %v3649, 7
        %v3651 = vsub.s32 %v3648, %v3650
        %v3652 = vrot.slane %v3624, %v3651
        %v3653 = vcombine.high %v3631, %v3631
        %v3654 = vcombine.high %v3638, %v3638
        %v3655 = vcombine.high %v3645, %v3645
        %v3656 = vcombine.high %v3652, %v3652
        %v3657 = vcombine.high %v3505, %v3505
        %v3659 = vunpack.c.l.s4 1966171168
        %v3660 = vunpack.c.0.s8 %v3659
        %v3661 = vlaneseq
        %v3662 = vshrl.u32 %v3661, 7
        %v3663 = vsub.s32 %v3660, %v3662
        %v3664 = vrot.slane %v3505, %v3663
        %v3666 = vunpack.c.l.s4 1966171168
        %v3667 = vunpack.c.0.s8 %v3666
        %v3668 = vlaneseq
        %v3669 = vshrl.u32 %v3668, 7
        %v3670 = vsub.s32 %v3667, %v3669
        %v3671 = vrot.slane %v3657, %v3670
        %v3672 = vcombine.high %v3664, %v3664
        %v3673 = vcombine.high %v3671, %v3671
        %v3675 = vunpack.c.l.s4 1966171168
        %v3676 = vunpack.c.0.s8 %v3675
        %v3677 = vlaneseq
        %v3678 = vshrl.u32 %v3677, 7
        %v3679 = vsub.s32 %v3676, %v3678
        %v3680 = vrot.slane %v3664, %v3679
        %v3682 = vunpack.c.l.s4 1966171168
        %v3683 = vunpack.c.0.s8 %v3682
        %v3684 = vlaneseq
        %v3685 = vshrl.u32 %v3684, 7
        %v3686 = vsub.s32 %v3683, %v3685
        %v3687 = vrot.slane %v3671, %v3686
        %v3689 = vunpack.c.l.s4 1966171168
        %v3690 = vunpack.c.0.s8 %v3689
        %v3691 = vlaneseq
        %v3692 = vshrl.u32 %v3691, 7
        %v3693 = vsub.s32 %v3690, %v3692
        %v3694 = vrot.slane %v3672, %v3693
        %v3696 = vunpack.c.l.s4 1966171168
        %v3697 = vunpack.c.0.s8 %v3696
        %v3698 = vlaneseq
        %v3699 = vshrl.u32 %v3698, 7
        %v3700 = vsub.s32 %v3697, %v3699
        %v3701 = vrot.slane %v3673, %v3700
        %v3702 = vcombine.high %v3680, %v3680
        %v3703 = vcombine.high %v3687, %v3687
        %v3704 = vcombine.high %v3694, %v3694
        %v3705 = vcombine.high %v3701, %v3701
        %3738 = vst.msk [vmem:[%s225 + $0x5] sm:$0x1] %vm1345, %v3533
        %3739 = vst.msk [vmem:[%s225 + $0xd] sm:$0x1] %vm1345, %v3547
        %3740 = vst.msk [vmem:[%s225 + $0x15] sm:$0x1] %vm1345, %v3555
        %3741 = vst.msk [vmem:[%s225 + $0x1d] sm:$0x1] %vm1345, %v3557
        %3742 = vst.msk [vmem:[%s225 + $0x25] sm:$0x1] %vm1345, %v3540
        %3743 = vst.msk [vmem:[%s225 + $0x2d] sm:$0x1] %vm1345, %v3554
        %3744 = vst.msk [vmem:[%s225 + $0x35] sm:$0x1] %vm1345, %v3556
        %3745 = vst.msk [vmem:[%s225 + $0x3d] sm:$0x1] %vm1345, %v3558
        %3746 = vst.msk [vmem:[%s225 + $0x45] sm:$0x1] %vm1345, %v3582
        %3747 = vst.msk [vmem:[%s225 + $0x4d] sm:$0x1] %vm1345, %v3596
        %3748 = vst.msk [vmem:[%s225 + $0x55] sm:$0x1] %vm1345, %v3604
        %3749 = vst.msk [vmem:[%s225 + $0x5d] sm:$0x1] %vm1345, %v3606
        %3750 = vst.msk [vmem:[%s225 + $0x65] sm:$0x1] %vm1345, %v3589
        %3751 = vst.msk [vmem:[%s225 + $0x6d] sm:$0x1] %vm1345, %v3603
        %3752 = vst.msk [vmem:[%s225 + $0x75] sm:$0x1] %vm1345, %v3605
        %3753 = vst.msk [vmem:[%s225 + $0x7d] sm:$0x1] %vm1345, %v3607
        %3754 = vst.msk [vmem:[%s225 + $0x85] sm:$0x1] %vm1345, %v3631
        %3755 = vst.msk [vmem:[%s225 + $0x8d] sm:$0x1] %vm1345, %v3645
        %3756 = vst.msk [vmem:[%s225 + $0x95] sm:$0x1] %vm1345, %v3653
        %3757 = vst.msk [vmem:[%s225 + $0x9d] sm:$0x1] %vm1345, %v3655
        %3758 = vst.msk [vmem:[%s225 + $0xa5] sm:$0x1] %vm1345, %v3638
        %3759 = vst.msk [vmem:[%s225 + $0xad] sm:$0x1] %vm1345, %v3652
        %3760 = vst.msk [vmem:[%s225 + $0xb5] sm:$0x1] %vm1345, %v3654
        %3761 = vst.msk [vmem:[%s225 + $0xbd] sm:$0x1] %vm1345, %v3656
        %3762 = vst.msk [vmem:[%s225 + $0xc5] sm:$0x1] %vm1345, %v3680
        %3763 = vst.msk [vmem:[%s225 + $0xcd] sm:$0x1] %vm1345, %v3694
        %3764 = vst.msk [vmem:[%s225 + $0xd5] sm:$0x1] %vm1345, %v3702
        %3765 = vst.msk [vmem:[%s225 + $0xdd] sm:$0x1] %vm1345, %v3704
        %3766 = vst.msk [vmem:[%s225 + $0xe5] sm:$0x1] %vm1345, %v3687
        %3767 = vst.msk [vmem:[%s225 + $0xed] sm:$0x1] %vm1345, %v3701
        %3768 = vst.msk [vmem:[%s225 + $0xf5] sm:$0x1] %vm1345, %v3703
        %3769 = vst.msk [vmem:[%s225 + $0xfd] sm:$0x1] %vm1345, %v3705
        %v3770 = vld [vmem:[%s1] sm:$0xff]
        %v3771 = vld [vmem:[%s1 + $0x8] sm:$0xf]
        %v3772 = vld [vmem:[%s1 + $0xc] sm:$0xff]
        %v3773 = vld [vmem:[%s1 + $0x14] sm:$0xf]
        %v3774 = vld [vmem:[%s1 + $0x18] sm:$0xff]
        %v3775 = vld [vmem:[%s1 + $0x20] sm:$0xf]
        %v3776 = vld [vmem:[%s1 + $0x24] sm:$0xff]
        %v3777 = vld [vmem:[%s1 + $0x2c] sm:$0xf]
        %v3778 = vpack.c.bf16 %v807, %v775
        %v3779 = vpack.c.bf16 %v809, %v808
        %v3780 = vpack.c.bf16 %v811, %v810
        %v3781 = vpack.c.bf16 %v844, %v843
        %v3782 = vpack.c.bf16 %v846, %v845
        %v3783 = vpack.c.bf16 %v847, %v847
        %v3792 = vunpack.c.l.b16 %v3770
        %v3793 = vunpack.c.h.b16 %v3770
        %v3794 = vunpack.c.l.b16 %v3771
        %v3795 = vunpack.c.l.b16 %v3772
        %v3796 = vunpack.c.h.b16 %v3772
        %v3797 = vunpack.c.l.b16 %v3773
        %v3798 = vunpack.c.l.b16 %v3774
        %v3799 = vunpack.c.h.b16 %v3774
        %v3800 = vunpack.c.l.b16 %v3775
        %v3801 = vunpack.c.l.b16 %v3776
        %v3802 = vunpack.c.h.b16 %v3776
        %v3803 = vunpack.c.l.b16 %v3777
        %v3804 = vpack.c.b16 %v3795, %v3792
        %v3805 = vpack.c.b16 %v3796, %v3793
        %v3806 = vpack.c.b16 %v3797, %v3794
        %v3807 = vpack.c.b16 %v3801, %v3798
        %v3808 = vpack.c.b16 %v3802, %v3799
        %v3809 = vpack.c.b16 %v3803, %v3800
        %v3815 = vsel %vm945, %v3806, 0
        %v3818 = vsel %vm945, %v3809, 0
        %v3821 = vsel %vm285, %v3783, 0
        %3823 = vmatprep.subr.bf16.mxu0 0
        %3824 = vmatpush1.bf16.msra.mxu0 %v1878
        %3825 = vmatprep.subr.bf16.mxu0 0
        %3826 = vmatpush1.bf16.msra.mxu0 %v913
        %3827 = vmatprep.subr.bf16.mxu0 0
        %3828 = vmatpush1.bf16.msra.mxu0 %v912
        %3829 = vmatprep.subr.bf16.mxu0 0
        %3830 = vmatpush1.bf16.msra.mxu0 %v911
        %3831 = vmatprep.subr.bf16.mxu0 0
        %3832 = vmatpush1.bf16.msra.mxu0 %v910
        %3833 = vmatprep.subr.bf16.mxu0 0
        %3834 = vmatpush1.bf16.msra.mxu0 %v909
        %3835 = vmatprep.subr.bf16.mxu0 0
        %3836 = vmatpush1.bf16.msra.mxu0 %v908
        %3837 = vmatprep.subr.bf16.mxu0 0
        %3838 = vmatpush1.bf16.msra.mxu0 %v907
        %3839 = vmatprep.subr.bf16.mxu0 0
        %3840 = vmatpush2.bf16.msra.mxu0 %v2831
        %3841 = vmatprep.subr.bf16.mxu0 0
        %3842 = vmatpush2.bf16.msra.mxu0 %v2830
        %3843 = vmatprep.subr.bf16.mxu0 0
        %3844 = vmatpush2.bf16.msra.mxu0 %v2829
        %3845 = vmatprep.subr.bf16.mxu0 0
        %3846 = vmatpush2.bf16.msra.mxu0 %v2828
        %3847 = vmatprep.subr.bf16.mxu0 0
        %3848 = vmatpush2.bf16.msra.mxu0 %v1882
        %3849 = vmatprep.subr.bf16.mxu0 0
        %3850 = vmatpush2.bf16.msra.mxu0 %v1881
        %3851 = vmatprep.subr.bf16.mxu0 0
        %3852 = vmatpush2.bf16.msra.mxu0 %v1880
        %3853 = vmatprep.subr.bf16.mxu0 0
        %3854 = vmatpush2.bf16.msra.mxu0 %v1879
        %3855 = vmatprep.mubr.bf16.mxu0 %v3805
        %3856 = vmatmul.mubr.bf16.gmra.mxu0 %v3804
        %v3857 = vpop.f32.mrf.mxu0
        %v3858 = vadd.f32 0.0, %v3857
        %v3859 = vpop.f32.mrf.mxu0
        %v3860 = vpop.f32.mrf.mxu0
        %v3861 = vadd.f32 0.0, %v3860
        %v3862 = vpop.f32.mrf.mxu0
        %3863 = vmatprep.mubr.bf16.mxu0 %v3808
        %3864 = vmatmul.mubr.bf16.gmra.mxu0 %v3807
        %v3865 = vpop.f32.mrf.mxu0
        %v3866 = vadd.f32 0.0, %v3865
        %v3867 = vpop.f32.mrf.mxu0
        %v3868 = vpop.f32.mrf.mxu0
        %v3869 = vadd.f32 0.0, %v3868
        %v3870 = vpop.f32.mrf.mxu0
        %3871 = vdwg.mxu0
        %3872 = vmatprep.subr.bf16.mxu0 0
        %3873 = vmatpush1.bf16.msra.mxu0 0
        %3874 = vmatprep.subr.bf16.mxu0 0
        %3875 = vmatpush1.bf16.msra.mxu0 %v3821
        %3876 = vmatprep.subr.bf16.mxu0 0
        %3877 = vmatpush1.bf16.msra.mxu0 %v3782
        %3878 = vmatprep.subr.bf16.mxu0 0
        %3879 = vmatpush1.bf16.msra.mxu0 %v3781
        %3880 = vmatprep.subr.bf16.mxu0 0
        %3881 = vmatpush1.bf16.msra.mxu0 %v3780
        %3882 = vmatprep.subr.bf16.mxu0 0
        %3883 = vmatpush1.bf16.msra.mxu0 %v3779
        %3884 = vmatprep.subr.bf16.mxu0 0
        %3885 = vmatpush1.bf16.msra.mxu0 %v3778
        %3886 = vmatprep.subr.bf16.mxu0 0
        %3887 = vmatpush1.bf16.msra.mxu0 %v2832
        %3888 = vmatprep.subr.bf16.mxu0 0
        %3889 = vmatpush2.bf16.msra.mxu0 0
        %3890 = vmatprep.subr.bf16.mxu0 0
        %3891 = vmatpush2.bf16.msra.mxu0 0
        %3892 = vmatprep.subr.bf16.mxu0 0
        %3893 = vmatpush2.bf16.msra.mxu0 0
        %3894 = vmatprep.subr.bf16.mxu0 0
        %3895 = vmatpush2.bf16.msra.mxu0 0
        %3896 = vmatprep.subr.bf16.mxu0 0
        %3897 = vmatpush2.bf16.msra.mxu0 0
        %3898 = vmatprep.subr.bf16.mxu0 0
        %3899 = vmatpush2.bf16.msra.mxu0 0
        %3900 = vmatprep.subr.bf16.mxu0 0
        %3901 = vmatpush2.bf16.msra.mxu0 0
        %3902 = vmatprep.subr.bf16.mxu0 0
        %3903 = vmatpush2.bf16.msra.mxu0 0
        %3904 = vmatprep.mubr.bf16.mxu0 0
        %3905 = vmatmul.mubr.bf16.gmra.mxu0 %v3815
        %v3906 = vpop.f32.mrf.mxu0
        %v3907 = vadd.f32 %v3858, %v3906
        %v3908 = vpop.f32.mrf.mxu0
        %v3909 = vpop.f32.mrf.mxu0
        %v3910 = vadd.f32 %v3861, %v3909
        %v3911 = vpop.f32.mrf.mxu0
        %3912 = vmatprep.mubr.bf16.mxu0 0
        %3913 = vmatmul.mubr.bf16.gmra.mxu0 %v3818
        %v3914 = vpop.f32.mrf.mxu0
        %v3915 = vadd.f32 %v3866, %v3914
        %v3916 = vpop.f32.mrf.mxu0
        %v3917 = vpop.f32.mrf.mxu0
        %v3918 = vadd.f32 %v3869, %v3917
        %v3919 = vpop.f32.mrf.mxu0
        %3920 = vdwg.mxu0
        %v3921 = vld [vmem:[%s2] sm:$0xff]
        %v3922 = vld [vmem:[%s2 + $0x8] sm:$0xff]
        %v3923 = vld [vmem:[%s2 + $0x10] sm:$0xff]
        %v3924 = vld [vmem:[%s2 + $0x18] sm:$0xff]
        %3926 = vset.pattern.permute.xlu0 0
        %3927 = vperm.xlu0 %3926, %v3921
        %v3928 = vpop.permute.xlu0 %3927
        %3931 = vset.pattern.permute.xlu0 0
        %3932 = vperm.xlu0 %3931, %v3922
        %v3933 = vpop.permute.xlu0 %3932
        %3936 = vset.pattern.permute.xlu0 0
        %3937 = vperm.xlu0 %3936, %v3923
        %v3938 = vpop.permute.xlu0 %3937
        %3941 = vset.pattern.permute.xlu0 0
        %3942 = vperm.xlu0 %3941, %v3924
        %v3943 = vpop.permute.xlu0 %3942
        %v3945 = vmul.f32 %v3907, %v3928
        %v3946 = vmul.f32 %v3910, %v3933
        %v3947 = vmul.f32 %v3915, %v3938
        %v3948 = vmul.f32 %v3918, %v3943
        %v3949 = vld [vmem:[%s3] sm:$0xff]
        %v3950 = vld [vmem:[%s3 + $0x8] sm:$0xff]
        %v3951 = vld [vmem:[%s3 + $0x10] sm:$0xff]
        %v3952 = vld [vmem:[%s3 + $0x18] sm:$0xff]
        %3954 = vset.pattern.permute.xlu0 0
        %3955 = vperm.xlu0 %3954, %v3949
        %v3956 = vpop.permute.xlu0 %3955
        %3959 = vset.pattern.permute.xlu0 0
        %3960 = vperm.xlu0 %3959, %v3950
        %v3961 = vpop.permute.xlu0 %3960
        %3964 = vset.pattern.permute.xlu0 0
        %3965 = vperm.xlu0 %3964, %v3951
        %v3966 = vpop.permute.xlu0 %3965
        %3969 = vset.pattern.permute.xlu0 0
        %3970 = vperm.xlu0 %3969, %v3952
        %v3971 = vpop.permute.xlu0 %3970
        %v3973 = vadd.f32 %v3945, %v3956
        %v3974 = vadd.f32 %v3946, %v3961
        %v3975 = vadd.f32 %v3947, %v3966
        %v3976 = vadd.f32 %v3948, %v3971
        %v3977 = vmax.f32 %v3973, 0.0
        %v3978 = vmax.f32 %v3974, 0.0
        %v3979 = vmax.f32 %v3975, 0.0
        %v3980 = vmax.f32 %v3976, 0.0
        %v3985 = vcombine.high %v3977, %v3977
        %v3987 = vunpack.c.l.s4 1966171168
        %v3988 = vunpack.c.0.s8 %v3987
        %v3989 = vlaneseq
        %v3990 = vshrl.u32 %v3989, 7
        %v3991 = vsub.s32 %v3988, %v3990
        %v3992 = vrot.slane %v3977, %v3991
        %v3994 = vunpack.c.l.s4 1966171168
        %v3995 = vunpack.c.0.s8 %v3994
        %v3996 = vlaneseq
        %v3997 = vshrl.u32 %v3996, 7
        %v3998 = vsub.s32 %v3995, %v3997
        %v3999 = vrot.slane %v3985, %v3998
        %v4000 = vcombine.high %v3992, %v3992
        %v4001 = vcombine.high %v3999, %v3999
        %v4003 = vunpack.c.l.s4 1966171168
        %v4004 = vunpack.c.0.s8 %v4003
        %v4005 = vlaneseq
        %v4006 = vshrl.u32 %v4005, 7
        %v4007 = vsub.s32 %v4004, %v4006
        %v4008 = vrot.slane %v3992, %v4007
        %v4010 = vunpack.c.l.s4 1966171168
        %v4011 = vunpack.c.0.s8 %v4010
        %v4012 = vlaneseq
        %v4013 = vshrl.u32 %v4012, 7
        %v4014 = vsub.s32 %v4011, %v4013
        %v4015 = vrot.slane %v3999, %v4014
        %v4017 = vunpack.c.l.s4 1966171168
        %v4018 = vunpack.c.0.s8 %v4017
        %v4019 = vlaneseq
        %v4020 = vshrl.u32 %v4019, 7
        %v4021 = vsub.s32 %v4018, %v4020
        %v4022 = vrot.slane %v4000, %v4021
        %v4024 = vunpack.c.l.s4 1966171168
        %v4025 = vunpack.c.0.s8 %v4024
        %v4026 = vlaneseq
        %v4027 = vshrl.u32 %v4026, 7
        %v4028 = vsub.s32 %v4025, %v4027
        %v4029 = vrot.slane %v4001, %v4028
        %v4030 = vcombine.high %v4008, %v4008
        %v4031 = vcombine.high %v4015, %v4015
        %v4032 = vcombine.high %v4022, %v4022
        %v4033 = vcombine.high %v4029, %v4029
        %v4034 = vcombine.high %v3978, %v3978
        %v4036 = vunpack.c.l.s4 1966171168
        %v4037 = vunpack.c.0.s8 %v4036
        %v4038 = vlaneseq
        %v4039 = vshrl.u32 %v4038, 7
        %v4040 = vsub.s32 %v4037, %v4039
        %v4041 = vrot.slane %v3978, %v4040
        %v4043 = vunpack.c.l.s4 1966171168
        %v4044 = vunpack.c.0.s8 %v4043
        %v4045 = vlaneseq
        %v4046 = vshrl.u32 %v4045, 7
        %v4047 = vsub.s32 %v4044, %v4046
        %v4048 = vrot.slane %v4034, %v4047
        %v4049 = vcombine.high %v4041, %v4041
        %v4050 = vcombine.high %v4048, %v4048
        %v4052 = vunpack.c.l.s4 1966171168
        %v4053 = vunpack.c.0.s8 %v4052
        %v4054 = vlaneseq
        %v4055 = vshrl.u32 %v4054, 7
        %v4056 = vsub.s32 %v4053, %v4055
        %v4057 = vrot.slane %v4041, %v4056
        %v4059 = vunpack.c.l.s4 1966171168
        %v4060 = vunpack.c.0.s8 %v4059
        %v4061 = vlaneseq
        %v4062 = vshrl.u32 %v4061, 7
        %v4063 = vsub.s32 %v4060, %v4062
        %v4064 = vrot.slane %v4048, %v4063
        %v4066 = vunpack.c.l.s4 1966171168
        %v4067 = vunpack.c.0.s8 %v4066
        %v4068 = vlaneseq
        %v4069 = vshrl.u32 %v4068, 7
        %v4070 = vsub.s32 %v4067, %v4069
        %v4071 = vrot.slane %v4049, %v4070
        %v4073 = vunpack.c.l.s4 1966171168
        %v4074 = vunpack.c.0.s8 %v4073
        %v4075 = vlaneseq
        %v4076 = vshrl.u32 %v4075, 7
        %v4077 = vsub.s32 %v4074, %v4076
        %v4078 = vrot.slane %v4050, %v4077
        %v4079 = vcombine.high %v4057, %v4057
        %v4080 = vcombine.high %v4064, %v4064
        %v4081 = vcombine.high %v4071, %v4071
        %v4082 = vcombine.high %v4078, %v4078
        %v4083 = vcombine.high %v3979, %v3979
        %v4085 = vunpack.c.l.s4 1966171168
        %v4086 = vunpack.c.0.s8 %v4085
        %v4087 = vlaneseq
        %v4088 = vshrl.u32 %v4087, 7
        %v4089 = vsub.s32 %v4086, %v4088
        %v4090 = vrot.slane %v3979, %v4089
        %v4092 = vunpack.c.l.s4 1966171168
        %v4093 = vunpack.c.0.s8 %v4092
        %v4094 = vlaneseq
        %v4095 = vshrl.u32 %v4094, 7
        %v4096 = vsub.s32 %v4093, %v4095
        %v4097 = vrot.slane %v4083, %v4096
        %v4098 = vcombine.high %v4090, %v4090
        %v4099 = vcombine.high %v4097, %v4097
        %v4101 = vunpack.c.l.s4 1966171168
        %v4102 = vunpack.c.0.s8 %v4101
        %v4103 = vlaneseq
        %v4104 = vshrl.u32 %v4103, 7
        %v4105 = vsub.s32 %v4102, %v4104
        %v4106 = vrot.slane %v4090, %v4105
        %v4108 = vunpack.c.l.s4 1966171168
        %v4109 = vunpack.c.0.s8 %v4108
        %v4110 = vlaneseq
        %v4111 = vshrl.u32 %v4110, 7
        %v4112 = vsub.s32 %v4109, %v4111
        %v4113 = vrot.slane %v4097, %v4112
        %v4115 = vunpack.c.l.s4 1966171168
        %v4116 = vunpack.c.0.s8 %v4115
        %v4117 = vlaneseq
        %v4118 = vshrl.u32 %v4117, 7
        %v4119 = vsub.s32 %v4116, %v4118
        %v4120 = vrot.slane %v4098, %v4119
        %v4122 = vunpack.c.l.s4 1966171168
        %v4123 = vunpack.c.0.s8 %v4122
        %v4124 = vlaneseq
        %v4125 = vshrl.u32 %v4124, 7
        %v4126 = vsub.s32 %v4123, %v4125
        %v4127 = vrot.slane %v4099, %v4126
        %v4128 = vcombine.high %v4106, %v4106
        %v4129 = vcombine.high %v4113, %v4113
        %v4130 = vcombine.high %v4120, %v4120
        %v4131 = vcombine.high %v4127, %v4127
        %v4132 = vcombine.high %v3980, %v3980
        %v4134 = vunpack.c.l.s4 1966171168
        %v4135 = vunpack.c.0.s8 %v4134
        %v4136 = vlaneseq
        %v4137 = vshrl.u32 %v4136, 7
        %v4138 = vsub.s32 %v4135, %v4137
        %v4139 = vrot.slane %v3980, %v4138
        %v4141 = vunpack.c.l.s4 1966171168
        %v4142 = vunpack.c.0.s8 %v4141
        %v4143 = vlaneseq
        %v4144 = vshrl.u32 %v4143, 7
        %v4145 = vsub.s32 %v4142, %v4144
        %v4146 = vrot.slane %v4132, %v4145
        %v4147 = vcombine.high %v4139, %v4139
        %v4148 = vcombine.high %v4146, %v4146
        %v4150 = vunpack.c.l.s4 1966171168
        %v4151 = vunpack.c.0.s8 %v4150
        %v4152 = vlaneseq
        %v4153 = vshrl.u32 %v4152, 7
        %v4154 = vsub.s32 %v4151, %v4153
        %v4155 = vrot.slane %v4139, %v4154
        %v4157 = vunpack.c.l.s4 1966171168
        %v4158 = vunpack.c.0.s8 %v4157
        %v4159 = vlaneseq
        %v4160 = vshrl.u32 %v4159, 7
        %v4161 = vsub.s32 %v4158, %v4160
        %v4162 = vrot.slane %v4146, %v4161
        %v4164 = vunpack.c.l.s4 1966171168
        %v4165 = vunpack.c.0.s8 %v4164
        %v4166 = vlaneseq
        %v4167 = vshrl.u32 %v4166, 7
        %v4168 = vsub.s32 %v4165, %v4167
        %v4169 = vrot.slane %v4147, %v4168
        %v4171 = vunpack.c.l.s4 1966171168
        %v4172 = vunpack.c.0.s8 %v4171
        %v4173 = vlaneseq
        %v4174 = vshrl.u32 %v4173, 7
        %v4175 = vsub.s32 %v4172, %v4174
        %v4176 = vrot.slane %v4148, %v4175
        %v4177 = vcombine.high %v4155, %v4155
        %v4178 = vcombine.high %v4162, %v4162
        %v4179 = vcombine.high %v4169, %v4169
        %v4180 = vcombine.high %v4176, %v4176
        %4213 = vst.msk [vmem:[%s225 + $0x6] sm:$0x1] %vm1345, %v4008
        %4214 = vst.msk [vmem:[%s225 + $0xe] sm:$0x1] %vm1345, %v4022
        %4215 = vst.msk [vmem:[%s225 + $0x16] sm:$0x1] %vm1345, %v4030
        %4216 = vst.msk [vmem:[%s225 + $0x1e] sm:$0x1] %vm1345, %v4032
        %4217 = vst.msk [vmem:[%s225 + $0x26] sm:$0x1] %vm1345, %v4015
        %4218 = vst.msk [vmem:[%s225 + $0x2e] sm:$0x1] %vm1345, %v4029
        %4219 = vst.msk [vmem:[%s225 + $0x36] sm:$0x1] %vm1345, %v4031
        %4220 = vst.msk [vmem:[%s225 + $0x3e] sm:$0x1] %vm1345, %v4033
        %4221 = vst.msk [vmem:[%s225 + $0x46] sm:$0x1] %vm1345, %v4057
        %4222 = vst.msk [vmem:[%s225 + $0x4e] sm:$0x1] %vm1345, %v4071
        %4223 = vst.msk [vmem:[%s225 + $0x56] sm:$0x1] %vm1345, %v4079
        %4224 = vst.msk [vmem:[%s225 + $0x5e] sm:$0x1] %vm1345, %v4081
        %4225 = vst.msk [vmem:[%s225 + $0x66] sm:$0x1] %vm1345, %v4064
        %4226 = vst.msk [vmem:[%s225 + $0x6e] sm:$0x1] %vm1345, %v4078
        %4227 = vst.msk [vmem:[%s225 + $0x76] sm:$0x1] %vm1345, %v4080
        %4228 = vst.msk [vmem:[%s225 + $0x7e] sm:$0x1] %vm1345, %v4082
        %4229 = vst.msk [vmem:[%s225 + $0x86] sm:$0x1] %vm1345, %v4106
        %4230 = vst.msk [vmem:[%s225 + $0x8e] sm:$0x1] %vm1345, %v4120
        %4231 = vst.msk [vmem:[%s225 + $0x96] sm:$0x1] %vm1345, %v4128
        %4232 = vst.msk [vmem:[%s225 + $0x9e] sm:$0x1] %vm1345, %v4130
        %4233 = vst.msk [vmem:[%s225 + $0xa6] sm:$0x1] %vm1345, %v4113
        %4234 = vst.msk [vmem:[%s225 + $0xae] sm:$0x1] %vm1345, %v4127
        %4235 = vst.msk [vmem:[%s225 + $0xb6] sm:$0x1] %vm1345, %v4129
        %4236 = vst.msk [vmem:[%s225 + $0xbe] sm:$0x1] %vm1345, %v4131
        %4237 = vst.msk [vmem:[%s225 + $0xc6] sm:$0x1] %vm1345, %v4155
        %4238 = vst.msk [vmem:[%s225 + $0xce] sm:$0x1] %vm1345, %v4169
        %4239 = vst.msk [vmem:[%s225 + $0xd6] sm:$0x1] %vm1345, %v4177
        %4240 = vst.msk [vmem:[%s225 + $0xde] sm:$0x1] %vm1345, %v4179
        %4241 = vst.msk [vmem:[%s225 + $0xe6] sm:$0x1] %vm1345, %v4162
        %4242 = vst.msk [vmem:[%s225 + $0xee] sm:$0x1] %vm1345, %v4176
        %4243 = vst.msk [vmem:[%s225 + $0xf6] sm:$0x1] %vm1345, %v4178
        %4244 = vst.msk [vmem:[%s225 + $0xfe] sm:$0x1] %vm1345, %v4180
        %v4245 = vld [vmem:[%s1] sm:$0xff]
        %v4246 = vld [vmem:[%s1 + $0x8] sm:$0xf]
        %v4247 = vld [vmem:[%s1 + $0xc] sm:$0xff]
        %v4248 = vld [vmem:[%s1 + $0x14] sm:$0xf]
        %v4249 = vld [vmem:[%s1 + $0x18] sm:$0xff]
        %v4250 = vld [vmem:[%s1 + $0x20] sm:$0xf]
        %v4251 = vld [vmem:[%s1 + $0x24] sm:$0xff]
        %v4252 = vld [vmem:[%s1 + $0x2c] sm:$0xf]
        %v4253 = vpack.c.bf16 %v843, %v811
        %v4254 = vpack.c.bf16 %v845, %v844
        %v4255 = vpack.c.bf16 %v847, %v846
        %v4256 = vpack.c.bf16 %v880, %v879
        %v4257 = vpack.c.bf16 %v882, %v881
        %v4258 = vpack.c.bf16 %v883, %v883
        %v4267 = vunpack.c.l.b16 %v4245
        %v4268 = vunpack.c.h.b16 %v4245
        %v4269 = vunpack.c.l.b16 %v4246
        %v4270 = vunpack.c.l.b16 %v4247
        %v4271 = vunpack.c.h.b16 %v4247
        %v4272 = vunpack.c.l.b16 %v4248
        %v4273 = vunpack.c.l.b16 %v4249
        %v4274 = vunpack.c.h.b16 %v4249
        %v4275 = vunpack.c.l.b16 %v4250
        %v4276 = vunpack.c.l.b16 %v4251
        %v4277 = vunpack.c.h.b16 %v4251
        %v4278 = vunpack.c.l.b16 %v4252
        %v4279 = vpack.c.b16 %v4270, %v4267
        %v4280 = vpack.c.b16 %v4271, %v4268
        %v4281 = vpack.c.b16 %v4272, %v4269
        %v4282 = vpack.c.b16 %v4276, %v4273
        %v4283 = vpack.c.b16 %v4277, %v4274
        %v4284 = vpack.c.b16 %v4278, %v4275
        %v4290 = vsel %vm945, %v4281, 0
        %v4293 = vsel %vm945, %v4284, 0
        %v4296 = vsel %vm285, %v4258, 0
        %4298 = vmatprep.subr.bf16.mxu0 0
        %4299 = vmatpush1.bf16.msra.mxu0 %v2353
        %4300 = vmatprep.subr.bf16.mxu0 0
        %4301 = vmatpush1.bf16.msra.mxu0 %v1407
        %4302 = vmatprep.subr.bf16.mxu0 0
        %4303 = vmatpush1.bf16.msra.mxu0 %v1406
        %4304 = vmatprep.subr.bf16.mxu0 0
        %4305 = vmatpush1.bf16.msra.mxu0 %v1405
        %4306 = vmatprep.subr.bf16.mxu0 0
        %4307 = vmatpush1.bf16.msra.mxu0 %v1404
        %4308 = vmatprep.subr.bf16.mxu0 0
        %4309 = vmatpush1.bf16.msra.mxu0 %v1403
        %4310 = vmatprep.subr.bf16.mxu0 0
        %4311 = vmatpush1.bf16.msra.mxu0 %v1402
        %4312 = vmatprep.subr.bf16.mxu0 0
        %4313 = vmatpush1.bf16.msra.mxu0 %v1401
        %4314 = vmatprep.subr.bf16.mxu0 0
        %4315 = vmatpush2.bf16.msra.mxu0 %v3306
        %4316 = vmatprep.subr.bf16.mxu0 0
        %4317 = vmatpush2.bf16.msra.mxu0 %v3305
        %4318 = vmatprep.subr.bf16.mxu0 0
        %4319 = vmatpush2.bf16.msra.mxu0 %v3304
        %4320 = vmatprep.subr.bf16.mxu0 0
        %4321 = vmatpush2.bf16.msra.mxu0 %v3303
        %4322 = vmatprep.subr.bf16.mxu0 0
        %4323 = vmatpush2.bf16.msra.mxu0 %v2357
        %4324 = vmatprep.subr.bf16.mxu0 0
        %4325 = vmatpush2.bf16.msra.mxu0 %v2356
        %4326 = vmatprep.subr.bf16.mxu0 0
        %4327 = vmatpush2.bf16.msra.mxu0 %v2355
        %4328 = vmatprep.subr.bf16.mxu0 0
        %4329 = vmatpush2.bf16.msra.mxu0 %v2354
        %4330 = vmatprep.mubr.bf16.mxu0 %v4280
        %4331 = vmatmul.mubr.bf16.gmra.mxu0 %v4279
        %v4332 = vpop.f32.mrf.mxu0
        %v4333 = vadd.f32 0.0, %v4332
        %v4334 = vpop.f32.mrf.mxu0
        %v4335 = vpop.f32.mrf.mxu0
        %v4336 = vadd.f32 0.0, %v4335
        %v4337 = vpop.f32.mrf.mxu0
        %4338 = vmatprep.mubr.bf16.mxu0 %v4283
        %4339 = vmatmul.mubr.bf16.gmra.mxu0 %v4282
        %v4340 = vpop.f32.mrf.mxu0
        %v4341 = vadd.f32 0.0, %v4340
        %v4342 = vpop.f32.mrf.mxu0
        %v4343 = vpop.f32.mrf.mxu0
        %v4344 = vadd.f32 0.0, %v4343
        %v4345 = vpop.f32.mrf.mxu0
        %4346 = vdwg.mxu0
        %4347 = vmatprep.subr.bf16.mxu0 0
        %4348 = vmatpush1.bf16.msra.mxu0 0
        %4349 = vmatprep.subr.bf16.mxu0 0
        %4350 = vmatpush1.bf16.msra.mxu0 %v4296
        %4351 = vmatprep.subr.bf16.mxu0 0
        %4352 = vmatpush1.bf16.msra.mxu0 %v4257
        %4353 = vmatprep.subr.bf16.mxu0 0
        %4354 = vmatpush1.bf16.msra.mxu0 %v4256
        %4355 = vmatprep.subr.bf16.mxu0 0
        %4356 = vmatpush1.bf16.msra.mxu0 %v4255
        %4357 = vmatprep.subr.bf16.mxu0 0
        %4358 = vmatpush1.bf16.msra.mxu0 %v4254
        %4359 = vmatprep.subr.bf16.mxu0 0
        %4360 = vmatpush1.bf16.msra.mxu0 %v4253
        %4361 = vmatprep.subr.bf16.mxu0 0
        %4362 = vmatpush1.bf16.msra.mxu0 %v3307
        %4363 = vmatprep.subr.bf16.mxu0 0
        %4364 = vmatpush2.bf16.msra.mxu0 0
        %4365 = vmatprep.subr.bf16.mxu0 0
        %4366 = vmatpush2.bf16.msra.mxu0 0
        %4367 = vmatprep.subr.bf16.mxu0 0
        %4368 = vmatpush2.bf16.msra.mxu0 0
        %4369 = vmatprep.subr.bf16.mxu0 0
        %4370 = vmatpush2.bf16.msra.mxu0 0
        %4371 = vmatprep.subr.bf16.mxu0 0
        %4372 = vmatpush2.bf16.msra.mxu0 0
        %4373 = vmatprep.subr.bf16.mxu0 0
        %4374 = vmatpush2.bf16.msra.mxu0 0
        %4375 = vmatprep.subr.bf16.mxu0 0
        %4376 = vmatpush2.bf16.msra.mxu0 0
        %4377 = vmatprep.subr.bf16.mxu0 0
        %4378 = vmatpush2.bf16.msra.mxu0 0
        %4379 = vmatprep.mubr.bf16.mxu0 0
        %4380 = vmatmul.mubr.bf16.gmra.mxu0 %v4290
        %v4381 = vpop.f32.mrf.mxu0
        %v4382 = vadd.f32 %v4333, %v4381
        %v4383 = vpop.f32.mrf.mxu0
        %v4384 = vpop.f32.mrf.mxu0
        %v4385 = vadd.f32 %v4336, %v4384
        %v4386 = vpop.f32.mrf.mxu0
        %4387 = vmatprep.mubr.bf16.mxu0 0
        %4388 = vmatmul.mubr.bf16.gmra.mxu0 %v4293
        %v4389 = vpop.f32.mrf.mxu0
        %v4390 = vadd.f32 %v4341, %v4389
        %v4391 = vpop.f32.mrf.mxu0
        %v4392 = vpop.f32.mrf.mxu0
        %v4393 = vadd.f32 %v4344, %v4392
        %v4394 = vpop.f32.mrf.mxu0
        %4395 = vdwg.mxu0
        %v4396 = vld [vmem:[%s2] sm:$0xff]
        %v4397 = vld [vmem:[%s2 + $0x8] sm:$0xff]
        %v4398 = vld [vmem:[%s2 + $0x10] sm:$0xff]
        %v4399 = vld [vmem:[%s2 + $0x18] sm:$0xff]
        %4401 = vset.pattern.permute.xlu0 0
        %4402 = vperm.xlu0 %4401, %v4396
        %v4403 = vpop.permute.xlu0 %4402
        %4406 = vset.pattern.permute.xlu0 0
        %4407 = vperm.xlu0 %4406, %v4397
        %v4408 = vpop.permute.xlu0 %4407
        %4411 = vset.pattern.permute.xlu0 0
        %4412 = vperm.xlu0 %4411, %v4398
        %v4413 = vpop.permute.xlu0 %4412
        %4416 = vset.pattern.permute.xlu0 0
        %4417 = vperm.xlu0 %4416, %v4399
        %v4418 = vpop.permute.xlu0 %4417
        %v4420 = vmul.f32 %v4382, %v4403
        %v4421 = vmul.f32 %v4385, %v4408
        %v4422 = vmul.f32 %v4390, %v4413
        %v4423 = vmul.f32 %v4393, %v4418
        %v4424 = vld [vmem:[%s3] sm:$0xff]
        %v4425 = vld [vmem:[%s3 + $0x8] sm:$0xff]
        %v4426 = vld [vmem:[%s3 + $0x10] sm:$0xff]
        %v4427 = vld [vmem:[%s3 + $0x18] sm:$0xff]
        %4429 = vset.pattern.permute.xlu0 0
        %4430 = vperm.xlu0 %4429, %v4424
        %v4431 = vpop.permute.xlu0 %4430
        %4434 = vset.pattern.permute.xlu0 0
        %4435 = vperm.xlu0 %4434, %v4425
        %v4436 = vpop.permute.xlu0 %4435
        %4439 = vset.pattern.permute.xlu0 0
        %4440 = vperm.xlu0 %4439, %v4426
        %v4441 = vpop.permute.xlu0 %4440
        %4444 = vset.pattern.permute.xlu0 0
        %4445 = vperm.xlu0 %4444, %v4427
        %v4446 = vpop.permute.xlu0 %4445
        %v4448 = vadd.f32 %v4420, %v4431
        %v4449 = vadd.f32 %v4421, %v4436
        %v4450 = vadd.f32 %v4422, %v4441
        %v4451 = vadd.f32 %v4423, %v4446
        %v4452 = vmax.f32 %v4448, 0.0
        %v4453 = vmax.f32 %v4449, 0.0
        %v4454 = vmax.f32 %v4450, 0.0
        %v4455 = vmax.f32 %v4451, 0.0
        %v4460 = vcombine.high %v4452, %v4452
        %v4462 = vunpack.c.l.s4 1966171168
        %v4463 = vunpack.c.0.s8 %v4462
        %v4464 = vlaneseq
        %v4465 = vshrl.u32 %v4464, 7
        %v4466 = vsub.s32 %v4463, %v4465
        %v4467 = vrot.slane %v4452, %v4466
        %v4469 = vunpack.c.l.s4 1966171168
        %v4470 = vunpack.c.0.s8 %v4469
        %v4471 = vlaneseq
        %v4472 = vshrl.u32 %v4471, 7
        %v4473 = vsub.s32 %v4470, %v4472
        %v4474 = vrot.slane %v4460, %v4473
        %v4475 = vcombine.high %v4467, %v4467
        %v4476 = vcombine.high %v4474, %v4474
        %v4478 = vunpack.c.l.s4 1966171168
        %v4479 = vunpack.c.0.s8 %v4478
        %v4480 = vlaneseq
        %v4481 = vshrl.u32 %v4480, 7
        %v4482 = vsub.s32 %v4479, %v4481
        %v4483 = vrot.slane %v4467, %v4482
        %v4485 = vunpack.c.l.s4 1966171168
        %v4486 = vunpack.c.0.s8 %v4485
        %v4487 = vlaneseq
        %v4488 = vshrl.u32 %v4487, 7
        %v4489 = vsub.s32 %v4486, %v4488
        %v4490 = vrot.slane %v4474, %v4489
        %v4492 = vunpack.c.l.s4 1966171168
        %v4493 = vunpack.c.0.s8 %v4492
        %v4494 = vlaneseq
        %v4495 = vshrl.u32 %v4494, 7
        %v4496 = vsub.s32 %v4493, %v4495
        %v4497 = vrot.slane %v4475, %v4496
        %v4499 = vunpack.c.l.s4 1966171168
        %v4500 = vunpack.c.0.s8 %v4499
        %v4501 = vlaneseq
        %v4502 = vshrl.u32 %v4501, 7
        %v4503 = vsub.s32 %v4500, %v4502
        %v4504 = vrot.slane %v4476, %v4503
        %v4505 = vcombine.high %v4483, %v4483
        %v4506 = vcombine.high %v4490, %v4490
        %v4507 = vcombine.high %v4497, %v4497
        %v4508 = vcombine.high %v4504, %v4504
        %v4509 = vcombine.high %v4453, %v4453
        %v4511 = vunpack.c.l.s4 1966171168
        %v4512 = vunpack.c.0.s8 %v4511
        %v4513 = vlaneseq
        %v4514 = vshrl.u32 %v4513, 7
        %v4515 = vsub.s32 %v4512, %v4514
        %v4516 = vrot.slane %v4453, %v4515
        %v4518 = vunpack.c.l.s4 1966171168
        %v4519 = vunpack.c.0.s8 %v4518
        %v4520 = vlaneseq
        %v4521 = vshrl.u32 %v4520, 7
        %v4522 = vsub.s32 %v4519, %v4521
        %v4523 = vrot.slane %v4509, %v4522
        %v4524 = vcombine.high %v4516, %v4516
        %v4525 = vcombine.high %v4523, %v4523
        %v4527 = vunpack.c.l.s4 1966171168
        %v4528 = vunpack.c.0.s8 %v4527
        %v4529 = vlaneseq
        %v4530 = vshrl.u32 %v4529, 7
        %v4531 = vsub.s32 %v4528, %v4530
        %v4532 = vrot.slane %v4516, %v4531
        %v4534 = vunpack.c.l.s4 1966171168
        %v4535 = vunpack.c.0.s8 %v4534
        %v4536 = vlaneseq
        %v4537 = vshrl.u32 %v4536, 7
        %v4538 = vsub.s32 %v4535, %v4537
        %v4539 = vrot.slane %v4523, %v4538
        %v4541 = vunpack.c.l.s4 1966171168
        %v4542 = vunpack.c.0.s8 %v4541
        %v4543 = vlaneseq
        %v4544 = vshrl.u32 %v4543, 7
        %v4545 = vsub.s32 %v4542, %v4544
        %v4546 = vrot.slane %v4524, %v4545
        %v4548 = vunpack.c.l.s4 1966171168
        %v4549 = vunpack.c.0.s8 %v4548
        %v4550 = vlaneseq
        %v4551 = vshrl.u32 %v4550, 7
        %v4552 = vsub.s32 %v4549, %v4551
        %v4553 = vrot.slane %v4525, %v4552
        %v4554 = vcombine.high %v4532, %v4532
        %v4555 = vcombine.high %v4539, %v4539
        %v4556 = vcombine.high %v4546, %v4546
        %v4557 = vcombine.high %v4553, %v4553
        %v4558 = vcombine.high %v4454, %v4454
        %v4560 = vunpack.c.l.s4 1966171168
        %v4561 = vunpack.c.0.s8 %v4560
        %v4562 = vlaneseq
        %v4563 = vshrl.u32 %v4562, 7
        %v4564 = vsub.s32 %v4561, %v4563
        %v4565 = vrot.slane %v4454, %v4564
        %v4567 = vunpack.c.l.s4 1966171168
        %v4568 = vunpack.c.0.s8 %v4567
        %v4569 = vlaneseq
        %v4570 = vshrl.u32 %v4569, 7
        %v4571 = vsub.s32 %v4568, %v4570
        %v4572 = vrot.slane %v4558, %v4571
        %v4573 = vcombine.high %v4565, %v4565
        %v4574 = vcombine.high %v4572, %v4572
        %v4576 = vunpack.c.l.s4 1966171168
        %v4577 = vunpack.c.0.s8 %v4576
        %v4578 = vlaneseq
        %v4579 = vshrl.u32 %v4578, 7
        %v4580 = vsub.s32 %v4577, %v4579
        %v4581 = vrot.slane %v4565, %v4580
        %v4583 = vunpack.c.l.s4 1966171168
        %v4584 = vunpack.c.0.s8 %v4583
        %v4585 = vlaneseq
        %v4586 = vshrl.u32 %v4585, 7
        %v4587 = vsub.s32 %v4584, %v4586
        %v4588 = vrot.slane %v4572, %v4587
        %v4590 = vunpack.c.l.s4 1966171168
        %v4591 = vunpack.c.0.s8 %v4590
        %v4592 = vlaneseq
        %v4593 = vshrl.u32 %v4592, 7
        %v4594 = vsub.s32 %v4591, %v4593
        %v4595 = vrot.slane %v4573, %v4594
        %v4597 = vunpack.c.l.s4 1966171168
        %v4598 = vunpack.c.0.s8 %v4597
        %v4599 = vlaneseq
        %v4600 = vshrl.u32 %v4599, 7
        %v4601 = vsub.s32 %v4598, %v4600
        %v4602 = vrot.slane %v4574, %v4601
        %v4603 = vcombine.high %v4581, %v4581
        %v4604 = vcombine.high %v4588, %v4588
        %v4605 = vcombine.high %v4595, %v4595
        %v4606 = vcombine.high %v4602, %v4602
        %v4607 = vcombine.high %v4455, %v4455
        %v4609 = vunpack.c.l.s4 1966171168
        %v4610 = vunpack.c.0.s8 %v4609
        %v4611 = vlaneseq
        %v4612 = vshrl.u32 %v4611, 7
        %v4613 = vsub.s32 %v4610, %v4612
        %v4614 = vrot.slane %v4455, %v4613
        %v4616 = vunpack.c.l.s4 1966171168
        %v4617 = vunpack.c.0.s8 %v4616
        %v4618 = vlaneseq
        %v4619 = vshrl.u32 %v4618, 7
        %v4620 = vsub.s32 %v4617, %v4619
        %v4621 = vrot.slane %v4607, %v4620
        %v4622 = vcombine.high %v4614, %v4614
        %v4623 = vcombine.high %v4621, %v4621
        %v4625 = vunpack.c.l.s4 1966171168
        %v4626 = vunpack.c.0.s8 %v4625
        %v4627 = vlaneseq
        %v4628 = vshrl.u32 %v4627, 7
        %v4629 = vsub.s32 %v4626, %v4628
        %v4630 = vrot.slane %v4614, %v4629
        %v4632 = vunpack.c.l.s4 1966171168
        %v4633 = vunpack.c.0.s8 %v4632
        %v4634 = vlaneseq
        %v4635 = vshrl.u32 %v4634, 7
        %v4636 = vsub.s32 %v4633, %v4635
        %v4637 = vrot.slane %v4621, %v4636
        %v4639 = vunpack.c.l.s4 1966171168
        %v4640 = vunpack.c.0.s8 %v4639
        %v4641 = vlaneseq
        %v4642 = vshrl.u32 %v4641, 7
        %v4643 = vsub.s32 %v4640, %v4642
        %v4644 = vrot.slane %v4622, %v4643
        %v4646 = vunpack.c.l.s4 1966171168
        %v4647 = vunpack.c.0.s8 %v4646
        %v4648 = vlaneseq
        %v4649 = vshrl.u32 %v4648, 7
        %v4650 = vsub.s32 %v4647, %v4649
        %v4651 = vrot.slane %v4623, %v4650
        %v4652 = vcombine.high %v4630, %v4630
        %v4653 = vcombine.high %v4637, %v4637
        %v4654 = vcombine.high %v4644, %v4644
        %v4655 = vcombine.high %v4651, %v4651
        %4688 = vst.msk [vmem:[%s225 + $0x7] sm:$0x1] %vm1345, %v4483
        %4689 = vst.msk [vmem:[%s225 + $0xf] sm:$0x1] %vm1345, %v4497
        %4690 = vst.msk [vmem:[%s225 + $0x17] sm:$0x1] %vm1345, %v4505
        %4691 = vst.msk [vmem:[%s225 + $0x1f] sm:$0x1] %vm1345, %v4507
        %4692 = vst.msk [vmem:[%s225 + $0x27] sm:$0x1] %vm1345, %v4490
        %4693 = vst.msk [vmem:[%s225 + $0x2f] sm:$0x1] %vm1345, %v4504
        %4694 = vst.msk [vmem:[%s225 + $0x37] sm:$0x1] %vm1345, %v4506
        %4695 = vst.msk [vmem:[%s225 + $0x3f] sm:$0x1] %vm1345, %v4508
        %4696 = vst.msk [vmem:[%s225 + $0x47] sm:$0x1] %vm1345, %v4532
        %4697 = vst.msk [vmem:[%s225 + $0x4f] sm:$0x1] %vm1345, %v4546
        %4698 = vst.msk [vmem:[%s225 + $0x57] sm:$0x1] %vm1345, %v4554
        %4699 = vst.msk [vmem:[%s225 + $0x5f] sm:$0x1] %vm1345, %v4556
        %4700 = vst.msk [vmem:[%s225 + $0x67] sm:$0x1] %vm1345, %v4539
        %4701 = vst.msk [vmem:[%s225 + $0x6f] sm:$0x1] %vm1345, %v4553
        %4702 = vst.msk [vmem:[%s225 + $0x77] sm:$0x1] %vm1345, %v4555
        %4703 = vst.msk [vmem:[%s225 + $0x7f] sm:$0x1] %vm1345, %v4557
        %4704 = vst.msk [vmem:[%s225 + $0x87] sm:$0x1] %vm1345, %v4581
        %4705 = vst.msk [vmem:[%s225 + $0x8f] sm:$0x1] %vm1345, %v4595
        %4706 = vst.msk [vmem:[%s225 + $0x97] sm:$0x1] %vm1345, %v4603
        %4707 = vst.msk [vmem:[%s225 + $0x9f] sm:$0x1] %vm1345, %v4605
        %4708 = vst.msk [vmem:[%s225 + $0xa7] sm:$0x1] %vm1345, %v4588
        %4709 = vst.msk [vmem:[%s225 + $0xaf] sm:$0x1] %vm1345, %v4602
        %4710 = vst.msk [vmem:[%s225 + $0xb7] sm:$0x1] %vm1345, %v4604
        %4711 = vst.msk [vmem:[%s225 + $0xbf] sm:$0x1] %vm1345, %v4606
        %4712 = vst.msk [vmem:[%s225 + $0xc7] sm:$0x1] %vm1345, %v4630
        %4713 = vst.msk [vmem:[%s225 + $0xcf] sm:$0x1] %vm1345, %v4644
        %4714 = vst.msk [vmem:[%s225 + $0xd7] sm:$0x1] %vm1345, %v4652
        %4715 = vst.msk [vmem:[%s225 + $0xdf] sm:$0x1] %vm1345, %v4654
        %4716 = vst.msk [vmem:[%s225 + $0xe7] sm:$0x1] %vm1345, %v4637
        %4717 = vst.msk [vmem:[%s225 + $0xef] sm:$0x1] %vm1345, %v4651
        %4718 = vst.msk [vmem:[%s225 + $0xf7] sm:$0x1] %vm1345, %v4653
        %4719 = vst.msk [vmem:[%s225 + $0xff] sm:$0x1] %vm1345, %v4655
        %s4720 = sand.u32 %s129, 1
        %s4721 = sand.u32 %s129, 1
        %s4722 = smul.addr %s4721, 256
        %s4723 = scalar_lea.vmem [#allocation4], %s4722
        // Predicated region
        $region41: #{tpu_custom_call.1} parent=35 // pred_check
          %p4724 = pneg %p139
        $region42: #{tpu_custom_call.1} parent=35 // pred_check_branch
          %4726 = sbr.rel (%p4724) target = $region44
        $region43: #{tpu_custom_call.1} parent=35 // pred_region
          %s4727 = smul.addr %s22, 64
          %s4728 = sadd.s32 %s23, %s4727
          %s4729 = smul.addr %s4728, 8
          %s4730 = scalar_lea.vmem %s4, %s4729
          // Predicated region
          $region45: #{tpu_custom_call.1} parent=43 // pred_check
            _
          $region46: #{tpu_custom_call.1} parent=43 // pred_check_branch
            %4732 = sbr.rel (0) target = $region48
          $region47: #{tpu_custom_call.1} parent=43 // pred_region
            // Predicated region
            $region49: #{tpu_custom_call.1} parent=47 // pred_check
              _
            $region50: #{tpu_custom_call.1} parent=47 // pred_check_branch
              %4734 = sbr.rel (0) target = $region52
            $region51: #{tpu_custom_call.1} parent=47 // pred_region
              // Predicated region
              $region64: #{tpu_custom_call.1} parent=51 // pred_check
                _
              $region65: #{tpu_custom_call.1} parent=51 // pred_check_branch
                %4812 = sbr.rel (0) target = $region67
              $region66: #{tpu_custom_call.1} parent=51 // pred_region
                loop: start=0, step=1, limit=1
                $region68: #{tpu_custom_call.1} parent=66 // loop_pre_header
                  _
                $region69: #{tpu_custom_call.1} parent=66 // loop_header
                  %s4814 = sphi 0, %s4818
                  %p4815 = scmp.ge.s32.totalorder %s4814, 1
                  %s4819 = sphi %s4723, %s4723
                  %s4820 = sphi %s4730, %s4730
                $region70: #{tpu_custom_call.1} parent=66 // loop_header_branch
                  %4817 = sbr.rel (%p4815) target = $region74
                $region71: #{tpu_custom_call.1} parent=66 // loop_body
                  %v4821 = vld [vmem:[%s4819] sm:$0xff]
                  %4822 = vst [vmem:[%s4820] sm:$0xff] %v4821
                  %v4823 = vld [vmem:[%s4819 + $0x8] sm:$0xff]
                  %4824 = vst [vmem:[%s4820 + $0x10] sm:$0xff] %v4823
                  %v4825 = vld [vmem:[%s4819 + $0x10] sm:$0xff]
                  %4826 = vst [vmem:[%s4820 + $0x20] sm:$0xff] %v4825
                  %v4827 = vld [vmem:[%s4819 + $0x18] sm:$0xff]
                  %4828 = vst [vmem:[%s4820 + $0x30] sm:$0xff] %v4827
                  %v4829 = vld [vmem:[%s4819 + $0x20] sm:$0xff]
                  %4830 = vst [vmem:[%s4820 + $0x40] sm:$0xff] %v4829
                  %v4831 = vld [vmem:[%s4819 + $0x28] sm:$0xff]
                  %4832 = vst [vmem:[%s4820 + $0x50] sm:$0xff] %v4831
                  %v4833 = vld [vmem:[%s4819 + $0x30] sm:$0xff]
                  %4834 = vst [vmem:[%s4820 + $0x60] sm:$0xff] %v4833
                  %v4835 = vld [vmem:[%s4819 + $0x38] sm:$0xff]
                  %4836 = vst [vmem:[%s4820 + $0x70] sm:$0xff] %v4835
                  %v4837 = vld [vmem:[%s4819 + $0x40] sm:$0xff]
                  %4838 = vst [vmem:[%s4820 + $0x80] sm:$0xff] %v4837
                  %v4839 = vld [vmem:[%s4819 + $0x48] sm:$0xff]
                  %4840 = vst [vmem:[%s4820 + $0x90] sm:$0xff] %v4839
                  %v4841 = vld [vmem:[%s4819 + $0x50] sm:$0xff]
                  %4842 = vst [vmem:[%s4820 + $0xa0] sm:$0xff] %v4841
                  %v4843 = vld [vmem:[%s4819 + $0x58] sm:$0xff]
                  %4844 = vst [vmem:[%s4820 + $0xb0] sm:$0xff] %v4843
                  %v4845 = vld [vmem:[%s4819 + $0x60] sm:$0xff]
                  %4846 = vst [vmem:[%s4820 + $0xc0] sm:$0xff] %v4845
                  %v4847 = vld [vmem:[%s4819 + $0x68] sm:$0xff]
                  %4848 = vst [vmem:[%s4820 + $0xd0] sm:$0xff] %v4847
                  %v4849 = vld [vmem:[%s4819 + $0x70] sm:$0xff]
                  %4850 = vst [vmem:[%s4820 + $0xe0] sm:$0xff] %v4849
                  %v4851 = vld [vmem:[%s4819 + $0x78] sm:$0xff]
                  %4852 = vst [vmem:[%s4820 + $0xf0] sm:$0xff] %v4851
                  %v4853 = vld [vmem:[%s4819 + $0x80] sm:$0xff]
                  %4854 = vst [vmem:[%s4820 + $0x100] sm:$0xff] %v4853
                  %v4855 = vld [vmem:[%s4819 + $0x88] sm:$0xff]
                  %4856 = vst [vmem:[%s4820 + $0x110] sm:$0xff] %v4855
                  %v4857 = vld [vmem:[%s4819 + $0x90] sm:$0xff]
                  %4858 = vst [vmem:[%s4820 + $0x120] sm:$0xff] %v4857
                  %v4859 = vld [vmem:[%s4819 + $0x98] sm:$0xff]
                  %4860 = vst [vmem:[%s4820 + $0x130] sm:$0xff] %v4859
                  %v4861 = vld [vmem:[%s4819 + $0xa0] sm:$0xff]
                  %4862 = vst [vmem:[%s4820 + $0x140] sm:$0xff] %v4861
                  %v4863 = vld [vmem:[%s4819 + $0xa8] sm:$0xff]
                  %4864 = vst [vmem:[%s4820 + $0x150] sm:$0xff] %v4863
                  %v4865 = vld [vmem:[%s4819 + $0xb0] sm:$0xff]
                  %4866 = vst [vmem:[%s4820 + $0x160] sm:$0xff] %v4865
                  %v4867 = vld [vmem:[%s4819 + $0xb8] sm:$0xff]
                  %4868 = vst [vmem:[%s4820 + $0x170] sm:$0xff] %v4867
                  %v4869 = vld [vmem:[%s4819 + $0xc0] sm:$0xff]
                  %4870 = vst [vmem:[%s4820 + $0x180] sm:$0xff] %v4869
                  %v4871 = vld [vmem:[%s4819 + $0xc8] sm:$0xff]
                  %4872 = vst [vmem:[%s4820 + $0x190] sm:$0xff] %v4871
                  %v4873 = vld [vmem:[%s4819 + $0xd0] sm:$0xff]
                  %4874 = vst [vmem:[%s4820 + $0x1a0] sm:$0xff] %v4873
                  %v4875 = vld [vmem:[%s4819 + $0xd8] sm:$0xff]
                  %4876 = vst [vmem:[%s4820 + $0x1b0] sm:$0xff] %v4875
                  %v4877 = vld [vmem:[%s4819 + $0xe0] sm:$0xff]
                  %4878 = vst [vmem:[%s4820 + $0x1c0] sm:$0xff] %v4877
                  %v4879 = vld [vmem:[%s4819 + $0xe8] sm:$0xff]
                  %4880 = vst [vmem:[%s4820 + $0x1d0] sm:$0xff] %v4879
                  %v4881 = vld [vmem:[%s4819 + $0xf0] sm:$0xff]
                  %4882 = vst [vmem:[%s4820 + $0x1e0] sm:$0xff] %v4881
                  %v4883 = vld [vmem:[%s4819 + $0xf8] sm:$0xff]
                  %4884 = vst [vmem:[%s4820 + $0x1f0] sm:$0xff] %v4883
                $region72: #{tpu_custom_call.1} parent=66 // loop_footer
                  %s4818 = sadd.s32 1, %s4814
                $region73: #{tpu_custom_call.1} parent=66 // loop_footer_branch
                  %4813 = sbr.rel target = $region69
                $region74: #{tpu_custom_call.1} parent=66 // loop_exit
                  _
              $region67: #{tpu_custom_call.1} parent=51 // pred_fallthru
                _
              // Predicated region
              $region75: #{tpu_custom_call.1} parent=51 // pred_check
                _
              $region76: #{tpu_custom_call.1} parent=51 // pred_check_branch
                %4886 = sbr.rel target = $region78
              $region77: #{tpu_custom_call.1} parent=51 // pred_region
                _
              $region78: #{tpu_custom_call.1} parent=51 // pred_fallthru
                _
            $region52: #{tpu_custom_call.1} parent=47 // pred_fallthru
              _
            // Predicated region
            $region53: #{tpu_custom_call.1} parent=47 // pred_check
              _
            $region54: #{tpu_custom_call.1} parent=47 // pred_check_branch
              %4736 = sbr.rel target = $region56
            $region55: #{tpu_custom_call.1} parent=47 // pred_region
              %s4738 = ssub.s32 256, 1
              loop: start=0, step=1, limit=1
              $region57: #{tpu_custom_call.1} parent=55 // loop_pre_header
                _
              $region58: #{tpu_custom_call.1} parent=55 // loop_header
                %s4740 = sphi 0, %s4744
                %p4741 = scmp.ge.s32.totalorder %s4740, 1
                %s4745 = sphi %s4723, %s4723
                %s4746 = sphi %s4730, %s4730
              $region59: #{tpu_custom_call.1} parent=55 // loop_header_branch
                %4743 = sbr.rel (%p4741) target = $region63
              $region60: #{tpu_custom_call.1} parent=55 // loop_body
                %v4747 = vld [vmem:[%s4745] sm:%s4738]
                %4748 = vst [vmem:[%s4746] sm:%s4738] %v4747
                %v4749 = vld [vmem:[%s4745 + $0x8] sm:%s4738]
                %4750 = vst [vmem:[%s4746 + $0x10] sm:%s4738] %v4749
                %v4751 = vld [vmem:[%s4745 + $0x10] sm:%s4738]
                %4752 = vst [vmem:[%s4746 + $0x20] sm:%s4738] %v4751
                %v4753 = vld [vmem:[%s4745 + $0x18] sm:%s4738]
                %4754 = vst [vmem:[%s4746 + $0x30] sm:%s4738] %v4753
                %v4755 = vld [vmem:[%s4745 + $0x20] sm:%s4738]
                %4756 = vst [vmem:[%s4746 + $0x40] sm:%s4738] %v4755
                %v4757 = vld [vmem:[%s4745 + $0x28] sm:%s4738]
                %4758 = vst [vmem:[%s4746 + $0x50] sm:%s4738] %v4757
                %v4759 = vld [vmem:[%s4745 + $0x30] sm:%s4738]
                %4760 = vst [vmem:[%s4746 + $0x60] sm:%s4738] %v4759
                %v4761 = vld [vmem:[%s4745 + $0x38] sm:%s4738]
                %4762 = vst [vmem:[%s4746 + $0x70] sm:%s4738] %v4761
                %v4763 = vld [vmem:[%s4745 + $0x40] sm:%s4738]
                %4764 = vst [vmem:[%s4746 + $0x80] sm:%s4738] %v4763
                %v4765 = vld [vmem:[%s4745 + $0x48] sm:%s4738]
                %4766 = vst [vmem:[%s4746 + $0x90] sm:%s4738] %v4765
                %v4767 = vld [vmem:[%s4745 + $0x50] sm:%s4738]
                %4768 = vst [vmem:[%s4746 + $0xa0] sm:%s4738] %v4767
                %v4769 = vld [vmem:[%s4745 + $0x58] sm:%s4738]
                %4770 = vst [vmem:[%s4746 + $0xb0] sm:%s4738] %v4769
                %v4771 = vld [vmem:[%s4745 + $0x60] sm:%s4738]
                %4772 = vst [vmem:[%s4746 + $0xc0] sm:%s4738] %v4771
                %v4773 = vld [vmem:[%s4745 + $0x68] sm:%s4738]
                %4774 = vst [vmem:[%s4746 + $0xd0] sm:%s4738] %v4773
                %v4775 = vld [vmem:[%s4745 + $0x70] sm:%s4738]
                %4776 = vst [vmem:[%s4746 + $0xe0] sm:%s4738] %v4775
                %v4777 = vld [vmem:[%s4745 + $0x78] sm:%s4738]
                %4778 = vst [vmem:[%s4746 + $0xf0] sm:%s4738] %v4777
                %v4779 = vld [vmem:[%s4745 + $0x80] sm:%s4738]
                %4780 = vst [vmem:[%s4746 + $0x100] sm:%s4738] %v4779
                %v4781 = vld [vmem:[%s4745 + $0x88] sm:%s4738]
                %4782 = vst [vmem:[%s4746 + $0x110] sm:%s4738] %v4781
                %v4783 = vld [vmem:[%s4745 + $0x90] sm:%s4738]
                %4784 = vst [vmem:[%s4746 + $0x120] sm:%s4738] %v4783
                %v4785 = vld [vmem:[%s4745 + $0x98] sm:%s4738]
                %4786 = vst [vmem:[%s4746 + $0x130] sm:%s4738] %v4785
                %v4787 = vld [vmem:[%s4745 + $0xa0] sm:%s4738]
                %4788 = vst [vmem:[%s4746 + $0x140] sm:%s4738] %v4787
                %v4789 = vld [vmem:[%s4745 + $0xa8] sm:%s4738]
                %4790 = vst [vmem:[%s4746 + $0x150] sm:%s4738] %v4789
                %v4791 = vld [vmem:[%s4745 + $0xb0] sm:%s4738]
                %4792 = vst [vmem:[%s4746 + $0x160] sm:%s4738] %v4791
                %v4793 = vld [vmem:[%s4745 + $0xb8] sm:%s4738]
                %4794 = vst [vmem:[%s4746 + $0x170] sm:%s4738] %v4793
                %v4795 = vld [vmem:[%s4745 + $0xc0] sm:%s4738]
                %4796 = vst [vmem:[%s4746 + $0x180] sm:%s4738] %v4795
                %v4797 = vld [vmem:[%s4745 + $0xc8] sm:%s4738]
                %4798 = vst [vmem:[%s4746 + $0x190] sm:%s4738] %v4797
                %v4799 = vld [vmem:[%s4745 + $0xd0] sm:%s4738]
                %4800 = vst [vmem:[%s4746 + $0x1a0] sm:%s4738] %v4799
                %v4801 = vld [vmem:[%s4745 + $0xd8] sm:%s4738]
                %4802 = vst [vmem:[%s4746 + $0x1b0] sm:%s4738] %v4801
                %v4803 = vld [vmem:[%s4745 + $0xe0] sm:%s4738]
                %4804 = vst [vmem:[%s4746 + $0x1c0] sm:%s4738] %v4803
                %v4805 = vld [vmem:[%s4745 + $0xe8] sm:%s4738]
                %4806 = vst [vmem:[%s4746 + $0x1d0] sm:%s4738] %v4805
                %v4807 = vld [vmem:[%s4745 + $0xf0] sm:%s4738]
                %4808 = vst [vmem:[%s4746 + $0x1e0] sm:%s4738] %v4807
                %v4809 = vld [vmem:[%s4745 + $0xf8] sm:%s4738]
                %4810 = vst [vmem:[%s4746 + $0x1f0] sm:%s4738] %v4809
              $region61: #{tpu_custom_call.1} parent=55 // loop_footer
                %s4744 = sadd.s32 1, %s4740
              $region62: #{tpu_custom_call.1} parent=55 // loop_footer_branch
                %4739 = sbr.rel target = $region58
              $region63: #{tpu_custom_call.1} parent=55 // loop_exit
                _
            $region56: #{tpu_custom_call.1} parent=47 // pred_fallthru
              _
          $region48: #{tpu_custom_call.1} parent=43 // pred_fallthru
            _
          %4887 = vnop
        $region44: #{tpu_custom_call.1} parent=35 // pred_fallthru
          _
      $region36: #{tpu_custom_call.1} parent=5 // pred_fallthru
        _
      %p4888 = scmp.le.s32.totalorder 2, %s13
      // Predicated region
      $region79: #{tpu_custom_call.1} parent=5 // pred_check
        %p4889 = pneg %p4888
      $region80: #{tpu_custom_call.1} parent=5 // pred_check_branch
        %4891 = sbr.rel (%p4889) target = $region82
      $region81: #{tpu_custom_call.1} parent=5 // pred_region
        %s4892 = ssub.s32 %s13, 2
        // Predicated region
        $region83: #{tpu_custom_call.1} parent=81 // pred_check
          %p4893 = pneg %p145
        $region84: #{tpu_custom_call.1} parent=81 // pred_check_branch
          %4895 = sbr.rel (%p4893) target = $region86
        $region85: #{tpu_custom_call.1} parent=81 // pred_region
          %s4896 = sand.u32 %s130, 1
          %s4897 = sand.u32 %s130, 1
          %s4898 = smul.addr %s4897, 256
          %s4899 = scalar_lea.vmem [#allocation4], %s4898
        $region86: #{tpu_custom_call.1} parent=81 // pred_fallthru
          _
      $region82: #{tpu_custom_call.1} parent=5 // pred_fallthru
        _
    $region6: #{tpu_custom_call.1} parent=1 // loop_footer
      %s17 = sadd.s32 1, %s13
    $region7: #{tpu_custom_call.1} parent=1 // loop_footer_branch
      %12 = sbr.rel target = $region3
    $region8: #{tpu_custom_call.1} parent=1 // loop_exit
      _
    %4900 = vsyncpa [#allocation3], 1
    %s4901 = scalar_lea.sflag [#allocation3], 1
    %4902 = vsyncpa %s4901, 1

</llo_original>
